<compile_context>
chip_gen: v6e
topology: v6e:2x2x1
jax: 0.10.0
libtpu: 0.0.40
codegen_flags: <defaults>
</compile_context>

<pallas_src>
import functools
import math

import jax
import jax.numpy as jnp
from jax.experimental import pallas as pl
from jax.experimental.pallas import tpu as pltpu

LANE = 128


def _round_up(x, m):
    return (x + m - 1) // m * m


def _softplus(z):
    # numerically stable softplus == torch.nn.Softplus (beta=1)
    return jnp.maximum(z, 0.0) + jnp.log(1.0 + jnp.exp(-jnp.abs(z)))


def _sigmoid(z):
    # softplus' derivative; tanh form lowers onto the TPU EUP
    return 0.5 * (jnp.tanh(0.5 * z) + 1.0)


def _grad_jac_math(x, hnn_t, lin_t, wl3_rows):
    """Shared math for the Pallas kernel body and the pure-JAX reference.

    x:        (rows, Dp) f32, zero-padded beyond the true ninp columns.
    hnn_t:    (wh1, wh1t, bh1, wh2, wh2t, bh2, wh3row)  -- padded hnn params.
    lin_t:    (wl1, wl1t, bl1, wl2, wl2t, bl2)          -- padded linear params.
    wl3_rows: list of ninp arrays (1, Hp); row i is W3[:, i] of the linear MLP.
    Returns grad (rows, Dp) f32 and a list of ninp Jacobian rows (rows, Dp) f32.
    """
    wh1, wh1t, bh1, wh2, wh2t, bh2, wh3r = hnn_t
    wl1, wl1t, bl1, wl2, wl2t, bl2 = lin_t
    cdt = wh1.dtype  # MXU compute dtype (bf16 by default); accumulate in f32

    def dot32(a, w):
        return jnp.dot(a.astype(cdt), w.astype(cdt),
                       preferred_element_type=jnp.float32)

    # ---- hnn: gradient of its scalar output w.r.t. x ----------------------
    zh1 = dot32(x, wh1) + bh1
    sh1 = _sigmoid(zh1)
    zh2 = dot32(_softplus(zh1), wh2) + bh2
    d2 = _sigmoid(zh2) * wh3r                 # dy/dz2          (rows, Hp)
    d1 = dot32(d2, wh2t) * sh1                # dy/dz1          (rows, Hp)
    grad = dot32(d1, wh1t)                    # dy/dx           (rows, Dp)

    # ---- linear MLP: rows of its input Jacobian ----------------------------
    zl1 = dot32(x, wl1) + bl1
    sl1 = _sigmoid(zl1)
    zl2 = dot32(_softplus(zl1), wl2) + bl2
    sl2 = _sigmoid(zl2)
    jac_rows = []
    for w3row in wl3_rows:                    # static loop, len == ninp (2)
        c2 = sl2 * w3row                      # dy_i/dz2        (rows, Hp)
        c1 = dot32(c2, wl2t) * sl1            # dy_i/dz1        (rows, Hp)
        jac_rows.append(dot32(c1, wl1t))      # dy_i/dx         (rows, Dp)
    return grad, jac_rows


def _nsf_kernel(x_ref,
                wh1_ref, wh1t_ref, bh1_ref, wh2_ref, wh2t_ref, bh2_ref, wh3r_ref,
                wl1_ref, wl1t_ref, bl1_ref, wl2_ref, wl2t_ref, bl2_ref, wl3t_ref,
                grad_ref, jac_ref, *, ninp, dpad):
    hnn_t = (wh1_ref[...], wh1t_ref[...], bh1_ref[...],
             wh2_ref[...], wh2t_ref[...], bh2_ref[...], wh3r_ref[...])
    lin_t = (wl1_ref[...], wl1t_ref[...], bl1_ref[...],
             wl2_ref[...], wl2t_ref[...], bl2_ref[...])
    wl3_rows = [wl3t_ref[pl.ds(i, 1), :] for i in range(ninp)]

    grad, jac_rows = _grad_jac_math(x_ref[...], hnn_t, lin_t, wl3_rows)

    grad_ref[...] = grad.astype(grad_ref.dtype)
    for i, row in enumerate(jac_rows):
        # 128-aligned, lane-dense static slice -> unmasked vector stores
        jac_ref[:, pl.ds(i * dpad, dpad)] = row.astype(jac_ref.dtype)


def init_mlp_params(key, ninp, nhidden, nout):
    """torch.nn.Linear default init (U(+-1/sqrt(fan_in))).  Weights are stored
    as (in, out) (== torch's (out, in) weight transposed) so y = x @ W + b."""
    keys = jax.random.split(key, 6)

    def linear(kw, kb, fan_in, fan_out):
        bound = 1.0 / math.sqrt(fan_in)
        w = jax.random.uniform(kw, (fan_in, fan_out), jnp.float32, -bound, bound)
        b = jax.random.uniform(kb, (1, fan_out), jnp.float32, -bound, bound)
        return w, b

    w1, b1 = linear(keys[0], keys[1], ninp, nhidden)
    w2, b2 = linear(keys[2], keys[3], nhidden, nhidden)
    w3, b3 = linear(keys[4], keys[5], nhidden, nout)
    return (w1, b1, w2, b2, w3, b3)


def prepare_nsf_params(hnn_params, lin_params, *, compute_dtype=jnp.bfloat16):
    """Pad feature dims to multiples of 128 (lane-dense MXU/VPU tiles), build
    the pre-transposed weights the analytic backward chains need, and cast the
    big weight matrices to the MXU compute dtype (bf16 by default; biases and
    the tiny last-layer rows stay f32).  Zero padding is exact: padded hidden
    units have zero outgoing weights and padded input columns get zero grad."""
    wh1, bh1, wh2, bh2, wh3, _bh3 = hnn_params   # final bias doesn't affect d/dx
    wl1, bl1, wl2, bl2, wl3, _bl3 = lin_params
    ninp, nhid = wh1.shape
    assert wh3.shape == (nhid, 1) and wl1.shape == (ninp, nhid)
    assert wl3.shape == (nhid, ninp)

    dpad = _round_up(ninp, LANE)
    hpad = _round_up(nhid, LANE)

    def pad(a, shape):
        return jnp.pad(a, [(0, s - d) for d, s in zip(a.shape, shape)])

    wh1p = pad(wh1, (dpad, hpad)).astype(compute_dtype)
    wh2p = pad(wh2, (hpad, hpad)).astype(compute_dtype)
    wl1p = pad(wl1, (dpad, hpad)).astype(compute_dtype)
    wl2p = pad(wl2, (hpad, hpad)).astype(compute_dtype)
    tensors = (
        # hnn
        wh1p, wh1p.T, pad(bh1, (1, hpad)),
        wh2p, wh2p.T, pad(bh2, (1, hpad)),
        pad(wh3, (hpad, 1)).T,                        # (1, Hp)    f32
        # linear
        wl1p, wl1p.T, pad(bl1, (1, hpad)),
        wl2p, wl2p.T, pad(bl2, (1, hpad)),
        pad(wl3, (hpad, ninp)).T,                     # (ninp, Hp) f32
    )
    return dict(ninp=ninp, nhid=nhid, dpad=dpad, hpad=hpad, tensors=tensors)


def nsf_grad_jac(x, params, *, tile_m=128):
    """Fused Pallas kernel: g = d(hnn)/dx  (B, ninp) and J = d(linear)/dx
    (B, ninp, ninp)."""
    ninp, dpad = params["ninp"], params["dpad"]
    tensors = params["tensors"]
    B, d_in = x.shape
    assert d_in == ninp

    # Explicit batch tile (multiple of the 8-row f32 sublane granularity); the
    # batch is zero-padded to a whole number of tiles so x/grad/jac blocks
    # pipeline against compute and shard across cores (tile padding is sliced
    # off before the solve).
    tile_m = max(8, _round_up(min(tile_m, _round_up(B, 8)), 8))
    bpad = _round_up(B, tile_m)
    xp = jnp.zeros((bpad, dpad), jnp.float32).at[:B, :ninp].set(
        x.astype(jnp.float32))

    grid = (bpad // tile_m,)

    def resident(shape):
        # whole-array block with a constant index -> loaded to VMEM once and
        # never re-DMA'd across grid steps
        return pl.BlockSpec(shape, lambda i: (0,) * len(shape))

    in_specs = [pl.BlockSpec((tile_m, dpad), lambda i: (i, 0))]
    in_specs += [resident(t.shape) for t in tensors]
    out_specs = [
        pl.BlockSpec((tile_m, dpad), lambda i: (i, 0)),          # grad (lane-dense)
        pl.BlockSpec((tile_m, ninp * dpad), lambda i: (i, 0)),   # jac rows, flattened
    ]
    out_shape = [
        jax.ShapeDtypeStruct((bpad, dpad), jnp.float32),
        jax.ShapeDtypeStruct((bpad, ninp * dpad), jnp.float32),
    ]

    grad_pad, jac_pad = pl.pallas_call(
        functools.partial(_nsf_kernel, ninp=ninp, dpad=dpad),
        out_shape=out_shape,
        grid_spec=pltpu.PrefetchScalarGridSpec(
            num_scalar_prefetch=0,
            grid=grid,
            in_specs=in_specs,
            out_specs=out_specs,
        ),
        compiler_params=pltpu.CompilerParams(
            # batch tiles are independent -> shard across TensorCores (v7x)
            dimension_semantics=("parallel",),
            # explicit budget: double-buffered bf16 weights + x/grad/jac tiles +
            # f32 intermediates is ~4 MiB at the default sizes; 32 MiB leaves
            # headroom for larger nhid and fits every chip's scoped VMEM.
            vmem_limit_bytes=32 * 1024 * 1024,
        ),
    )(xp, *tensors)

    grad = grad_pad[:B, :ninp]
    jac = jac_pad[:B].reshape(B, ninp, dpad)[:, :, :ninp]
    return grad, jac


def nsf_forward(x, params, *, tile_m=128):
    """NSF.forward with compute_jacobian=True, norm=False, extra_ninp=0.
    Returns (dx, jacobian); `jacobian` is what NSF stashes in its buffer."""
    grad, jac = nsf_grad_jac(x, params, tile_m=tile_m)
    m = jac - jnp.swapaxes(jac, 1, 2)
    # TODO(synk): the batched (ninp x ninp) matrix inverse (torch.inverse) has no
    # Pallas TPU lowering; it is a tiny per-sample 2x2 solve, kept in XLA.
    # TODO(synk): the norm=True branch (x @ inv(A), A loaded from norm.txt) and
    # extra_ninp > 0 are not implemented (external data file / shape-inconsistent).
    dx = jnp.linalg.solve(m, grad[..., None])[..., 0]
    return dx, jac


def nsf_grad_jac_reference(x, params):
    """Pure-JAX/XLA reference running exactly the same math as the kernel."""
    ninp, dpad = params["ninp"], params["dpad"]
    t = params["tensors"]
    B = x.shape[0]
    xp = jnp.zeros((B, dpad), jnp.float32).at[:, :ninp].set(x.astype(jnp.float32))
    wl3t = t[13]
    wl3_rows = [wl3t[i:i + 1, :] for i in range(ninp)]
    grad, jac_rows = _grad_jac_math(xp, t[0:7], t[7:13], wl3_rows)
    jac = jnp.stack(jac_rows, axis=1)
    return grad[:, :ninp], jac[:, :, :ninp]


if __name__ == "__main__":
    # NSF defaults: ninp=2, nhid=200, ndepth=3 (two Softplus hidden layers).
    ninp, nhid = 2, 200
    batch = 256        # two 128-row batch tiles -> pipelined, megacore-shardable grid
    tile_m = 128

    key = jax.random.PRNGKey(0)
    k_x, k_h, k_l = jax.random.split(key, 3)
    x = jax.random.normal(k_x, (batch, ninp), jnp.float32)
    hnn_params = init_mlp_params(k_h, ninp, nhid, 1)      # hnn:    D -> H -> H -> 1
    lin_params = init_mlp_params(k_l, ninp, nhid, ninp)   # linear: D -> H -> H -> D
    params = prepare_nsf_params(hnn_params, lin_params, compute_dtype=jnp.bfloat16)

    # Pallas kernel outputs (the fused forward + analytic d/dx part).
    grad, jac = nsf_grad_jac(x, params, tile_m=tile_m)
    grad, jac = jax.block_until_ready((grad, jac))
    assert grad.shape == (batch, ninp) and jac.shape == (batch, ninp, ninp)

    # Check against a pure-XLA reference that runs the identical
    # (bf16-matmul, f32-accumulate) math.
    grad_ref, jac_ref = nsf_grad_jac_reference(x, params)
    assert jnp.allclose(grad, grad_ref, atol=2e-3, rtol=2e-2), float(
        jnp.max(jnp.abs(grad - grad_ref)))
    assert jnp.allclose(jac, jac_ref, atol=2e-3, rtol=2e-2), float(
        jnp.max(jnp.abs(jac - jac_ref)))

    # Full NSF forward: dx = (J - J^T)^{-1} dH/dx  (solve stays in XLA).
    dx, _ = nsf_forward(x, params, tile_m=tile_m)
    dx = jax.block_until_ready(dx)
    assert dx.shape == (batch, ninp)
    assert bool(jnp.all(jnp.isfinite(dx)))

    print("KERNEL_OK")
</pallas_src>

<mosaic_0001>
module attributes {stable_mosaic.version = 11 : i64} {
  func.func @_nsf_kernel(%arg0: i32, %arg1: memref<128x128xf32, #tpu.memory_space<vmem>>, %arg2: memref<128x256xbf16, #tpu.memory_space<vmem>>, %arg3: memref<256x128xbf16, #tpu.memory_space<vmem>>, %arg4: memref<1x256xf32, #tpu.memory_space<vmem>>, %arg5: memref<256x256xbf16, #tpu.memory_space<vmem>>, %arg6: memref<256x256xbf16, #tpu.memory_space<vmem>>, %arg7: memref<1x256xf32, #tpu.memory_space<vmem>>, %arg8: memref<1x256xf32, #tpu.memory_space<vmem>>, %arg9: memref<128x256xbf16, #tpu.memory_space<vmem>>, %arg10: memref<256x128xbf16, #tpu.memory_space<vmem>>, %arg11: memref<1x256xf32, #tpu.memory_space<vmem>>, %arg12: memref<256x256xbf16, #tpu.memory_space<vmem>>, %arg13: memref<256x256xbf16, #tpu.memory_space<vmem>>, %arg14: memref<1x256xf32, #tpu.memory_space<vmem>>, %arg15: memref<2x256xf32, #tpu.memory_space<vmem>>, %arg16: memref<128x128xf32, #tpu.memory_space<vmem>>, %arg17: memref<128x256xf32, #tpu.memory_space<vmem>>) attributes {dimension_semantics = [#tpu.dimension_semantics<parallel>], iteration_bounds = array<i64: 2>, scalar_prefetch = 0 : i64, scratch_operands = 0 : i64, tpu.core_type = #tpu.core_type<tc>, window_params = [{transform_indices = @transform_0, window_bounds = array<i64: 128, 128>}, {pipeline_mode = #tpu.pipeline_mode<synchronous>, transform_indices = @transform_1, window_bounds = array<i64: 128, 256>}, {pipeline_mode = #tpu.pipeline_mode<synchronous>, transform_indices = @transform_2, window_bounds = array<i64: 256, 128>}, {pipeline_mode = #tpu.pipeline_mode<synchronous>, transform_indices = @transform_3, window_bounds = array<i64: 1, 256>}, {pipeline_mode = #tpu.pipeline_mode<synchronous>, transform_indices = @transform_4, window_bounds = array<i64: 256, 256>}, {pipeline_mode = #tpu.pipeline_mode<synchronous>, transform_indices = @transform_5, window_bounds = array<i64: 256, 256>}, {pipeline_mode = #tpu.pipeline_mode<synchronous>, transform_indices = @transform_6, window_bounds = array<i64: 1, 256>}, {pipeline_mode = #tpu.pipeline_mode<synchronous>, transform_indices = @transform_7, window_bounds = array<i64: 1, 256>}, {pipeline_mode = #tpu.pipeline_mode<synchronous>, transform_indices = @transform_8, window_bounds = array<i64: 128, 256>}, {pipeline_mode = #tpu.pipeline_mode<synchronous>, transform_indices = @transform_9, window_bounds = array<i64: 256, 128>}, {pipeline_mode = #tpu.pipeline_mode<synchronous>, transform_indices = @transform_10, window_bounds = array<i64: 1, 256>}, {pipeline_mode = #tpu.pipeline_mode<synchronous>, transform_indices = @transform_11, window_bounds = array<i64: 256, 256>}, {pipeline_mode = #tpu.pipeline_mode<synchronous>, transform_indices = @transform_12, window_bounds = array<i64: 256, 256>}, {pipeline_mode = #tpu.pipeline_mode<synchronous>, transform_indices = @transform_13, window_bounds = array<i64: 1, 256>}, {pipeline_mode = #tpu.pipeline_mode<synchronous>, transform_indices = @transform_14, window_bounds = array<i64: 2, 256>}, {transform_indices = @transform_15, window_bounds = array<i64: 128, 128>}, {transform_indices = @transform_16, window_bounds = array<i64: 128, 256>}]} {
    %c0 = arith.constant 0 : index
    %c0_0 = arith.constant 0 : index
    %0 = vector.load %arg2[%c0, %c0_0] : memref<128x256xbf16, #tpu.memory_space<vmem>>, vector<128x256xbf16>
    %c0_1 = arith.constant 0 : index
    %c0_2 = arith.constant 0 : index
    %1 = vector.load %arg3[%c0_1, %c0_2] : memref<256x128xbf16, #tpu.memory_space<vmem>>, vector<256x128xbf16>
    %c0_3 = arith.constant 0 : index
    %c0_4 = arith.constant 0 : index
    %2 = vector.load %arg4[%c0_3, %c0_4] : memref<1x256xf32, #tpu.memory_space<vmem>>, vector<1x256xf32>
    %c0_5 = arith.constant 0 : index
    %c0_6 = arith.constant 0 : index
    %3 = vector.load %arg5[%c0_5, %c0_6] : memref<256x256xbf16, #tpu.memory_space<vmem>>, vector<256x256xbf16>
    %c0_7 = arith.constant 0 : index
    %c0_8 = arith.constant 0 : index
    %4 = vector.load %arg6[%c0_7, %c0_8] : memref<256x256xbf16, #tpu.memory_space<vmem>>, vector<256x256xbf16>
    %c0_9 = arith.constant 0 : index
    %c0_10 = arith.constant 0 : index
    %5 = vector.load %arg7[%c0_9, %c0_10] : memref<1x256xf32, #tpu.memory_space<vmem>>, vector<1x256xf32>
    %c0_11 = arith.constant 0 : index
    %c0_12 = arith.constant 0 : index
    %6 = vector.load %arg8[%c0_11, %c0_12] : memref<1x256xf32, #tpu.memory_space<vmem>>, vector<1x256xf32>
    %c0_13 = arith.constant 0 : index
    %c0_14 = arith.constant 0 : index
    %7 = vector.load %arg9[%c0_13, %c0_14] : memref<128x256xbf16, #tpu.memory_space<vmem>>, vector<128x256xbf16>
    %c0_15 = arith.constant 0 : index
    %c0_16 = arith.constant 0 : index
    %8 = vector.load %arg10[%c0_15, %c0_16] : memref<256x128xbf16, #tpu.memory_space<vmem>>, vector<256x128xbf16>
    %c0_17 = arith.constant 0 : index
    %c0_18 = arith.constant 0 : index
    %9 = vector.load %arg11[%c0_17, %c0_18] : memref<1x256xf32, #tpu.memory_space<vmem>>, vector<1x256xf32>
    %c0_19 = arith.constant 0 : index
    %c0_20 = arith.constant 0 : index
    %10 = vector.load %arg12[%c0_19, %c0_20] : memref<256x256xbf16, #tpu.memory_space<vmem>>, vector<256x256xbf16>
    %c0_21 = arith.constant 0 : index
    %c0_22 = arith.constant 0 : index
    %11 = vector.load %arg13[%c0_21, %c0_22] : memref<256x256xbf16, #tpu.memory_space<vmem>>, vector<256x256xbf16>
    %c0_23 = arith.constant 0 : index
    %c0_24 = arith.constant 0 : index
    %12 = vector.load %arg14[%c0_23, %c0_24] : memref<1x256xf32, #tpu.memory_space<vmem>>, vector<1x256xf32>
    %c0_25 = arith.constant 0 : index
    %c0_26 = arith.constant 0 : index
    %13 = vector.load %arg15[%c0_25, %c0_26] : memref<2x256xf32, #tpu.memory_space<vmem>>, vector<1x256xf32>
    %c1 = arith.constant 1 : index
    %c0_27 = arith.constant 0 : index
    %14 = vector.load %arg15[%c1, %c0_27] : memref<2x256xf32, #tpu.memory_space<vmem>>, vector<1x256xf32>
    %c0_28 = arith.constant 0 : index
    %c0_29 = arith.constant 0 : index
    %15 = vector.load %arg1[%c0_28, %c0_29] : memref<128x128xf32, #tpu.memory_space<vmem>>, vector<128x128xf32>
    %16 = arith.truncf %15 : vector<128x128xf32> to vector<128x128xbf16>
    %cst = arith.constant dense<0.000000e+00> : vector<128x256xf32>
    %17 = tpu.matmul %16, %0, %cst {dimension_numbers = #tpu.dot_dimension_numbers<[1], [0], [0], [1], [0, 0, 1, 1], [], []>} : vector<128x128xbf16>, vector<128x256xbf16>, vector<128x256xf32> -> vector<128x256xf32>
    %18 = vector.broadcast %2 : vector<1x256xf32> to vector<128x256xf32>
    %19 = arith.addf %17, %18 : vector<128x256xf32>
    %cst_30 = arith.constant 5.000000e-01 : f32
    %20 = vector.broadcast %cst_30 : f32 to vector<128x256xf32>
    %21 = arith.mulf %20, %19 : vector<128x256xf32>
    %22 = math.tanh %21 : vector<128x256xf32>
    %cst_31 = arith.constant 1.000000e+00 : f32
    %23 = vector.broadcast %cst_31 : f32 to vector<128x256xf32>
    %24 = arith.addf %22, %23 : vector<128x256xf32>
    %cst_32 = arith.constant 5.000000e-01 : f32
    %25 = vector.broadcast %cst_32 : f32 to vector<128x256xf32>
    %26 = arith.mulf %25, %24 : vector<128x256xf32>
    %cst_33 = arith.constant 0.000000e+00 : f32
    %27 = vector.broadcast %cst_33 : f32 to vector<128x256xf32>
    %28 = arith.maximumf %19, %27 : vector<128x256xf32>
    %29 = math.absf %19 : vector<128x256xf32>
    %cst_34 = arith.constant 0.000000e+00 : f32
    %30 = vector.broadcast %cst_34 : f32 to vector<128x256xf32>
    %31 = arith.subf %30, %29 : vector<128x256xf32>
    %32 = math.exp %31 : vector<128x256xf32>
    %cst_35 = arith.constant 1.000000e+00 : f32
    %33 = vector.broadcast %cst_35 : f32 to vector<128x256xf32>
    %34 = arith.addf %33, %32 : vector<128x256xf32>
    %35 = math.log %34 : vector<128x256xf32>
    %36 = arith.addf %28, %35 : vector<128x256xf32>
    %37 = arith.truncf %36 : vector<128x256xf32> to vector<128x256xbf16>
    %cst_36 = arith.constant dense<0.000000e+00> : vector<128x256xf32>
    %38 = tpu.matmul %37, %3, %cst_36 {dimension_numbers = #tpu.dot_dimension_numbers<[1], [0], [0], [1], [0, 0, 1, 1], [], []>} : vector<128x256xbf16>, vector<256x256xbf16>, vector<128x256xf32> -> vector<128x256xf32>
    %39 = vector.broadcast %5 : vector<1x256xf32> to vector<128x256xf32>
    %40 = arith.addf %38, %39 : vector<128x256xf32>
    %cst_37 = arith.constant 5.000000e-01 : f32
    %41 = vector.broadcast %cst_37 : f32 to vector<128x256xf32>
    %42 = arith.mulf %41, %40 : vector<128x256xf32>
    %43 = math.tanh %42 : vector<128x256xf32>
    %cst_38 = arith.constant 1.000000e+00 : f32
    %44 = vector.broadcast %cst_38 : f32 to vector<128x256xf32>
    %45 = arith.addf %43, %44 : vector<128x256xf32>
    %cst_39 = arith.constant 5.000000e-01 : f32
    %46 = vector.broadcast %cst_39 : f32 to vector<128x256xf32>
    %47 = arith.mulf %46, %45 : vector<128x256xf32>
    %48 = vector.broadcast %6 : vector<1x256xf32> to vector<128x256xf32>
    %49 = arith.mulf %47, %48 : vector<128x256xf32>
    %50 = arith.truncf %49 : vector<128x256xf32> to vector<128x256xbf16>
    %cst_40 = arith.constant dense<0.000000e+00> : vector<128x256xf32>
    %51 = tpu.matmul %50, %4, %cst_40 {dimension_numbers = #tpu.dot_dimension_numbers<[1], [0], [0], [1], [0, 0, 1, 1], [], []>} : vector<128x256xbf16>, vector<256x256xbf16>, vector<128x256xf32> -> vector<128x256xf32>
    %52 = arith.mulf %51, %26 : vector<128x256xf32>
    %53 = arith.truncf %52 : vector<128x256xf32> to vector<128x256xbf16>
    %cst_41 = arith.constant dense<0.000000e+00> : vector<128x128xf32>
    %54 = tpu.matmul %53, %1, %cst_41 {dimension_numbers = #tpu.dot_dimension_numbers<[1], [0], [0], [1], [0, 0, 1, 1], [], []>} : vector<128x256xbf16>, vector<256x128xbf16>, vector<128x128xf32> -> vector<128x128xf32>
    %55 = arith.truncf %15 : vector<128x128xf32> to vector<128x128xbf16>
    %cst_42 = arith.constant dense<0.000000e+00> : vector<128x256xf32>
    %56 = tpu.matmul %55, %7, %cst_42 {dimension_numbers = #tpu.dot_dimension_numbers<[1], [0], [0], [1], [0, 0, 1, 1], [], []>} : vector<128x128xbf16>, vector<128x256xbf16>, vector<128x256xf32> -> vector<128x256xf32>
    %57 = vector.broadcast %9 : vector<1x256xf32> to vector<128x256xf32>
    %58 = arith.addf %56, %57 : vector<128x256xf32>
    %cst_43 = arith.constant 5.000000e-01 : f32
    %59 = vector.broadcast %cst_43 : f32 to vector<128x256xf32>
    %60 = arith.mulf %59, %58 : vector<128x256xf32>
    %61 = math.tanh %60 : vector<128x256xf32>
    %cst_44 = arith.constant 1.000000e+00 : f32
    %62 = vector.broadcast %cst_44 : f32 to vector<128x256xf32>
    %63 = arith.addf %61, %62 : vector<128x256xf32>
    %cst_45 = arith.constant 5.000000e-01 : f32
    %64 = vector.broadcast %cst_45 : f32 to vector<128x256xf32>
    %65 = arith.mulf %64, %63 : vector<128x256xf32>
    %cst_46 = arith.constant 0.000000e+00 : f32
    %66 = vector.broadcast %cst_46 : f32 to vector<128x256xf32>
    %67 = arith.maximumf %58, %66 : vector<128x256xf32>
    %68 = math.absf %58 : vector<128x256xf32>
    %cst_47 = arith.constant 0.000000e+00 : f32
    %69 = vector.broadcast %cst_47 : f32 to vector<128x256xf32>
    %70 = arith.subf %69, %68 : vector<128x256xf32>
    %71 = math.exp %70 : vector<128x256xf32>
    %cst_48 = arith.constant 1.000000e+00 : f32
    %72 = vector.broadcast %cst_48 : f32 to vector<128x256xf32>
    %73 = arith.addf %72, %71 : vector<128x256xf32>
    %74 = math.log %73 : vector<128x256xf32>
    %75 = arith.addf %67, %74 : vector<128x256xf32>
    %76 = arith.truncf %75 : vector<128x256xf32> to vector<128x256xbf16>
    %cst_49 = arith.constant dense<0.000000e+00> : vector<128x256xf32>
    %77 = tpu.matmul %76, %10, %cst_49 {dimension_numbers = #tpu.dot_dimension_numbers<[1], [0], [0], [1], [0, 0, 1, 1], [], []>} : vector<128x256xbf16>, vector<256x256xbf16>, vector<128x256xf32> -> vector<128x256xf32>
    %78 = vector.broadcast %12 : vector<1x256xf32> to vector<128x256xf32>
    %79 = arith.addf %77, %78 : vector<128x256xf32>
    %cst_50 = arith.constant 5.000000e-01 : f32
    %80 = vector.broadcast %cst_50 : f32 to vector<128x256xf32>
    %81 = arith.mulf %80, %79 : vector<128x256xf32>
    %82 = math.tanh %81 : vector<128x256xf32>
    %cst_51 = arith.constant 1.000000e+00 : f32
    %83 = vector.broadcast %cst_51 : f32 to vector<128x256xf32>
    %84 = arith.addf %82, %83 : vector<128x256xf32>
    %cst_52 = arith.constant 5.000000e-01 : f32
    %85 = vector.broadcast %cst_52 : f32 to vector<128x256xf32>
    %86 = arith.mulf %85, %84 : vector<128x256xf32>
    %87 = vector.broadcast %13 : vector<1x256xf32> to vector<128x256xf32>
    %88 = arith.mulf %86, %87 : vector<128x256xf32>
    %89 = arith.truncf %88 : vector<128x256xf32> to vector<128x256xbf16>
    %cst_53 = arith.constant dense<0.000000e+00> : vector<128x256xf32>
    %90 = tpu.matmul %89, %11, %cst_53 {dimension_numbers = #tpu.dot_dimension_numbers<[1], [0], [0], [1], [0, 0, 1, 1], [], []>} : vector<128x256xbf16>, vector<256x256xbf16>, vector<128x256xf32> -> vector<128x256xf32>
    %91 = arith.mulf %90, %65 : vector<128x256xf32>
    %92 = arith.truncf %91 : vector<128x256xf32> to vector<128x256xbf16>
    %cst_54 = arith.constant dense<0.000000e+00> : vector<128x128xf32>
    %93 = tpu.matmul %92, %8, %cst_54 {dimension_numbers = #tpu.dot_dimension_numbers<[1], [0], [0], [1], [0, 0, 1, 1], [], []>} : vector<128x256xbf16>, vector<256x128xbf16>, vector<128x128xf32> -> vector<128x128xf32>
    %94 = vector.broadcast %14 : vector<1x256xf32> to vector<128x256xf32>
    %95 = arith.mulf %86, %94 : vector<128x256xf32>
    %96 = arith.truncf %95 : vector<128x256xf32> to vector<128x256xbf16>
    %cst_55 = arith.constant dense<0.000000e+00> : vector<128x256xf32>
    %97 = tpu.matmul %96, %11, %cst_55 {dimension_numbers = #tpu.dot_dimension_numbers<[1], [0], [0], [1], [0, 0, 1, 1], [], []>} : vector<128x256xbf16>, vector<256x256xbf16>, vector<128x256xf32> -> vector<128x256xf32>
    %98 = arith.mulf %97, %65 : vector<128x256xf32>
    %99 = arith.truncf %98 : vector<128x256xf32> to vector<128x256xbf16>
    %cst_56 = arith.constant dense<0.000000e+00> : vector<128x128xf32>
    %100 = tpu.matmul %99, %8, %cst_56 {dimension_numbers = #tpu.dot_dimension_numbers<[1], [0], [0], [1], [0, 0, 1, 1], [], []>} : vector<128x256xbf16>, vector<256x128xbf16>, vector<128x128xf32> -> vector<128x128xf32>
    %c0_57 = arith.constant 0 : index
    %c0_58 = arith.constant 0 : index
    %101 = vector.load %arg16[%c0_57, %c0_58] : memref<128x128xf32, #tpu.memory_space<vmem>>, vector<128x128xf32>
    tpu.vector_store %arg16[%c0_57, %c0_58], %54 {strides = array<i32>} : memref<128x128xf32, #tpu.memory_space<vmem>>, vector<128x128xf32>,
    %c0_59 = arith.constant 0 : index
    %c0_60 = arith.constant 0 : index
    %102 = vector.load %arg17[%c0_59, %c0_60] : memref<128x256xf32, #tpu.memory_space<vmem>>, vector<128x128xf32>
    tpu.vector_store %arg17[%c0_59, %c0_60], %93 {strides = array<i32>} : memref<128x256xf32, #tpu.memory_space<vmem>>, vector<128x128xf32>,
    %c0_61 = arith.constant 0 : index
    %c128 = arith.constant 128 : index
    %103 = vector.load %arg17[%c0_61, %c128] : memref<128x256xf32, #tpu.memory_space<vmem>>, vector<128x128xf32>
    tpu.vector_store %arg17[%c0_61, %c128], %100 {strides = array<i32>} : memref<128x256xf32, #tpu.memory_space<vmem>>, vector<128x128xf32>,
    return
  }
  func.func @transform_0(%arg0: i32) -> (i32, i32) {
    %c0_i32 = arith.constant 0 : i32
    %c0_i32_0 = arith.constant 0 : i32
    return %arg0, %c0_i32 : i32, i32
  }
  func.func @transform_1(%arg0: i32) -> (i32, i32) {
    %c0_i32 = arith.constant 0 : i32
    %c0_i32_0 = arith.constant 0 : i32
    %c0_i32_1 = arith.constant 0 : i32
    return %c0_i32, %c0_i32_0 : i32, i32
  }
  func.func @transform_2(%arg0: i32) -> (i32, i32) {
    %c0_i32 = arith.constant 0 : i32
    %c0_i32_0 = arith.constant 0 : i32
    %c0_i32_1 = arith.constant 0 : i32
    return %c0_i32, %c0_i32_0 : i32, i32
  }
  func.func @transform_3(%arg0: i32) -> (i32, i32) {
    %c0_i32 = arith.constant 0 : i32
    %c0_i32_0 = arith.constant 0 : i32
    %c0_i32_1 = arith.constant 0 : i32
    return %c0_i32, %c0_i32_0 : i32, i32
  }
  func.func @transform_4(%arg0: i32) -> (i32, i32) {
    %c0_i32 = arith.constant 0 : i32
    %c0_i32_0 = arith.constant 0 : i32
    %c0_i32_1 = arith.constant 0 : i32
    return %c0_i32, %c0_i32_0 : i32, i32
  }
  func.func @transform_5(%arg0: i32) -> (i32, i32) {
    %c0_i32 = arith.constant 0 : i32
    %c0_i32_0 = arith.constant 0 : i32
    %c0_i32_1 = arith.constant 0 : i32
    return %c0_i32, %c0_i32_0 : i32, i32
  }
  func.func @transform_6(%arg0: i32) -> (i32, i32) {
    %c0_i32 = arith.constant 0 : i32
    %c0_i32_0 = arith.constant 0 : i32
    %c0_i32_1 = arith.constant 0 : i32
    return %c0_i32, %c0_i32_0 : i32, i32
  }
  func.func @transform_7(%arg0: i32) -> (i32, i32) {
    %c0_i32 = arith.constant 0 : i32
    %c0_i32_0 = arith.constant 0 : i32
    %c0_i32_1 = arith.constant 0 : i32
    return %c0_i32, %c0_i32_0 : i32, i32
  }
  func.func @transform_8(%arg0: i32) -> (i32, i32) {
    %c0_i32 = arith.constant 0 : i32
    %c0_i32_0 = arith.constant 0 : i32
    %c0_i32_1 = arith.constant 0 : i32
    return %c0_i32, %c0_i32_0 : i32, i32
  }
  func.func @transform_9(%arg0: i32) -> (i32, i32) {
    %c0_i32 = arith.constant 0 : i32
    %c0_i32_0 = arith.constant 0 : i32
    %c0_i32_1 = arith.constant 0 : i32
    return %c0_i32, %c0_i32_0 : i32, i32
  }
  func.func @transform_10(%arg0: i32) -> (i32, i32) {
    %c0_i32 = arith.constant 0 : i32
    %c0_i32_0 = arith.constant 0 : i32
    %c0_i32_1 = arith.constant 0 : i32
    return %c0_i32, %c0_i32_0 : i32, i32
  }
  func.func @transform_11(%arg0: i32) -> (i32, i32) {
    %c0_i32 = arith.constant 0 : i32
    %c0_i32_0 = arith.constant 0 : i32
    %c0_i32_1 = arith.constant 0 : i32
    return %c0_i32, %c0_i32_0 : i32, i32
  }
  func.func @transform_12(%arg0: i32) -> (i32, i32) {
    %c0_i32 = arith.constant 0 : i32
    %c0_i32_0 = arith.constant 0 : i32
    %c0_i32_1 = arith.constant 0 : i32
    return %c0_i32, %c0_i32_0 : i32, i32
  }
  func.func @transform_13(%arg0: i32) -> (i32, i32) {
    %c0_i32 = arith.constant 0 : i32
    %c0_i32_0 = arith.constant 0 : i32
    %c0_i32_1 = arith.constant 0 : i32
    return %c0_i32, %c0_i32_0 : i32, i32
  }
  func.func @transform_14(%arg0: i32) -> (i32, i32) {
    %c0_i32 = arith.constant 0 : i32
    %c0_i32_0 = arith.constant 0 : i32
    %c0_i32_1 = arith.constant 0 : i32
    return %c0_i32, %c0_i32_0 : i32, i32
  }
  func.func @transform_15(%arg0: i32) -> (i32, i32) {
    %c0_i32 = arith.constant 0 : i32
    %c0_i32_0 = arith.constant 0 : i32
    return %arg0, %c0_i32 : i32, i32
  }
  func.func @transform_16(%arg0: i32) -> (i32, i32) {
    %c0_i32 = arith.constant 0 : i32
    %c0_i32_0 = arith.constant 0 : i32
    return %arg0, %c0_i32 : i32, i32
  }
}

</mosaic_0001>

<llo_original>
// kernel: tpu_custom_call.1
$region0: #{tpu_custom_call.1}
  #allocation0 [shape = 'u32[]', space=smem, size = 0x4, offset = 0x4, fixed_abs, tag = 'smem constant byte address 0x4 - core index']
  #allocation1 [shape = 'u32[144,128]{1,0:T(1,128)}', space=vmem, size = 0x12000, scoped, tag = 'internal scratch']
  %s0 = inlined_call_operand.hbm [shape: f32[256,128], index: 0, kind: input, shape index: {}]
  %s1 = inlined_call_operand.hbm [shape: bf16[128,256], index: 1, kind: input, shape index: {}]
  %s2 = inlined_call_operand.hbm [shape: bf16[256,128], index: 2, kind: input, shape index: {}]
  %s3 = inlined_call_operand.vmem [shape: f32[1,256], index: 3, kind: input, shape index: {}]
  %s4 = inlined_call_operand.hbm [shape: bf16[256,256], index: 4, kind: input, shape index: {}]
  %s5 = inlined_call_operand.hbm [shape: bf16[256,256], index: 5, kind: input, shape index: {}]
  %s6 = inlined_call_operand.vmem [shape: f32[1,256], index: 6, kind: input, shape index: {}]
  %s7 = inlined_call_operand.vmem [shape: f32[1,256], index: 7, kind: input, shape index: {}]
  %s8 = inlined_call_operand.hbm [shape: bf16[128,256], index: 8, kind: input, shape index: {}]
  %s9 = inlined_call_operand.hbm [shape: bf16[256,128], index: 9, kind: input, shape index: {}]
  %s10 = inlined_call_operand.vmem [shape: f32[1,256], index: 10, kind: input, shape index: {}]
  %s11 = inlined_call_operand.hbm [shape: bf16[256,256], index: 11, kind: input, shape index: {}]
  %s12 = inlined_call_operand.hbm [shape: bf16[256,256], index: 12, kind: input, shape index: {}]
  %s13 = inlined_call_operand.vmem [shape: f32[1,256], index: 13, kind: input, shape index: {}]
  %s14 = inlined_call_operand.vmem [shape: f32[2,256], index: 14, kind: input, shape index: {}]
  %s15 = inlined_call_operand.hbm [shape: f32[256,128], index: 15, kind: output, shape index: {0}]
  %s16 = inlined_call_operand.hbm [shape: f32[256,256], index: 16, kind: output, shape index: {1}]
  %17 = xla_tuple %s15, %s16
  %s18 = sld [smem:[#allocation0]]
  $region137: #{tpu_custom_call.1} parent=0
    _
  %s20 = ssub.s32 1, %s18
  %s21 = scalar_select 0, %s20, %s18
  $region1: #{tpu_custom_call.1} parent=0
    #allocation2 [shape = 'u8[131072]{0}', space=vmem, size = 0x20000, scoped, tag = 'input window, operand 0']
    #allocation3 [shape = 's32[2]{0}', space=sflag, size = 0x8, scoped, tag = 'scoped memory for tpu_custom_call.1']
    #allocation4 [shape = 's32[2]{0}', space=sflag, size = 0x8, scoped, tag = 'scoped memory for tpu_custom_call.1']
    #allocation5 [shape = 'u8[65536]{0}', space=vmem, size = 0x10000, scoped, tag = 'input window, operand 1, single buffered']
    #allocation6 [shape = 's32[1]{0}', space=sflag, size = 0x4, scoped, tag = 'scoped memory for tpu_custom_call.1']
    #allocation7 [shape = 'u8[65536]{0}', space=vmem, size = 0x10000, scoped, tag = 'input window, operand 2, single buffered']
    #allocation8 [shape = 'u8[131072]{0}', space=vmem, size = 0x20000, scoped, tag = 'input window, operand 4, single buffered']
    #allocation9 [shape = 's32[1]{0}', space=sflag, size = 0x4, scoped, tag = 'scoped memory for tpu_custom_call.1']
    #allocation10 [shape = 'u8[131072]{0}', space=vmem, size = 0x20000, scoped, tag = 'input window, operand 5, single buffered']
    #allocation11 [shape = 'u8[65536]{0}', space=vmem, size = 0x10000, scoped, tag = 'input window, operand 8, single buffered']
    #allocation12 [shape = 's32[1]{0}', space=sflag, size = 0x4, scoped, tag = 'scoped memory for tpu_custom_call.1']
    #allocation13 [shape = 'u8[65536]{0}', space=vmem, size = 0x10000, scoped, tag = 'input window, operand 9, single buffered']
    #allocation14 [shape = 'u8[131072]{0}', space=vmem, size = 0x20000, scoped, tag = 'input window, operand 11, single buffered']
    #allocation15 [shape = 's32[1]{0}', space=sflag, size = 0x4, scoped, tag = 'scoped memory for tpu_custom_call.1']
    #allocation16 [shape = 'u8[131072]{0}', space=vmem, size = 0x20000, scoped, tag = 'input window, operand 12, single buffered']
    #allocation17 [shape = 'u8[131072]{0}', space=vmem, size = 0x20000, scoped, tag = 'output window, operand 0']
    #allocation18 [shape = 'u8[262144]{0}', space=vmem, size = 0x40000, scoped, tag = 'output window, operand 1']
    #allocation19 [shape = 's32[2]{0}', space=sflag, size = 0x8, scoped, tag = 'scoped memory for tpu_custom_call.1']
    %22 = vsyncpa [#allocation3], 0
    %s23 = scalar_lea.sflag [#allocation3], 1
    %24 = vsyncpa %s23, 0
    %25 = vsyncpa [#allocation6], 0
    %26 = vsyncpa [#allocation9], 0
    %27 = vsyncpa [#allocation12], 0
    %28 = vsyncpa [#allocation15], 0
    %29 = vsyncpa [#allocation4], 0
    %s30 = scalar_lea.sflag [#allocation4], 1
    %31 = vsyncpa %s30, 0
    %32 = vsyncpa [#allocation19], 0
    %s33 = scalar_lea.sflag [#allocation19], 1
    %34 = vsyncpa %s33, 0
    loop: start=0, step=1, limit=4
    $region2: #{tpu_custom_call.1} parent=1 // loop_pre_header
      _
    $region3: #{tpu_custom_call.1} parent=1 // loop_header
      %s36 = sphi 0, %s40
      %p37 = scmp.ge.s32.totalorder %s36, 4
      %s46 = sphi 0, %s48
      %s49 = sphi 0, %s46
      %s50 = sphi 0, %s49
      %s66 = sphi 0, %s50
      %s70 = sphi 0, %s70
      %s72 = sphi 0, %s70
      %s73 = sphi 0, %s72
      %s87 = sphi 0, %s73
      %s91 = sphi 0, %s91
      %s93 = sphi 0, %s91
      %s94 = sphi 0, %s93
      %s108 = sphi 0, %s94
      %s112 = sphi 0, %s112
      %s114 = sphi 0, %s112
      %s115 = sphi 0, %s114
      %s129 = sphi 0, %s115
      %s133 = sphi 0, %s133
      %s135 = sphi 0, %s133
      %s136 = sphi 0, %s135
      %s150 = sphi 0, %s136
      %s154 = sphi 0, %s154
      %s156 = sphi 0, %s154
      %s157 = sphi 0, %s156
      %s171 = sphi 0, %s157
      %s175 = sphi 0, %s175
      %s177 = sphi 0, %s175
      %s178 = sphi 0, %s177
      %s192 = sphi 0, %s178
      %s196 = sphi 0, %s196
      %s198 = sphi 0, %s196
      %s199 = sphi 0, %s198
      %s213 = sphi 0, %s199
      %s217 = sphi 0, %s217
      %s219 = sphi 0, %s217
      %s220 = sphi 0, %s219
      %s234 = sphi 0, %s220
      %s238 = sphi 0, %s238
      %s240 = sphi 0, %s238
      %s241 = sphi 0, %s240
      %s255 = sphi 0, %s241
      %s259 = sphi 0, %s259
      %s261 = sphi 0, %s259
      %s262 = sphi 0, %s261
      %s276 = sphi 0, %s262
      %s280 = sphi 0, %s280
      %s282 = sphi 0, %s280
      %s283 = sphi 0, %s282
      %s297 = sphi 0, %s283
      %s301 = sphi 0, %s301
      %s303 = sphi 0, %s301
      %s304 = sphi 0, %s303
      %s318 = sphi 0, %s304
      %s322 = sphi 0, %s322
      %s324 = sphi 0, %s322
      %s325 = sphi 0, %s324
      %s339 = sphi 0, %s325
      %s343 = sphi 0, %s343
      %s345 = sphi 0, %s343
      %s346 = sphi 0, %s345
      %s360 = sphi 0, %s346
      %s366 = sphi 0, %s368
      %s369 = sphi 0, %s366
      %s370 = sphi 0, %s369
      %s386 = sphi 0, %s370
      %s392 = sphi 0, %s394
      %s395 = sphi 0, %s392
      %s396 = sphi 0, %s395
      %s412 = sphi 0, %s396
    $region4: #{tpu_custom_call.1} parent=1 // loop_header_branch
      %39 = sbr.rel (%p37) target = $region8
    $region5: #{tpu_custom_call.1} parent=1 // loop_body
      %s41 = ssub.s32 %s36, 1
      %s42 = ssub.s32 %s36, 2
      %s43 = sadd.s32 %s36, 1
      %s44 = ssub.s32 %s36, %s43
      %p45 = scmp.eq.s32.totalorder %s44, 0
      %s47 = sadd.s32 %s46, 1
      %s48 = scalar_select %p45, %s46, %s47
      %p51 = pneg %p45
      %p52 = scmp.eq.s32.totalorder %s36, 1
      %p53 = por %p51, %p52
      %p54 = scmp.ne.s32.totalorder %s46, %s49
      %p55 = scmp.eq.s32.totalorder %s36, 0
      %p56 = por %p54, %p55
      %p57 = scmp.ne.s32.totalorder %s46, %s49
      %p58 = scmp.eq.s32.totalorder %s41, 1
      %p59 = por %p57, %p58
      %p60 = scmp.ne.s32.totalorder %s49, %s50
      %p61 = scmp.eq.s32.totalorder %s41, 0
      %p62 = por %p60, %p61
      %p63 = scmp.ne.s32.totalorder %s49, %s50
      %p64 = scmp.eq.s32.totalorder %s42, 1
      %p65 = por %p63, %p64
      %p67 = scmp.ne.s32.totalorder %s50, %s66
      %p68 = scmp.eq.s32.totalorder %s42, 0
      %p69 = por %p67, %p68
      %s71 = sadd.s32 %s70, 1
      %p74 = scmp.eq.s32.totalorder %s36, 1
      %p75 = scmp.ne.s32.totalorder %s70, %s72
      %p76 = scmp.eq.s32.totalorder %s36, 0
      %p77 = por %p75, %p76
      %p78 = scmp.ne.s32.totalorder %s70, %s72
      %p79 = scmp.eq.s32.totalorder %s41, 1
      %p80 = por %p78, %p79
      %p81 = scmp.ne.s32.totalorder %s72, %s73
      %p82 = scmp.eq.s32.totalorder %s41, 0
      %p83 = por %p81, %p82
      %p84 = scmp.ne.s32.totalorder %s72, %s73
      %p85 = scmp.eq.s32.totalorder %s42, 1
      %p86 = por %p84, %p85
      %p88 = scmp.ne.s32.totalorder %s73, %s87
      %p89 = scmp.eq.s32.totalorder %s42, 0
      %p90 = por %p88, %p89
      %s92 = sadd.s32 %s91, 1
      %p95 = scmp.eq.s32.totalorder %s36, 1
      %p96 = scmp.ne.s32.totalorder %s91, %s93
      %p97 = scmp.eq.s32.totalorder %s36, 0
      %p98 = por %p96, %p97
      %p99 = scmp.ne.s32.totalorder %s91, %s93
      %p100 = scmp.eq.s32.totalorder %s41, 1
      %p101 = por %p99, %p100
      %p102 = scmp.ne.s32.totalorder %s93, %s94
      %p103 = scmp.eq.s32.totalorder %s41, 0
      %p104 = por %p102, %p103
      %p105 = scmp.ne.s32.totalorder %s93, %s94
      %p106 = scmp.eq.s32.totalorder %s42, 1
      %p107 = por %p105, %p106
      %p109 = scmp.ne.s32.totalorder %s94, %s108
      %p110 = scmp.eq.s32.totalorder %s42, 0
      %p111 = por %p109, %p110
      %s113 = sadd.s32 %s112, 1
      %p116 = scmp.eq.s32.totalorder %s36, 1
      %p117 = scmp.ne.s32.totalorder %s112, %s114
      %p118 = scmp.eq.s32.totalorder %s36, 0
      %p119 = por %p117, %p118
      %p120 = scmp.ne.s32.totalorder %s112, %s114
      %p121 = scmp.eq.s32.totalorder %s41, 1
      %p122 = por %p120, %p121
      %p123 = scmp.ne.s32.totalorder %s114, %s115
      %p124 = scmp.eq.s32.totalorder %s41, 0
      %p125 = por %p123, %p124
      %p126 = scmp.ne.s32.totalorder %s114, %s115
      %p127 = scmp.eq.s32.totalorder %s42, 1
      %p128 = por %p126, %p127
      %p130 = scmp.ne.s32.totalorder %s115, %s129
      %p131 = scmp.eq.s32.totalorder %s42, 0
      %p132 = por %p130, %p131
      %s134 = sadd.s32 %s133, 1
      %p137 = scmp.eq.s32.totalorder %s36, 1
      %p138 = scmp.ne.s32.totalorder %s133, %s135
      %p139 = scmp.eq.s32.totalorder %s36, 0
      %p140 = por %p138, %p139
      %p141 = scmp.ne.s32.totalorder %s133, %s135
      %p142 = scmp.eq.s32.totalorder %s41, 1
      %p143 = por %p141, %p142
      %p144 = scmp.ne.s32.totalorder %s135, %s136
      %p145 = scmp.eq.s32.totalorder %s41, 0
      %p146 = por %p144, %p145
      %p147 = scmp.ne.s32.totalorder %s135, %s136
      %p148 = scmp.eq.s32.totalorder %s42, 1
      %p149 = por %p147, %p148
      %p151 = scmp.ne.s32.totalorder %s136, %s150
      %p152 = scmp.eq.s32.totalorder %s42, 0
      %p153 = por %p151, %p152
      %s155 = sadd.s32 %s154, 1
      %p158 = scmp.eq.s32.totalorder %s36, 1
      %p159 = scmp.ne.s32.totalorder %s154, %s156
      %p160 = scmp.eq.s32.totalorder %s36, 0
      %p161 = por %p159, %p160
      %p162 = scmp.ne.s32.totalorder %s154, %s156
      %p163 = scmp.eq.s32.totalorder %s41, 1
      %p164 = por %p162, %p163
      %p165 = scmp.ne.s32.totalorder %s156, %s157
      %p166 = scmp.eq.s32.totalorder %s41, 0
      %p167 = por %p165, %p166
      %p168 = scmp.ne.s32.totalorder %s156, %s157
      %p169 = scmp.eq.s32.totalorder %s42, 1
      %p170 = por %p168, %p169
      %p172 = scmp.ne.s32.totalorder %s157, %s171
      %p173 = scmp.eq.s32.totalorder %s42, 0
      %p174 = por %p172, %p173
      %s176 = sadd.s32 %s175, 1
      %p179 = scmp.eq.s32.totalorder %s36, 1
      %p180 = scmp.ne.s32.totalorder %s175, %s177
      %p181 = scmp.eq.s32.totalorder %s36, 0
      %p182 = por %p180, %p181
      %p183 = scmp.ne.s32.totalorder %s175, %s177
      %p184 = scmp.eq.s32.totalorder %s41, 1
      %p185 = por %p183, %p184
      %p186 = scmp.ne.s32.totalorder %s177, %s178
      %p187 = scmp.eq.s32.totalorder %s41, 0
      %p188 = por %p186, %p187
      %p189 = scmp.ne.s32.totalorder %s177, %s178
      %p190 = scmp.eq.s32.totalorder %s42, 1
      %p191 = por %p189, %p190
      %p193 = scmp.ne.s32.totalorder %s178, %s192
      %p194 = scmp.eq.s32.totalorder %s42, 0
      %p195 = por %p193, %p194
      %s197 = sadd.s32 %s196, 1
      %p200 = scmp.eq.s32.totalorder %s36, 1
      %p201 = scmp.ne.s32.totalorder %s196, %s198
      %p202 = scmp.eq.s32.totalorder %s36, 0
      %p203 = por %p201, %p202
      %p204 = scmp.ne.s32.totalorder %s196, %s198
      %p205 = scmp.eq.s32.totalorder %s41, 1
      %p206 = por %p204, %p205
      %p207 = scmp.ne.s32.totalorder %s198, %s199
      %p208 = scmp.eq.s32.totalorder %s41, 0
      %p209 = por %p207, %p208
      %p210 = scmp.ne.s32.totalorder %s198, %s199
      %p211 = scmp.eq.s32.totalorder %s42, 1
      %p212 = por %p210, %p211
      %p214 = scmp.ne.s32.totalorder %s199, %s213
      %p215 = scmp.eq.s32.totalorder %s42, 0
      %p216 = por %p214, %p215
      %s218 = sadd.s32 %s217, 1
      %p221 = scmp.eq.s32.totalorder %s36, 1
      %p222 = scmp.ne.s32.totalorder %s217, %s219
      %p223 = scmp.eq.s32.totalorder %s36, 0
      %p224 = por %p222, %p223
      %p225 = scmp.ne.s32.totalorder %s217, %s219
      %p226 = scmp.eq.s32.totalorder %s41, 1
      %p227 = por %p225, %p226
      %p228 = scmp.ne.s32.totalorder %s219, %s220
      %p229 = scmp.eq.s32.totalorder %s41, 0
      %p230 = por %p228, %p229
      %p231 = scmp.ne.s32.totalorder %s219, %s220
      %p232 = scmp.eq.s32.totalorder %s42, 1
      %p233 = por %p231, %p232
      %p235 = scmp.ne.s32.totalorder %s220, %s234
      %p236 = scmp.eq.s32.totalorder %s42, 0
      %p237 = por %p235, %p236
      %s239 = sadd.s32 %s238, 1
      %p242 = scmp.eq.s32.totalorder %s36, 1
      %p243 = scmp.ne.s32.totalorder %s238, %s240
      %p244 = scmp.eq.s32.totalorder %s36, 0
      %p245 = por %p243, %p244
      %p246 = scmp.ne.s32.totalorder %s238, %s240
      %p247 = scmp.eq.s32.totalorder %s41, 1
      %p248 = por %p246, %p247
      %p249 = scmp.ne.s32.totalorder %s240, %s241
      %p250 = scmp.eq.s32.totalorder %s41, 0
      %p251 = por %p249, %p250
      %p252 = scmp.ne.s32.totalorder %s240, %s241
      %p253 = scmp.eq.s32.totalorder %s42, 1
      %p254 = por %p252, %p253
      %p256 = scmp.ne.s32.totalorder %s241, %s255
      %p257 = scmp.eq.s32.totalorder %s42, 0
      %p258 = por %p256, %p257
      %s260 = sadd.s32 %s259, 1
      %p263 = scmp.eq.s32.totalorder %s36, 1
      %p264 = scmp.ne.s32.totalorder %s259, %s261
      %p265 = scmp.eq.s32.totalorder %s36, 0
      %p266 = por %p264, %p265
      %p267 = scmp.ne.s32.totalorder %s259, %s261
      %p268 = scmp.eq.s32.totalorder %s41, 1
      %p269 = por %p267, %p268
      %p270 = scmp.ne.s32.totalorder %s261, %s262
      %p271 = scmp.eq.s32.totalorder %s41, 0
      %p272 = por %p270, %p271
      %p273 = scmp.ne.s32.totalorder %s261, %s262
      %p274 = scmp.eq.s32.totalorder %s42, 1
      %p275 = por %p273, %p274
      %p277 = scmp.ne.s32.totalorder %s262, %s276
      %p278 = scmp.eq.s32.totalorder %s42, 0
      %p279 = por %p277, %p278
      %s281 = sadd.s32 %s280, 1
      %p284 = scmp.eq.s32.totalorder %s36, 1
      %p285 = scmp.ne.s32.totalorder %s280, %s282
      %p286 = scmp.eq.s32.totalorder %s36, 0
      %p287 = por %p285, %p286
      %p288 = scmp.ne.s32.totalorder %s280, %s282
      %p289 = scmp.eq.s32.totalorder %s41, 1
      %p290 = por %p288, %p289
      %p291 = scmp.ne.s32.totalorder %s282, %s283
      %p292 = scmp.eq.s32.totalorder %s41, 0
      %p293 = por %p291, %p292
      %p294 = scmp.ne.s32.totalorder %s282, %s283
      %p295 = scmp.eq.s32.totalorder %s42, 1
      %p296 = por %p294, %p295
      %p298 = scmp.ne.s32.totalorder %s283, %s297
      %p299 = scmp.eq.s32.totalorder %s42, 0
      %p300 = por %p298, %p299
      %s302 = sadd.s32 %s301, 1
      %p305 = scmp.eq.s32.totalorder %s36, 1
      %p306 = scmp.ne.s32.totalorder %s301, %s303
      %p307 = scmp.eq.s32.totalorder %s36, 0
      %p308 = por %p306, %p307
      %p309 = scmp.ne.s32.totalorder %s301, %s303
      %p310 = scmp.eq.s32.totalorder %s41, 1
      %p311 = por %p309, %p310
      %p312 = scmp.ne.s32.totalorder %s303, %s304
      %p313 = scmp.eq.s32.totalorder %s41, 0
      %p314 = por %p312, %p313
      %p315 = scmp.ne.s32.totalorder %s303, %s304
      %p316 = scmp.eq.s32.totalorder %s42, 1
      %p317 = por %p315, %p316
      %p319 = scmp.ne.s32.totalorder %s304, %s318
      %p320 = scmp.eq.s32.totalorder %s42, 0
      %p321 = por %p319, %p320
      %s323 = sadd.s32 %s322, 1
      %p326 = scmp.eq.s32.totalorder %s36, 1
      %p327 = scmp.ne.s32.totalorder %s322, %s324
      %p328 = scmp.eq.s32.totalorder %s36, 0
      %p329 = por %p327, %p328
      %p330 = scmp.ne.s32.totalorder %s322, %s324
      %p331 = scmp.eq.s32.totalorder %s41, 1
      %p332 = por %p330, %p331
      %p333 = scmp.ne.s32.totalorder %s324, %s325
      %p334 = scmp.eq.s32.totalorder %s41, 0
      %p335 = por %p333, %p334
      %p336 = scmp.ne.s32.totalorder %s324, %s325
      %p337 = scmp.eq.s32.totalorder %s42, 1
      %p338 = por %p336, %p337
      %p340 = scmp.ne.s32.totalorder %s325, %s339
      %p341 = scmp.eq.s32.totalorder %s42, 0
      %p342 = por %p340, %p341
      %s344 = sadd.s32 %s343, 1
      %p347 = scmp.eq.s32.totalorder %s36, 1
      %p348 = scmp.ne.s32.totalorder %s343, %s345
      %p349 = scmp.eq.s32.totalorder %s36, 0
      %p350 = por %p348, %p349
      %p351 = scmp.ne.s32.totalorder %s343, %s345
      %p352 = scmp.eq.s32.totalorder %s41, 1
      %p353 = por %p351, %p352
      %p354 = scmp.ne.s32.totalorder %s345, %s346
      %p355 = scmp.eq.s32.totalorder %s41, 0
      %p356 = por %p354, %p355
      %p357 = scmp.ne.s32.totalorder %s345, %s346
      %p358 = scmp.eq.s32.totalorder %s42, 1
      %p359 = por %p357, %p358
      %p361 = scmp.ne.s32.totalorder %s346, %s360
      %p362 = scmp.eq.s32.totalorder %s42, 0
      %p363 = por %p361, %p362
      %s364 = ssub.s32 %s36, %s43
      %p365 = scmp.eq.s32.totalorder %s364, 0
      %s367 = sadd.s32 %s366, 1
      %s368 = scalar_select %p365, %s366, %s367
      %p371 = pneg %p365
      %p372 = scmp.eq.s32.totalorder %s36, 1
      %p373 = por %p371, %p372
      %p374 = scmp.ne.s32.totalorder %s366, %s369
      %p375 = scmp.eq.s32.totalorder %s36, 0
      %p376 = por %p374, %p375
      %p377 = scmp.ne.s32.totalorder %s366, %s369
      %p378 = scmp.eq.s32.totalorder %s41, 1
      %p379 = por %p377, %p378
      %p380 = scmp.ne.s32.totalorder %s369, %s370
      %p381 = scmp.eq.s32.totalorder %s41, 0
      %p382 = por %p380, %p381
      %p383 = scmp.ne.s32.totalorder %s369, %s370
      %p384 = scmp.eq.s32.totalorder %s42, 1
      %p385 = por %p383, %p384
      %p387 = scmp.ne.s32.totalorder %s370, %s386
      %p388 = scmp.eq.s32.totalorder %s42, 0
      %p389 = por %p387, %p388
      %s390 = ssub.s32 %s36, %s43
      %p391 = scmp.eq.s32.totalorder %s390, 0
      %s393 = sadd.s32 %s392, 1
      %s394 = scalar_select %p391, %s392, %s393
      %p397 = pneg %p391
      %p398 = scmp.eq.s32.totalorder %s36, 1
      %p399 = por %p397, %p398
      %p400 = scmp.ne.s32.totalorder %s392, %s395
      %p401 = scmp.eq.s32.totalorder %s36, 0
      %p402 = por %p400, %p401
      %p403 = scmp.ne.s32.totalorder %s392, %s395
      %p404 = scmp.eq.s32.totalorder %s41, 1
      %p405 = por %p403, %p404
      %p406 = scmp.ne.s32.totalorder %s395, %s396
      %p407 = scmp.eq.s32.totalorder %s41, 0
      %p408 = por %p406, %p407
      %p409 = scmp.ne.s32.totalorder %s395, %s396
      %p410 = scmp.eq.s32.totalorder %s42, 1
      %p411 = por %p409, %p410
      %p413 = scmp.ne.s32.totalorder %s396, %s412
      %p414 = scmp.eq.s32.totalorder %s42, 0
      %p415 = por %p413, %p414
      %p416 = scmp.le.s32.totalorder 1, %s36
      %p417 = scmp.lt.s32.totalorder %s36, 3
      %p418 = pnand %p416, %p417
      %p419 = pneg %p418
      // Predicated region
      $region9: #{tpu_custom_call.1} parent=5 // pred_check
        _
      $region10: #{tpu_custom_call.1} parent=5 // pred_check_branch
        %421 = sbr.rel (%p418) target = $region12
      $region11: #{tpu_custom_call.1} parent=5 // pred_region
        %s422 = ssub.s32 %s36, 1
        // Predicated region
        $region13: #{tpu_custom_call.1} parent=11 // pred_check
          %p423 = pneg %p83
        $region14: #{tpu_custom_call.1} parent=11 // pred_check_branch
          %425 = sbr.rel (%p423) target = $region16
        $region15: #{tpu_custom_call.1} parent=11 // pred_region
          %s427 = ssub.s32 2048, 2048
          %428 = vsyncadd [#allocation6], %s427
          %s429 = sshll.u32 [#allocation5], 4
          %s430 = int_to_ptr.vmem [resolvable:$true] %s429
          %435 = dma.hbm_to_vmem [thread:$0]  %s1, 2048, %s430, [#allocation6], 128, 128, 8
        $region16: #{tpu_custom_call.1} parent=11 // pred_fallthru
          _
        // Predicated region
        $region17: #{tpu_custom_call.1} parent=11 // pred_check
          %p436 = pneg %p104
        $region18: #{tpu_custom_call.1} parent=11 // pred_check_branch
          %438 = sbr.rel (%p436) target = $region20
        $region19: #{tpu_custom_call.1} parent=11 // pred_region
          %s440 = ssub.s32 2048, 2048
          %441 = vsyncadd [#allocation6], %s440
          %s442 = sshll.u32 [#allocation7], 4
          %s443 = int_to_ptr.vmem [resolvable:$true] %s442
          %448 = dma.hbm_to_vmem [thread:$0]  %s2, 2048, %s443, [#allocation6], 64, 64, 4
        $region20: #{tpu_custom_call.1} parent=11 // pred_fallthru
          _
        // Predicated region
        $region21: #{tpu_custom_call.1} parent=11 // pred_check
          %p449 = pneg %p125
        $region22: #{tpu_custom_call.1} parent=11 // pred_check_branch
          %451 = sbr.rel (%p449) target = $region24
        $region23: #{tpu_custom_call.1} parent=11 // pred_region
          _
        $region24: #{tpu_custom_call.1} parent=11 // pred_fallthru
          _
        // Predicated region
        $region25: #{tpu_custom_call.1} parent=11 // pred_check
          %p452 = pneg %p146
        $region26: #{tpu_custom_call.1} parent=11 // pred_check_branch
          %454 = sbr.rel (%p452) target = $region28
        $region27: #{tpu_custom_call.1} parent=11 // pred_region
          %s456 = ssub.s32 4096, 4096
          %457 = vsyncadd [#allocation9], %s456
          %s458 = sshll.u32 [#allocation8], 4
          %s459 = int_to_ptr.vmem [resolvable:$true] %s458
          %464 = dma.hbm_to_vmem [thread:$0]  %s4, 4096, %s459, [#allocation9], 128, 128, 8
        $region28: #{tpu_custom_call.1} parent=11 // pred_fallthru
          _
        // Predicated region
        $region29: #{tpu_custom_call.1} parent=11 // pred_check
          %p465 = pneg %p167
        $region30: #{tpu_custom_call.1} parent=11 // pred_check_branch
          %467 = sbr.rel (%p465) target = $region32
        $region31: #{tpu_custom_call.1} parent=11 // pred_region
          %s469 = ssub.s32 4096, 4096
          %470 = vsyncadd [#allocation9], %s469
          %s471 = sshll.u32 [#allocation10], 4
          %s472 = int_to_ptr.vmem [resolvable:$true] %s471
          %477 = dma.hbm_to_vmem [thread:$0]  %s5, 4096, %s472, [#allocation9], 128, 128, 8
        $region32: #{tpu_custom_call.1} parent=11 // pred_fallthru
          _
        // Predicated region
        $region33: #{tpu_custom_call.1} parent=11 // pred_check
          %p478 = pneg %p188
        $region34: #{tpu_custom_call.1} parent=11 // pred_check_branch
          %480 = sbr.rel (%p478) target = $region36
        $region35: #{tpu_custom_call.1} parent=11 // pred_region
          _
        $region36: #{tpu_custom_call.1} parent=11 // pred_fallthru
          _
        // Predicated region
        $region37: #{tpu_custom_call.1} parent=11 // pred_check
          %p481 = pneg %p209
        $region38: #{tpu_custom_call.1} parent=11 // pred_check_branch
          %483 = sbr.rel (%p481) target = $region40
        $region39: #{tpu_custom_call.1} parent=11 // pred_region
          _
        $region40: #{tpu_custom_call.1} parent=11 // pred_fallthru
          _
        // Predicated region
        $region41: #{tpu_custom_call.1} parent=11 // pred_check
          %p484 = pneg %p230
        $region42: #{tpu_custom_call.1} parent=11 // pred_check_branch
          %486 = sbr.rel (%p484) target = $region44
        $region43: #{tpu_custom_call.1} parent=11 // pred_region
          %s488 = ssub.s32 2048, 2048
          %489 = vsyncadd [#allocation12], %s488
          %s490 = sshll.u32 [#allocation11], 4
          %s491 = int_to_ptr.vmem [resolvable:$true] %s490
          %496 = dma.hbm_to_vmem [thread:$0]  %s8, 2048, %s491, [#allocation12], 128, 128, 8
        $region44: #{tpu_custom_call.1} parent=11 // pred_fallthru
          _
        // Predicated region
        $region45: #{tpu_custom_call.1} parent=11 // pred_check
          %p497 = pneg %p251
        $region46: #{tpu_custom_call.1} parent=11 // pred_check_branch
          %499 = sbr.rel (%p497) target = $region48
        $region47: #{tpu_custom_call.1} parent=11 // pred_region
          %s501 = ssub.s32 2048, 2048
          %502 = vsyncadd [#allocation12], %s501
          %s503 = sshll.u32 [#allocation13], 4
          %s504 = int_to_ptr.vmem [resolvable:$true] %s503
          %509 = dma.hbm_to_vmem [thread:$0]  %s9, 2048, %s504, [#allocation12], 64, 64, 4
        $region48: #{tpu_custom_call.1} parent=11 // pred_fallthru
          _
        // Predicated region
        $region49: #{tpu_custom_call.1} parent=11 // pred_check
          %p510 = pneg %p272
        $region50: #{tpu_custom_call.1} parent=11 // pred_check_branch
          %512 = sbr.rel (%p510) target = $region52
        $region51: #{tpu_custom_call.1} parent=11 // pred_region
          _
        $region52: #{tpu_custom_call.1} parent=11 // pred_fallthru
          _
        // Predicated region
        $region53: #{tpu_custom_call.1} parent=11 // pred_check
          %p513 = pneg %p293
        $region54: #{tpu_custom_call.1} parent=11 // pred_check_branch
          %515 = sbr.rel (%p513) target = $region56
        $region55: #{tpu_custom_call.1} parent=11 // pred_region
          %s517 = ssub.s32 4096, 4096
          %518 = vsyncadd [#allocation15], %s517
          %s519 = sshll.u32 [#allocation14], 4
          %s520 = int_to_ptr.vmem [resolvable:$true] %s519
          %525 = dma.hbm_to_vmem [thread:$0]  %s11, 4096, %s520, [#allocation15], 128, 128, 8
        $region56: #{tpu_custom_call.1} parent=11 // pred_fallthru
          _
        // Predicated region
        $region57: #{tpu_custom_call.1} parent=11 // pred_check
          %p526 = pneg %p314
        $region58: #{tpu_custom_call.1} parent=11 // pred_check_branch
          %528 = sbr.rel (%p526) target = $region60
        $region59: #{tpu_custom_call.1} parent=11 // pred_region
          %s530 = ssub.s32 4096, 4096
          %531 = vsyncadd [#allocation15], %s530
          %s532 = sshll.u32 [#allocation16], 4
          %s533 = int_to_ptr.vmem [resolvable:$true] %s532
          %538 = dma.hbm_to_vmem [thread:$0]  %s12, 4096, %s533, [#allocation15], 128, 128, 8
        $region60: #{tpu_custom_call.1} parent=11 // pred_fallthru
          _
        // Predicated region
        $region61: #{tpu_custom_call.1} parent=11 // pred_check
          %p539 = pneg %p335
        $region62: #{tpu_custom_call.1} parent=11 // pred_check_branch
          %541 = sbr.rel (%p539) target = $region64
        $region63: #{tpu_custom_call.1} parent=11 // pred_region
          _
        $region64: #{tpu_custom_call.1} parent=11 // pred_fallthru
          _
        // Predicated region
        $region65: #{tpu_custom_call.1} parent=11 // pred_check
          %p542 = pneg %p356
        $region66: #{tpu_custom_call.1} parent=11 // pred_check_branch
          %544 = sbr.rel (%p542) target = $region68
        $region67: #{tpu_custom_call.1} parent=11 // pred_region
          _
        $region68: #{tpu_custom_call.1} parent=11 // pred_fallthru
          _
      $region12: #{tpu_custom_call.1} parent=5 // pred_fallthru
        _
      %p545 = scmp.lt.s32.totalorder %s36, 2
      // Predicated region
      $region69: #{tpu_custom_call.1} parent=5 // pred_check
        %p546 = pneg %p545
      $region70: #{tpu_custom_call.1} parent=5 // pred_check_branch
        %548 = sbr.rel (%p546) target = $region72
      $region71: #{tpu_custom_call.1} parent=5 // pred_region
        // Predicated region
        $region73: #{tpu_custom_call.1} parent=71 // pred_check
          %p549 = pneg %p56
        $region74: #{tpu_custom_call.1} parent=71 // pred_check_branch
          %551 = sbr.rel (%p549) target = $region76
        $region75: #{tpu_custom_call.1} parent=71 // pred_region
          %s552 = sand.u32 %s46, 1
          %s553 = scalar_lea.sflag [#allocation3], %s552
          %s554 = sand.u32 %s46, 1
          %s555 = smul.addr %s554, 128
          %s556 = scalar_lea.vmem [#allocation2], %s555
          %s557 = smul.u32 16, %s36
          %s559 = ssub.s32 2048, 2048
          %560 = vsyncadd %s553, %s559
          %s561 = smul.addr %s557, 128
          %s562 = scalar_lea.hbm %s0, %s561
          %s563 = sshll.u32 %s556, 4
          %s564 = int_to_ptr.vmem [resolvable:$true] %s563
          %569 = dma.hbm_to_vmem [thread:$0]  %s562, 2048, %s564, %s553, 128, 128, 8
        $region76: #{tpu_custom_call.1} parent=71 // pred_fallthru
          _
      $region72: #{tpu_custom_call.1} parent=5 // pred_fallthru
        _
      %p570 = scmp.le.s32.totalorder 1, %s36
      %p571 = scmp.lt.s32.totalorder %s36, 3
      %p572 = pnand %p570, %p571
      %p573 = pneg %p572
      // Predicated region
      $region77: #{tpu_custom_call.1} parent=5 // pred_check
        _
      $region78: #{tpu_custom_call.1} parent=5 // pred_check_branch
        %575 = sbr.rel (%p572) target = $region80
      $region79: #{tpu_custom_call.1} parent=5 // pred_region
        %s576 = ssub.s32 %s36, 1
        %s577 = sand.u32 %s49, 1
        %s578 = scalar_lea.sflag [#allocation3], %s577
        %s579 = sand.u32 %s49, 1
        %s580 = smul.addr %s579, 128
        %s581 = scalar_lea.vmem [#allocation2], %s580
        // Predicated region
        $region81: #{tpu_custom_call.1} parent=79 // pred_check
          %p582 = pneg %p62
        $region82: #{tpu_custom_call.1} parent=79 // pred_check_branch
          %584 = sbr.rel (%p582) target = $region84
        $region83: #{tpu_custom_call.1} parent=79 // pred_region
          %585 = dma.done %s578, 2048
        $region84: #{tpu_custom_call.1} parent=79 // pred_fallthru
          _
        // Predicated region
        $region85: #{tpu_custom_call.1} parent=79 // pred_check
          %p586 = pneg %p83
        $region86: #{tpu_custom_call.1} parent=79 // pred_check_branch
          %588 = sbr.rel (%p586) target = $region88
        $region87: #{tpu_custom_call.1} parent=79 // pred_region
          %589 = dma.done [#allocation6], 2048
        $region88: #{tpu_custom_call.1} parent=79 // pred_fallthru
          _
        // Predicated region
        $region89: #{tpu_custom_call.1} parent=79 // pred_check
          %p590 = pneg %p104
        $region90: #{tpu_custom_call.1} parent=79 // pred_check_branch
          %592 = sbr.rel (%p590) target = $region92
        $region91: #{tpu_custom_call.1} parent=79 // pred_region
          %593 = dma.done [#allocation6], 2048
        $region92: #{tpu_custom_call.1} parent=79 // pred_fallthru
          _
        // Predicated region
        $region93: #{tpu_custom_call.1} parent=79 // pred_check
          %p594 = pneg %p146
        $region94: #{tpu_custom_call.1} parent=79 // pred_check_branch
          %596 = sbr.rel (%p594) target = $region96
        $region95: #{tpu_custom_call.1} parent=79 // pred_region
          %597 = dma.done [#allocation9], 4096
        $region96: #{tpu_custom_call.1} parent=79 // pred_fallthru
          _
        // Predicated region
        $region97: #{tpu_custom_call.1} parent=79 // pred_check
          %p598 = pneg %p167
        $region98: #{tpu_custom_call.1} parent=79 // pred_check_branch
          %600 = sbr.rel (%p598) target = $region100
        $region99: #{tpu_custom_call.1} parent=79 // pred_region
          %601 = dma.done [#allocation9], 4096
        $region100: #{tpu_custom_call.1} parent=79 // pred_fallthru
          _
        // Predicated region
        $region101: #{tpu_custom_call.1} parent=79 // pred_check
          %p602 = pneg %p230
        $region102: #{tpu_custom_call.1} parent=79 // pred_check_branch
          %604 = sbr.rel (%p602) target = $region104
        $region103: #{tpu_custom_call.1} parent=79 // pred_region
          %605 = dma.done [#allocation12], 2048
        $region104: #{tpu_custom_call.1} parent=79 // pred_fallthru
          _
        // Predicated region
        $region105: #{tpu_custom_call.1} parent=79 // pred_check
          %p606 = pneg %p251
        $region106: #{tpu_custom_call.1} parent=79 // pred_check_branch
          %608 = sbr.rel (%p606) target = $region108
        $region107: #{tpu_custom_call.1} parent=79 // pred_region
          %609 = dma.done [#allocation12], 2048
        $region108: #{tpu_custom_call.1} parent=79 // pred_fallthru
          _
        // Predicated region
        $region109: #{tpu_custom_call.1} parent=79 // pred_check
          %p610 = pneg %p293
        $region110: #{tpu_custom_call.1} parent=79 // pred_check_branch
          %612 = sbr.rel (%p610) target = $region112
        $region111: #{tpu_custom_call.1} parent=79 // pred_region
          %613 = dma.done [#allocation15], 4096
        $region112: #{tpu_custom_call.1} parent=79 // pred_fallthru
          _
        // Predicated region
        $region113: #{tpu_custom_call.1} parent=79 // pred_check
          %p614 = pneg %p314
        $region114: #{tpu_custom_call.1} parent=79 // pred_check_branch
          %616 = sbr.rel (%p614) target = $region116
        $region115: #{tpu_custom_call.1} parent=79 // pred_region
          %617 = dma.done [#allocation15], 4096
        $region116: #{tpu_custom_call.1} parent=79 // pred_fallthru
          _
        %s618 = sand.u32 %s49, 1
        %s619 = scalar_lea.sflag [#allocation3], %s618
        %s620 = sand.u32 %s49, 1
        %s621 = smul.addr %s620, 128
        %s622 = scalar_lea.vmem [#allocation2], %s621
        %p623 = pneg %p62
        %p624 = pneg %p59
        %p625 = pneg %p83
        %p626 = pneg %p80
        %p627 = pneg %p104
        %p628 = pneg %p101
        %p629 = pneg %p125
        %p630 = pneg %p122
        %p631 = pneg %p146
        %p632 = pneg %p143
        %p633 = pneg %p167
        %p634 = pneg %p164
        %p635 = pneg %p188
        %p636 = pneg %p185
        %p637 = pneg %p209
        %p638 = pneg %p206
        %p639 = pneg %p230
        %p640 = pneg %p227
        %p641 = pneg %p251
        %p642 = pneg %p248
        %p643 = pneg %p272
        %p644 = pneg %p269
        %p645 = pneg %p293
        %p646 = pneg %p290
        %p647 = pneg %p314
        %p648 = pneg %p311
        %p649 = pneg %p335
        %p650 = pneg %p332
        %p651 = pneg %p356
        %p652 = pneg %p353
        %p653 = pneg %p382
        %p654 = pneg %p379
        %s655 = sand.u32 %s369, 1
        %s656 = scalar_lea.sflag [#allocation4], %s655
        %s657 = sand.u32 %s369, 1
        %s658 = smul.addr %s657, 128
        %s659 = scalar_lea.vmem [#allocation17], %s658
        %p660 = pneg %p408
        %p661 = pneg %p405
        %s662 = sand.u32 %s395, 1
        %s663 = scalar_lea.sflag [#allocation19], %s662
        %s664 = sand.u32 %s395, 1
        %s665 = smul.addr %s664, 256
        %s666 = scalar_lea.vmem [#allocation18], %s665
        %s667 = smul.u32 16, %s41
        %s668 = smul.u32 16, %s41
        %s669 = smul.u32 16, %s41
        %v671 = vld [vmem:[#allocation5] sm:$0xff]
        %v672 = vld [vmem:[#allocation5 + $0x8] sm:$0xff]
        %v673 = vld [vmem:[#allocation5 + $0x10] sm:$0xff]
        %v674 = vld [vmem:[#allocation5 + $0x18] sm:$0xff]
        %v675 = vld [vmem:[#allocation5 + $0x20] sm:$0xff]
        %v676 = vld [vmem:[#allocation5 + $0x28] sm:$0xff]
        %v677 = vld [vmem:[#allocation5 + $0x30] sm:$0xff]
        %v678 = vld [vmem:[#allocation5 + $0x38] sm:$0xff]
        %v679 = vld [vmem:[#allocation5 + $0x40] sm:$0xff]
        %v680 = vld [vmem:[#allocation5 + $0x48] sm:$0xff]
        %v681 = vld [vmem:[#allocation5 + $0x50] sm:$0xff]
        %v682 = vld [vmem:[#allocation5 + $0x58] sm:$0xff]
        %v683 = vld [vmem:[#allocation5 + $0x60] sm:$0xff]
        %v684 = vld [vmem:[#allocation5 + $0x68] sm:$0xff]
        %v685 = vld [vmem:[#allocation5 + $0x70] sm:$0xff]
        %v686 = vld [vmem:[#allocation5 + $0x78] sm:$0xff]
        %v687 = vld [vmem:[#allocation7] sm:$0xf]
        %v688 = vld [vmem:[#allocation7 + $0x4] sm:$0xf]
        %v689 = vld [vmem:[#allocation7 + $0x8] sm:$0xf]
        %v690 = vld [vmem:[#allocation7 + $0xc] sm:$0xf]
        %v691 = vld [vmem:[#allocation7 + $0x10] sm:$0xf]
        %v692 = vld [vmem:[#allocation7 + $0x14] sm:$0xf]
        %v693 = vld [vmem:[#allocation7 + $0x18] sm:$0xf]
        %v694 = vld [vmem:[#allocation7 + $0x1c] sm:$0xf]
        %v695 = vld [vmem:[#allocation7 + $0x20] sm:$0xf]
        %v696 = vld [vmem:[#allocation7 + $0x24] sm:$0xf]
        %v697 = vld [vmem:[#allocation7 + $0x28] sm:$0xf]
        %v698 = vld [vmem:[#allocation7 + $0x2c] sm:$0xf]
        %v699 = vld [vmem:[#allocation7 + $0x30] sm:$0xf]
        %v700 = vld [vmem:[#allocation7 + $0x34] sm:$0xf]
        %v701 = vld [vmem:[#allocation7 + $0x38] sm:$0xf]
        %v702 = vld [vmem:[#allocation7 + $0x3c] sm:$0xf]
        %v703 = vld [vmem:[#allocation7 + $0x40] sm:$0xf]
        %v704 = vld [vmem:[#allocation7 + $0x44] sm:$0xf]
        %v705 = vld [vmem:[#allocation7 + $0x48] sm:$0xf]
        %v706 = vld [vmem:[#allocation7 + $0x4c] sm:$0xf]
        %v707 = vld [vmem:[#allocation7 + $0x50] sm:$0xf]
        %v708 = vld [vmem:[#allocation7 + $0x54] sm:$0xf]
        %v709 = vld [vmem:[#allocation7 + $0x58] sm:$0xf]
        %v710 = vld [vmem:[#allocation7 + $0x5c] sm:$0xf]
        %v711 = vld [vmem:[#allocation7 + $0x60] sm:$0xf]
        %v712 = vld [vmem:[#allocation7 + $0x64] sm:$0xf]
        %v713 = vld [vmem:[#allocation7 + $0x68] sm:$0xf]
        %v714 = vld [vmem:[#allocation7 + $0x6c] sm:$0xf]
        %v715 = vld [vmem:[#allocation7 + $0x70] sm:$0xf]
        %v716 = vld [vmem:[#allocation7 + $0x74] sm:$0xf]
        %v717 = vld [vmem:[#allocation7 + $0x78] sm:$0xf]
        %v718 = vld [vmem:[#allocation7 + $0x7c] sm:$0xf]
        %v719 = vld [vmem:[%s3] sm:$0x3]
        %v720 = vld [vmem:[#allocation8] sm:$0xff]
        %v721 = vld [vmem:[#allocation8 + $0x8] sm:$0xff]
        %v722 = vld [vmem:[#allocation8 + $0x10] sm:$0xff]
        %v723 = vld [vmem:[#allocation8 + $0x18] sm:$0xff]
        %v724 = vld [vmem:[#allocation8 + $0x20] sm:$0xff]
        %v725 = vld [vmem:[#allocation8 + $0x28] sm:$0xff]
        %v726 = vld [vmem:[#allocation8 + $0x30] sm:$0xff]
        %v727 = vld [vmem:[#allocation8 + $0x38] sm:$0xff]
        %v728 = vld [vmem:[#allocation8 + $0x40] sm:$0xff]
        %v729 = vld [vmem:[#allocation8 + $0x48] sm:$0xff]
        %v730 = vld [vmem:[#allocation8 + $0x50] sm:$0xff]
        %v731 = vld [vmem:[#allocation8 + $0x58] sm:$0xff]
        %v732 = vld [vmem:[#allocation8 + $0x60] sm:$0xff]
        %v733 = vld [vmem:[#allocation8 + $0x68] sm:$0xff]
        %v734 = vld [vmem:[#allocation8 + $0x70] sm:$0xff]
        %v735 = vld [vmem:[#allocation8 + $0x78] sm:$0xff]
        %v736 = vld [vmem:[#allocation8 + $0x80] sm:$0xff]
        %v737 = vld [vmem:[#allocation8 + $0x88] sm:$0xff]
        %v738 = vld [vmem:[#allocation8 + $0x90] sm:$0xff]
        %v739 = vld [vmem:[#allocation8 + $0x98] sm:$0xff]
        %v740 = vld [vmem:[#allocation8 + $0xa0] sm:$0xff]
        %v741 = vld [vmem:[#allocation8 + $0xa8] sm:$0xff]
        %v742 = vld [vmem:[#allocation8 + $0xb0] sm:$0xff]
        %v743 = vld [vmem:[#allocation8 + $0xb8] sm:$0xff]
        %v744 = vld [vmem:[#allocation8 + $0xc0] sm:$0xff]
        %v745 = vld [vmem:[#allocation8 + $0xc8] sm:$0xff]
        %v746 = vld [vmem:[#allocation8 + $0xd0] sm:$0xff]
        %v747 = vld [vmem:[#allocation8 + $0xd8] sm:$0xff]
        %v748 = vld [vmem:[#allocation8 + $0xe0] sm:$0xff]
        %v749 = vld [vmem:[#allocation8 + $0xe8] sm:$0xff]
        %v750 = vld [vmem:[#allocation8 + $0xf0] sm:$0xff]
        %v751 = vld [vmem:[#allocation8 + $0xf8] sm:$0xff]
        %v752 = vld [vmem:[#allocation10] sm:$0xff]
        %v753 = vld [vmem:[#allocation10 + $0x8] sm:$0xff]
        %v754 = vld [vmem:[#allocation10 + $0x10] sm:$0xff]
        %v755 = vld [vmem:[#allocation10 + $0x18] sm:$0xff]
        %v756 = vld [vmem:[#allocation10 + $0x20] sm:$0xff]
        %v757 = vld [vmem:[#allocation10 + $0x28] sm:$0xff]
        %v758 = vld [vmem:[#allocation10 + $0x30] sm:$0xff]
        %v759 = vld [vmem:[#allocation10 + $0x38] sm:$0xff]
        %v760 = vld [vmem:[#allocation10 + $0x40] sm:$0xff]
        %v761 = vld [vmem:[#allocation10 + $0x48] sm:$0xff]
        %v762 = vld [vmem:[#allocation10 + $0x50] sm:$0xff]
        %v763 = vld [vmem:[#allocation10 + $0x58] sm:$0xff]
        %v764 = vld [vmem:[#allocation10 + $0x60] sm:$0xff]
        %v765 = vld [vmem:[#allocation10 + $0x68] sm:$0xff]
        %v766 = vld [vmem:[#allocation10 + $0x70] sm:$0xff]
        %v767 = vld [vmem:[#allocation10 + $0x78] sm:$0xff]
        %v768 = vld [vmem:[#allocation10 + $0x80] sm:$0xff]
        %v769 = vld [vmem:[#allocation10 + $0x88] sm:$0xff]
        %v770 = vld [vmem:[#allocation10 + $0x90] sm:$0xff]
        %v771 = vld [vmem:[#allocation10 + $0x98] sm:$0xff]
        %v772 = vld [vmem:[#allocation10 + $0xa0] sm:$0xff]
        %v773 = vld [vmem:[#allocation10 + $0xa8] sm:$0xff]
        %v774 = vld [vmem:[#allocation10 + $0xb0] sm:$0xff]
        %v775 = vld [vmem:[#allocation10 + $0xb8] sm:$0xff]
        %v776 = vld [vmem:[#allocation10 + $0xc0] sm:$0xff]
        %v777 = vld [vmem:[#allocation10 + $0xc8] sm:$0xff]
        %v778 = vld [vmem:[#allocation10 + $0xd0] sm:$0xff]
        %v779 = vld [vmem:[#allocation10 + $0xd8] sm:$0xff]
        %v780 = vld [vmem:[#allocation10 + $0xe0] sm:$0xff]
        %v781 = vld [vmem:[#allocation10 + $0xe8] sm:$0xff]
        %v782 = vld [vmem:[#allocation10 + $0xf0] sm:$0xff]
        %v783 = vld [vmem:[#allocation10 + $0xf8] sm:$0xff]
        %v784 = vld [vmem:[%s6] sm:$0x3]
        %v785 = vld [vmem:[%s7] sm:$0x3]
        %v786 = vld [vmem:[#allocation11] sm:$0xff]
        %v787 = vld [vmem:[#allocation11 + $0x8] sm:$0xff]
        %v788 = vld [vmem:[#allocation11 + $0x10] sm:$0xff]
        %v789 = vld [vmem:[#allocation11 + $0x18] sm:$0xff]
        %v790 = vld [vmem:[#allocation11 + $0x20] sm:$0xff]
        %v791 = vld [vmem:[#allocation11 + $0x28] sm:$0xff]
        %v792 = vld [vmem:[#allocation11 + $0x30] sm:$0xff]
        %v793 = vld [vmem:[#allocation11 + $0x38] sm:$0xff]
        %v794 = vld [vmem:[#allocation11 + $0x40] sm:$0xff]
        %v795 = vld [vmem:[#allocation11 + $0x48] sm:$0xff]
        %v796 = vld [vmem:[#allocation11 + $0x50] sm:$0xff]
        %v797 = vld [vmem:[#allocation11 + $0x58] sm:$0xff]
        %v798 = vld [vmem:[#allocation11 + $0x60] sm:$0xff]
        %v799 = vld [vmem:[#allocation11 + $0x68] sm:$0xff]
        %v800 = vld [vmem:[#allocation11 + $0x70] sm:$0xff]
        %v801 = vld [vmem:[#allocation11 + $0x78] sm:$0xff]
        %v802 = vld [vmem:[#allocation13] sm:$0xf]
        %v803 = vld [vmem:[#allocation13 + $0x4] sm:$0xf]
        %v804 = vld [vmem:[#allocation13 + $0x8] sm:$0xf]
        %v805 = vld [vmem:[#allocation13 + $0xc] sm:$0xf]
        %v806 = vld [vmem:[#allocation13 + $0x10] sm:$0xf]
        %v807 = vld [vmem:[#allocation13 + $0x14] sm:$0xf]
        %v808 = vld [vmem:[#allocation13 + $0x18] sm:$0xf]
        %v809 = vld [vmem:[#allocation13 + $0x1c] sm:$0xf]
        %v810 = vld [vmem:[#allocation13 + $0x20] sm:$0xf]
        %v811 = vld [vmem:[#allocation13 + $0x24] sm:$0xf]
        %v812 = vld [vmem:[#allocation13 + $0x28] sm:$0xf]
        %v813 = vld [vmem:[#allocation13 + $0x2c] sm:$0xf]
        %v814 = vld [vmem:[#allocation13 + $0x30] sm:$0xf]
        %v815 = vld [vmem:[#allocation13 + $0x34] sm:$0xf]
        %v816 = vld [vmem:[#allocation13 + $0x38] sm:$0xf]
        %v817 = vld [vmem:[#allocation13 + $0x3c] sm:$0xf]
        %v818 = vld [vmem:[#allocation13 + $0x40] sm:$0xf]
        %v819 = vld [vmem:[#allocation13 + $0x44] sm:$0xf]
        %v820 = vld [vmem:[#allocation13 + $0x48] sm:$0xf]
        %v821 = vld [vmem:[#allocation13 + $0x4c] sm:$0xf]
        %v822 = vld [vmem:[#allocation13 + $0x50] sm:$0xf]
        %v823 = vld [vmem:[#allocation13 + $0x54] sm:$0xf]
        %v824 = vld [vmem:[#allocation13 + $0x58] sm:$0xf]
        %v825 = vld [vmem:[#allocation13 + $0x5c] sm:$0xf]
        %v826 = vld [vmem:[#allocation13 + $0x60] sm:$0xf]
        %v827 = vld [vmem:[#allocation13 + $0x64] sm:$0xf]
        %v828 = vld [vmem:[#allocation13 + $0x68] sm:$0xf]
        %v829 = vld [vmem:[#allocation13 + $0x6c] sm:$0xf]
        %v830 = vld [vmem:[#allocation13 + $0x70] sm:$0xf]
        %v831 = vld [vmem:[#allocation13 + $0x74] sm:$0xf]
        %v832 = vld [vmem:[#allocation13 + $0x78] sm:$0xf]
        %v833 = vld [vmem:[#allocation13 + $0x7c] sm:$0xf]
        %v834 = vld [vmem:[%s10] sm:$0x3]
        %v835 = vld [vmem:[#allocation14] sm:$0xff]
        %v836 = vld [vmem:[#allocation14 + $0x8] sm:$0xff]
        %v837 = vld [vmem:[#allocation14 + $0x10] sm:$0xff]
        %v838 = vld [vmem:[#allocation14 + $0x18] sm:$0xff]
        %v839 = vld [vmem:[#allocation14 + $0x20] sm:$0xff]
        %v840 = vld [vmem:[#allocation14 + $0x28] sm:$0xff]
        %v841 = vld [vmem:[#allocation14 + $0x30] sm:$0xff]
        %v842 = vld [vmem:[#allocation14 + $0x38] sm:$0xff]
        %v843 = vld [vmem:[#allocation14 + $0x40] sm:$0xff]
        %v844 = vld [vmem:[#allocation14 + $0x48] sm:$0xff]
        %v845 = vld [vmem:[#allocation14 + $0x50] sm:$0xff]
        %v846 = vld [vmem:[#allocation14 + $0x58] sm:$0xff]
        %v847 = vld [vmem:[#allocation14 + $0x60] sm:$0xff]
        %v848 = vld [vmem:[#allocation14 + $0x68] sm:$0xff]
        %v849 = vld [vmem:[#allocation14 + $0x70] sm:$0xff]
        %v850 = vld [vmem:[#allocation14 + $0x78] sm:$0xff]
        %v851 = vld [vmem:[#allocation14 + $0x80] sm:$0xff]
        %v852 = vld [vmem:[#allocation14 + $0x88] sm:$0xff]
        %v853 = vld [vmem:[#allocation14 + $0x90] sm:$0xff]
        %v854 = vld [vmem:[#allocation14 + $0x98] sm:$0xff]
        %v855 = vld [vmem:[#allocation14 + $0xa0] sm:$0xff]
        %v856 = vld [vmem:[#allocation14 + $0xa8] sm:$0xff]
        %v857 = vld [vmem:[#allocation14 + $0xb0] sm:$0xff]
        %v858 = vld [vmem:[#allocation14 + $0xb8] sm:$0xff]
        %v859 = vld [vmem:[#allocation14 + $0xc0] sm:$0xff]
        %v860 = vld [vmem:[#allocation14 + $0xc8] sm:$0xff]
        %v861 = vld [vmem:[#allocation14 + $0xd0] sm:$0xff]
        %v862 = vld [vmem:[#allocation14 + $0xd8] sm:$0xff]
        %v863 = vld [vmem:[#allocation14 + $0xe0] sm:$0xff]
        %v864 = vld [vmem:[#allocation14 + $0xe8] sm:$0xff]
        %v865 = vld [vmem:[#allocation14 + $0xf0] sm:$0xff]
        %v866 = vld [vmem:[#allocation14 + $0xf8] sm:$0xff]
        %v867 = vld [vmem:[#allocation16] sm:$0xff]
        %v868 = vld [vmem:[#allocation16 + $0x8] sm:$0xff]
        %v869 = vld [vmem:[#allocation16 + $0x10] sm:$0xff]
        %v870 = vld [vmem:[#allocation16 + $0x18] sm:$0xff]
        %v871 = vld [vmem:[#allocation16 + $0x20] sm:$0xff]
        %v872 = vld [vmem:[#allocation16 + $0x28] sm:$0xff]
        %v873 = vld [vmem:[#allocation16 + $0x30] sm:$0xff]
        %v874 = vld [vmem:[#allocation16 + $0x38] sm:$0xff]
        %v875 = vld [vmem:[#allocation16 + $0x40] sm:$0xff]
        %v876 = vld [vmem:[#allocation16 + $0x48] sm:$0xff]
        %v877 = vld [vmem:[#allocation16 + $0x50] sm:$0xff]
        %v878 = vld [vmem:[#allocation16 + $0x58] sm:$0xff]
        %v879 = vld [vmem:[#allocation16 + $0x60] sm:$0xff]
        %v880 = vld [vmem:[#allocation16 + $0x68] sm:$0xff]
        %v881 = vld [vmem:[#allocation16 + $0x70] sm:$0xff]
        %v882 = vld [vmem:[#allocation16 + $0x78] sm:$0xff]
        %v883 = vld [vmem:[#allocation16 + $0x80] sm:$0xff]
        %v884 = vld [vmem:[#allocation16 + $0x88] sm:$0xff]
        %v885 = vld [vmem:[#allocation16 + $0x90] sm:$0xff]
        %v886 = vld [vmem:[#allocation16 + $0x98] sm:$0xff]
        %v887 = vld [vmem:[#allocation16 + $0xa0] sm:$0xff]
        %v888 = vld [vmem:[#allocation16 + $0xa8] sm:$0xff]
        %v889 = vld [vmem:[#allocation16 + $0xb0] sm:$0xff]
        %v890 = vld [vmem:[#allocation16 + $0xb8] sm:$0xff]
        %v891 = vld [vmem:[#allocation16 + $0xc0] sm:$0xff]
        %v892 = vld [vmem:[#allocation16 + $0xc8] sm:$0xff]
        %v893 = vld [vmem:[#allocation16 + $0xd0] sm:$0xff]
        %v894 = vld [vmem:[#allocation16 + $0xd8] sm:$0xff]
        %v895 = vld [vmem:[#allocation16 + $0xe0] sm:$0xff]
        %v896 = vld [vmem:[#allocation16 + $0xe8] sm:$0xff]
        %v897 = vld [vmem:[#allocation16 + $0xf0] sm:$0xff]
        %v898 = vld [vmem:[#allocation16 + $0xf8] sm:$0xff]
        %v899 = vld [vmem:[%s13] sm:$0x3]
        %v900 = vld [vmem:[%s14] ss:$2 sm:$0x3]
        %s901 = scalar_lea.vmem %s14, 1
        %v902 = vld [vmem:[%s901] ss:$2 sm:$0x3]
        %v903 = vld [vmem:[%s581] sm:$0xff]
        %v904 = vld [vmem:[%s581 + $0x8] sm:$0xff]
        %v905 = vld [vmem:[%s581 + $0x10] sm:$0xff]
        %v906 = vld [vmem:[%s581 + $0x18] sm:$0xff]
        %v907 = vld [vmem:[%s581 + $0x20] sm:$0xff]
        %v908 = vld [vmem:[%s581 + $0x28] sm:$0xff]
        %v909 = vld [vmem:[%s581 + $0x30] sm:$0xff]
        %v910 = vld [vmem:[%s581 + $0x38] sm:$0xff]
        %v911 = vld [vmem:[%s581 + $0x40] sm:$0xff]
        %v912 = vld [vmem:[%s581 + $0x48] sm:$0xff]
        %v913 = vld [vmem:[%s581 + $0x50] sm:$0xff]
        %v914 = vld [vmem:[%s581 + $0x58] sm:$0xff]
        %v915 = vld [vmem:[%s581 + $0x60] sm:$0xff]
        %v916 = vld [vmem:[%s581 + $0x68] sm:$0xff]
        %v917 = vld [vmem:[%s581 + $0x70] sm:$0xff]
        %v918 = vld [vmem:[%s581 + $0x78] sm:$0xff]
        %v919 = vpack.c.bf16 %v904, %v903
        %v920 = vpack.c.bf16 %v906, %v905
        %v921 = vpack.c.bf16 %v908, %v907
        %v922 = vpack.c.bf16 %v910, %v909
        %v923 = vpack.c.bf16 %v912, %v911
        %v924 = vpack.c.bf16 %v914, %v913
        %v925 = vpack.c.bf16 %v916, %v915
        %v926 = vpack.c.bf16 %v918, %v917
        %v928 = vlaneseq
        %v929 = vshrl.u32 %v928, 7
        %v930 = vsub.s32 0, %v929
        %v931 = vrot.slane %v719, %v930
        %v932 = vlaneseq
        %v933 = vshrl.u32 %v932, 7
        %v934 = vsub.s32 1, %v933
        %v935 = vrot.slane %v719, %v934
        %v954 = vunpack.c.l.b16 %v671
        %v955 = vunpack.c.h.b16 %v671
        %v956 = vunpack.c.l.b16 %v672
        %v957 = vunpack.c.h.b16 %v672
        %v958 = vunpack.c.l.b16 %v673
        %v959 = vunpack.c.h.b16 %v673
        %v960 = vunpack.c.l.b16 %v674
        %v961 = vunpack.c.h.b16 %v674
        %v962 = vunpack.c.l.b16 %v675
        %v963 = vunpack.c.h.b16 %v675
        %v964 = vunpack.c.l.b16 %v676
        %v965 = vunpack.c.h.b16 %v676
        %v966 = vunpack.c.l.b16 %v677
        %v967 = vunpack.c.h.b16 %v677
        %v968 = vunpack.c.l.b16 %v678
        %v969 = vunpack.c.h.b16 %v678
        %v970 = vunpack.c.l.b16 %v679
        %v971 = vunpack.c.h.b16 %v679
        %v972 = vunpack.c.l.b16 %v680
        %v973 = vunpack.c.h.b16 %v680
        %v974 = vunpack.c.l.b16 %v681
        %v975 = vunpack.c.h.b16 %v681
        %v976 = vunpack.c.l.b16 %v682
        %v977 = vunpack.c.h.b16 %v682
        %v978 = vunpack.c.l.b16 %v683
        %v979 = vunpack.c.h.b16 %v683
        %v980 = vunpack.c.l.b16 %v684
        %v981 = vunpack.c.h.b16 %v684
        %v982 = vunpack.c.l.b16 %v685
        %v983 = vunpack.c.h.b16 %v685
        %v984 = vunpack.c.l.b16 %v686
        %v985 = vunpack.c.h.b16 %v686
        %v986 = vpack.c.b16 %v956, %v954
        %v987 = vpack.c.b16 %v957, %v955
        %v988 = vpack.c.b16 %v960, %v958
        %v989 = vpack.c.b16 %v961, %v959
        %v990 = vpack.c.b16 %v964, %v962
        %v991 = vpack.c.b16 %v965, %v963
        %v992 = vpack.c.b16 %v968, %v966
        %v993 = vpack.c.b16 %v969, %v967
        %v994 = vpack.c.b16 %v972, %v970
        %v995 = vpack.c.b16 %v973, %v971
        %v996 = vpack.c.b16 %v976, %v974
        %v997 = vpack.c.b16 %v977, %v975
        %v998 = vpack.c.b16 %v980, %v978
        %v999 = vpack.c.b16 %v981, %v979
        %v1000 = vpack.c.b16 %v984, %v982
        %v1001 = vpack.c.b16 %v985, %v983
        %1018 = vmatprep.subr.bf16.mxu0 %v1001
        %1019 = vmatpush1.bf16.msra.mxu0 %v1000
        %1020 = vmatprep.subr.bf16.mxu0 %v999
        %1021 = vmatpush1.bf16.msra.mxu0 %v998
        %1022 = vmatprep.subr.bf16.mxu0 %v997
        %1023 = vmatpush1.bf16.msra.mxu0 %v996
        %1024 = vmatprep.subr.bf16.mxu0 %v995
        %1025 = vmatpush1.bf16.msra.mxu0 %v994
        %1026 = vmatprep.subr.bf16.mxu0 %v993
        %1027 = vmatpush1.bf16.msra.mxu0 %v992
        %1028 = vmatprep.subr.bf16.mxu0 %v991
        %1029 = vmatpush1.bf16.msra.mxu0 %v990
        %1030 = vmatprep.subr.bf16.mxu0 %v989
        %1031 = vmatpush1.bf16.msra.mxu0 %v988
        %1032 = vmatprep.subr.bf16.mxu0 %v987
        %1033 = vmatpush1.bf16.msra.mxu0 %v986
        %1034 = vmatprep.subr.bf16.mxu0 0
        %1035 = vmatpush2.bf16.msra.mxu0 0
        %1036 = vmatprep.subr.bf16.mxu0 0
        %1037 = vmatpush2.bf16.msra.mxu0 0
        %1038 = vmatprep.subr.bf16.mxu0 0
        %1039 = vmatpush2.bf16.msra.mxu0 0
        %1040 = vmatprep.subr.bf16.mxu0 0
        %1041 = vmatpush2.bf16.msra.mxu0 0
        %1042 = vmatprep.subr.bf16.mxu0 0
        %1043 = vmatpush2.bf16.msra.mxu0 0
        %1044 = vmatprep.subr.bf16.mxu0 0
        %1045 = vmatpush2.bf16.msra.mxu0 0
        %1046 = vmatprep.subr.bf16.mxu0 0
        %1047 = vmatpush2.bf16.msra.mxu0 0
        %1048 = vmatprep.subr.bf16.mxu0 0
        %1049 = vmatpush2.bf16.msra.mxu0 0
        %1050 = vmatprep.mubr.bf16.mxu0 0
        %1051 = vmatmul.mubr.bf16.gmra.mxu0 %v919
        %v1052 = vpop.f32.mrf.mxu0
        %v1053 = vadd.f32 %v931, %v1052
        %v1054 = vpop.f32.mrf.mxu0
        %v1055 = vadd.f32 %v935, %v1054
        %v1056 = vpop.f32.mrf.mxu0
        %v1057 = vadd.f32 %v931, %v1056
        %v1058 = vpop.f32.mrf.mxu0
        %v1059 = vadd.f32 %v935, %v1058
        %1060 = vmatprep.mubr.bf16.mxu0 0
        %1061 = vmatmul.mubr.bf16.gmra.mxu0 %v920
        %v1062 = vpop.f32.mrf.mxu0
        %v1063 = vadd.f32 %v931, %v1062
        %v1064 = vpop.f32.mrf.mxu0
        %v1065 = vadd.f32 %v935, %v1064
        %v1066 = vpop.f32.mrf.mxu0
        %v1067 = vadd.f32 %v931, %v1066
        %v1068 = vpop.f32.mrf.mxu0
        %v1069 = vadd.f32 %v935, %v1068
        %1070 = vmatprep.mubr.bf16.mxu0 0
        %1071 = vmatmul.mubr.bf16.gmra.mxu0 %v921
        %v1072 = vpop.f32.mrf.mxu0
        %v1073 = vadd.f32 %v931, %v1072
        %v1074 = vpop.f32.mrf.mxu0
        %v1075 = vadd.f32 %v935, %v1074
        %v1076 = vpop.f32.mrf.mxu0
        %v1077 = vadd.f32 %v931, %v1076
        %v1078 = vpop.f32.mrf.mxu0
        %v1079 = vadd.f32 %v935, %v1078
        %1080 = vmatprep.mubr.bf16.mxu0 0
        %1081 = vmatmul.mubr.bf16.gmra.mxu0 %v922
        %v1082 = vpop.f32.mrf.mxu0
        %v1083 = vadd.f32 %v931, %v1082
        %v1084 = vpop.f32.mrf.mxu0
        %v1085 = vadd.f32 %v935, %v1084
        %v1086 = vpop.f32.mrf.mxu0
        %v1087 = vadd.f32 %v931, %v1086
        %v1088 = vpop.f32.mrf.mxu0
        %v1089 = vadd.f32 %v935, %v1088
        %1090 = vmatprep.mubr.bf16.mxu0 0
        %1091 = vmatmul.mubr.bf16.gmra.mxu0 %v923
        %v1092 = vpop.f32.mrf.mxu0
        %v1093 = vadd.f32 %v931, %v1092
        %v1094 = vpop.f32.mrf.mxu0
        %v1095 = vadd.f32 %v935, %v1094
        %v1096 = vpop.f32.mrf.mxu0
        %v1097 = vadd.f32 %v931, %v1096
        %v1098 = vpop.f32.mrf.mxu0
        %v1099 = vadd.f32 %v935, %v1098
        %1100 = vmatprep.mubr.bf16.mxu0 0
        %1101 = vmatmul.mubr.bf16.gmra.mxu0 %v924
        %v1102 = vpop.f32.mrf.mxu0
        %v1103 = vadd.f32 %v931, %v1102
        %v1104 = vpop.f32.mrf.mxu0
        %v1105 = vadd.f32 %v935, %v1104
        %v1106 = vpop.f32.mrf.mxu0
        %v1107 = vadd.f32 %v931, %v1106
        %v1108 = vpop.f32.mrf.mxu0
        %v1109 = vadd.f32 %v935, %v1108
        %1110 = vmatprep.mubr.bf16.mxu0 0
        %1111 = vmatmul.mubr.bf16.gmra.mxu0 %v925
        %v1112 = vpop.f32.mrf.mxu0
        %v1113 = vadd.f32 %v931, %v1112
        %v1114 = vpop.f32.mrf.mxu0
        %v1115 = vadd.f32 %v935, %v1114
        %v1116 = vpop.f32.mrf.mxu0
        %v1117 = vadd.f32 %v931, %v1116
        %v1118 = vpop.f32.mrf.mxu0
        %v1119 = vadd.f32 %v935, %v1118
        %1120 = vmatprep.mubr.bf16.mxu0 0
        %1121 = vmatmul.mubr.bf16.gmra.mxu0 %v926
        %v1122 = vpop.f32.mrf.mxu0
        %v1123 = vadd.f32 %v931, %v1122
        %v1124 = vpop.f32.mrf.mxu0
        %v1125 = vadd.f32 %v935, %v1124
        %v1126 = vpop.f32.mrf.mxu0
        %v1127 = vadd.f32 %v931, %v1126
        %v1128 = vpop.f32.mrf.mxu0
        %v1129 = vadd.f32 %v935, %v1128
        %1130 = vdwg.mxu0
        %v1131 = vmul.f32 %v1053, 0.5
        %v1132 = vmul.f32 %v1055, 0.5
        %v1133 = vmul.f32 %v1057, 0.5
        %v1134 = vmul.f32 %v1059, 0.5
        %v1135 = vmul.f32 %v1063, 0.5
        %v1136 = vmul.f32 %v1065, 0.5
        %v1137 = vmul.f32 %v1067, 0.5
        %v1138 = vmul.f32 %v1069, 0.5
        %v1139 = vmul.f32 %v1073, 0.5
        %v1140 = vmul.f32 %v1075, 0.5
        %v1141 = vmul.f32 %v1077, 0.5
        %v1142 = vmul.f32 %v1079, 0.5
        %v1143 = vmul.f32 %v1083, 0.5
        %v1144 = vmul.f32 %v1085, 0.5
        %v1145 = vmul.f32 %v1087, 0.5
        %v1146 = vmul.f32 %v1089, 0.5
        %v1147 = vmul.f32 %v1093, 0.5
        %v1148 = vmul.f32 %v1095, 0.5
        %v1149 = vmul.f32 %v1097, 0.5
        %v1150 = vmul.f32 %v1099, 0.5
        %v1151 = vmul.f32 %v1103, 0.5
        %v1152 = vmul.f32 %v1105, 0.5
        %v1153 = vmul.f32 %v1107, 0.5
        %v1154 = vmul.f32 %v1109, 0.5
        %v1155 = vmul.f32 %v1113, 0.5
        %v1156 = vmul.f32 %v1115, 0.5
        %v1157 = vmul.f32 %v1117, 0.5
        %v1158 = vmul.f32 %v1119, 0.5
        %v1159 = vmul.f32 %v1123, 0.5
        %v1160 = vmul.f32 %v1125, 0.5
        %v1161 = vmul.f32 %v1127, 0.5
        %v1162 = vmul.f32 %v1129, 0.5
        %v1163 = vtanh.pop %v1131
        %v1164 = vtanh.pop %v1132
        %v1165 = vtanh.pop %v1133
        %v1166 = vtanh.pop %v1134
        %v1167 = vtanh.pop %v1135
        %v1168 = vtanh.pop %v1136
        %v1169 = vtanh.pop %v1137
        %v1170 = vtanh.pop %v1138
        %v1171 = vtanh.pop %v1139
        %v1172 = vtanh.pop %v1140
        %v1173 = vtanh.pop %v1141
        %v1174 = vtanh.pop %v1142
        %v1175 = vtanh.pop %v1143
        %v1176 = vtanh.pop %v1144
        %v1177 = vtanh.pop %v1145
        %v1178 = vtanh.pop %v1146
        %v1179 = vtanh.pop %v1147
        %v1180 = vtanh.pop %v1148
        %v1181 = vtanh.pop %v1149
        %v1182 = vtanh.pop %v1150
        %v1183 = vtanh.pop %v1151
        %v1184 = vtanh.pop %v1152
        %v1185 = vtanh.pop %v1153
        %v1186 = vtanh.pop %v1154
        %v1187 = vtanh.pop %v1155
        %v1188 = vtanh.pop %v1156
        %v1189 = vtanh.pop %v1157
        %v1190 = vtanh.pop %v1158
        %v1191 = vtanh.pop %v1159
        %v1192 = vtanh.pop %v1160
        %v1193 = vtanh.pop %v1161
        %v1194 = vtanh.pop %v1162
        %v1195 = vadd.f32 %v1163, 1.0
        %v1196 = vadd.f32 %v1164, 1.0
        %v1197 = vadd.f32 %v1165, 1.0
        %v1198 = vadd.f32 %v1166, 1.0
        %v1199 = vadd.f32 %v1167, 1.0
        %v1200 = vadd.f32 %v1168, 1.0
        %v1201 = vadd.f32 %v1169, 1.0
        %v1202 = vadd.f32 %v1170, 1.0
        %v1203 = vadd.f32 %v1171, 1.0
        %v1204 = vadd.f32 %v1172, 1.0
        %v1205 = vadd.f32 %v1173, 1.0
        %v1206 = vadd.f32 %v1174, 1.0
        %v1207 = vadd.f32 %v1175, 1.0
        %v1208 = vadd.f32 %v1176, 1.0
        %v1209 = vadd.f32 %v1177, 1.0
        %v1210 = vadd.f32 %v1178, 1.0
        %v1211 = vadd.f32 %v1179, 1.0
        %v1212 = vadd.f32 %v1180, 1.0
        %v1213 = vadd.f32 %v1181, 1.0
        %v1214 = vadd.f32 %v1182, 1.0
        %v1215 = vadd.f32 %v1183, 1.0
        %v1216 = vadd.f32 %v1184, 1.0
        %v1217 = vadd.f32 %v1185, 1.0
        %v1218 = vadd.f32 %v1186, 1.0
        %v1219 = vadd.f32 %v1187, 1.0
        %v1220 = vadd.f32 %v1188, 1.0
        %v1221 = vadd.f32 %v1189, 1.0
        %v1222 = vadd.f32 %v1190, 1.0
        %v1223 = vadd.f32 %v1191, 1.0
        %v1224 = vadd.f32 %v1192, 1.0
        %v1225 = vadd.f32 %v1193, 1.0
        %v1226 = vadd.f32 %v1194, 1.0
        %v1227 = vmul.f32 %v1195, 0.5
        %v1228 = vmul.f32 %v1196, 0.5
        %v1229 = vmul.f32 %v1197, 0.5
        %v1230 = vmul.f32 %v1198, 0.5
        %v1231 = vmul.f32 %v1199, 0.5
        %v1232 = vmul.f32 %v1200, 0.5
        %v1233 = vmul.f32 %v1201, 0.5
        %v1234 = vmul.f32 %v1202, 0.5
        %v1235 = vmul.f32 %v1203, 0.5
        %v1236 = vmul.f32 %v1204, 0.5
        %v1237 = vmul.f32 %v1205, 0.5
        %v1238 = vmul.f32 %v1206, 0.5
        %v1239 = vmul.f32 %v1207, 0.5
        %v1240 = vmul.f32 %v1208, 0.5
        %v1241 = vmul.f32 %v1209, 0.5
        %v1242 = vmul.f32 %v1210, 0.5
        %v1243 = vmul.f32 %v1211, 0.5
        %v1244 = vmul.f32 %v1212, 0.5
        %v1245 = vmul.f32 %v1213, 0.5
        %v1246 = vmul.f32 %v1214, 0.5
        %v1247 = vmul.f32 %v1215, 0.5
        %v1248 = vmul.f32 %v1216, 0.5
        %v1249 = vmul.f32 %v1217, 0.5
        %v1250 = vmul.f32 %v1218, 0.5
        %v1251 = vmul.f32 %v1219, 0.5
        %v1252 = vmul.f32 %v1220, 0.5
        %v1253 = vmul.f32 %v1221, 0.5
        %v1254 = vmul.f32 %v1222, 0.5
        %v1255 = vmul.f32 %v1223, 0.5
        %v1256 = vmul.f32 %v1224, 0.5
        %v1257 = vmul.f32 %v1225, 0.5
        %v1258 = vmul.f32 %v1226, 0.5
        %v1259 = vmax.f32 %v1053, 0.0
        %v1260 = vmax.f32 %v1055, 0.0
        %v1261 = vmax.f32 %v1057, 0.0
        %v1262 = vmax.f32 %v1059, 0.0
        %v1263 = vmax.f32 %v1063, 0.0
        %v1264 = vmax.f32 %v1065, 0.0
        %v1265 = vmax.f32 %v1067, 0.0
        %v1266 = vmax.f32 %v1069, 0.0
        %v1267 = vmax.f32 %v1073, 0.0
        %v1268 = vmax.f32 %v1075, 0.0
        %v1269 = vmax.f32 %v1077, 0.0
        %v1270 = vmax.f32 %v1079, 0.0
        %v1271 = vmax.f32 %v1083, 0.0
        %v1272 = vmax.f32 %v1085, 0.0
        %v1273 = vmax.f32 %v1087, 0.0
        %v1274 = vmax.f32 %v1089, 0.0
        %v1275 = vmax.f32 %v1093, 0.0
        %v1276 = vmax.f32 %v1095, 0.0
        %v1277 = vmax.f32 %v1097, 0.0
        %v1278 = vmax.f32 %v1099, 0.0
        %v1279 = vmax.f32 %v1103, 0.0
        %v1280 = vmax.f32 %v1105, 0.0
        %v1281 = vmax.f32 %v1107, 0.0
        %v1282 = vmax.f32 %v1109, 0.0
        %v1283 = vmax.f32 %v1113, 0.0
        %v1284 = vmax.f32 %v1115, 0.0
        %v1285 = vmax.f32 %v1117, 0.0
        %v1286 = vmax.f32 %v1119, 0.0
        %v1287 = vmax.f32 %v1123, 0.0
        %v1288 = vmax.f32 %v1125, 0.0
        %v1289 = vmax.f32 %v1127, 0.0
        %v1290 = vmax.f32 %v1129, 0.0
        %v1291 = vand.u32 2147483647, %v1053
        %v1292 = vand.u32 2147483647, %v1055
        %v1293 = vand.u32 2147483647, %v1057
        %v1294 = vand.u32 2147483647, %v1059
        %v1295 = vand.u32 2147483647, %v1063
        %v1296 = vand.u32 2147483647, %v1065
        %v1297 = vand.u32 2147483647, %v1067
        %v1298 = vand.u32 2147483647, %v1069
        %v1299 = vand.u32 2147483647, %v1073
        %v1300 = vand.u32 2147483647, %v1075
        %v1301 = vand.u32 2147483647, %v1077
        %v1302 = vand.u32 2147483647, %v1079
        %v1303 = vand.u32 2147483647, %v1083
        %v1304 = vand.u32 2147483647, %v1085
        %v1305 = vand.u32 2147483647, %v1087
        %v1306 = vand.u32 2147483647, %v1089
        %v1307 = vand.u32 2147483647, %v1093
        %v1308 = vand.u32 2147483647, %v1095
        %v1309 = vand.u32 2147483647, %v1097
        %v1310 = vand.u32 2147483647, %v1099
        %v1311 = vand.u32 2147483647, %v1103
        %v1312 = vand.u32 2147483647, %v1105
        %v1313 = vand.u32 2147483647, %v1107
        %v1314 = vand.u32 2147483647, %v1109
        %v1315 = vand.u32 2147483647, %v1113
        %v1316 = vand.u32 2147483647, %v1115
        %v1317 = vand.u32 2147483647, %v1117
        %v1318 = vand.u32 2147483647, %v1119
        %v1319 = vand.u32 2147483647, %v1123
        %v1320 = vand.u32 2147483647, %v1125
        %v1321 = vand.u32 2147483647, %v1127
        %v1322 = vand.u32 2147483647, %v1129
        %v1323 = vsub.f32 0.0, %v1291
        %v1324 = vsub.f32 0.0, %v1292
        %v1325 = vsub.f32 0.0, %v1293
        %v1326 = vsub.f32 0.0, %v1294
        %v1327 = vsub.f32 0.0, %v1295
        %v1328 = vsub.f32 0.0, %v1296
        %v1329 = vsub.f32 0.0, %v1297
        %v1330 = vsub.f32 0.0, %v1298
        %v1331 = vsub.f32 0.0, %v1299
        %v1332 = vsub.f32 0.0, %v1300
        %v1333 = vsub.f32 0.0, %v1301
        %v1334 = vsub.f32 0.0, %v1302
        %v1335 = vsub.f32 0.0, %v1303
        %v1336 = vsub.f32 0.0, %v1304
        %v1337 = vsub.f32 0.0, %v1305
        %v1338 = vsub.f32 0.0, %v1306
        %v1339 = vsub.f32 0.0, %v1307
        %v1340 = vsub.f32 0.0, %v1308
        %v1341 = vsub.f32 0.0, %v1309
        %v1342 = vsub.f32 0.0, %v1310
        %v1343 = vsub.f32 0.0, %v1311
        %v1344 = vsub.f32 0.0, %v1312
        %v1345 = vsub.f32 0.0, %v1313
        %v1346 = vsub.f32 0.0, %v1314
        %v1347 = vsub.f32 0.0, %v1315
        %v1348 = vsub.f32 0.0, %v1316
        %v1349 = vsub.f32 0.0, %v1317
        %v1350 = vsub.f32 0.0, %v1318
        %v1351 = vsub.f32 0.0, %v1319
        %v1352 = vsub.f32 0.0, %v1320
        %v1353 = vsub.f32 0.0, %v1321
        %v1354 = vsub.f32 0.0, %v1322
        %v1355 = vmul.f32 %v1323, 1.442695
        %v1356 = vpow.pop %v1355
        %v1357 = vmul.f32 %v1324, 1.442695
        %v1358 = vpow.pop %v1357
        %v1359 = vmul.f32 %v1325, 1.442695
        %v1360 = vpow.pop %v1359
        %v1361 = vmul.f32 %v1326, 1.442695
        %v1362 = vpow.pop %v1361
        %v1363 = vmul.f32 %v1327, 1.442695
        %v1364 = vpow.pop %v1363
        %v1365 = vmul.f32 %v1328, 1.442695
        %v1366 = vpow.pop %v1365
        %v1367 = vmul.f32 %v1329, 1.442695
        %v1368 = vpow.pop %v1367
        %v1369 = vmul.f32 %v1330, 1.442695
        %v1370 = vpow.pop %v1369
        %v1371 = vmul.f32 %v1331, 1.442695
        %v1372 = vpow.pop %v1371
        %v1373 = vmul.f32 %v1332, 1.442695
        %v1374 = vpow.pop %v1373
        %v1375 = vmul.f32 %v1333, 1.442695
        %v1376 = vpow.pop %v1375
        %v1377 = vmul.f32 %v1334, 1.442695
        %v1378 = vpow.pop %v1377
        %v1379 = vmul.f32 %v1335, 1.442695
        %v1380 = vpow.pop %v1379
        %v1381 = vmul.f32 %v1336, 1.442695
        %v1382 = vpow.pop %v1381
        %v1383 = vmul.f32 %v1337, 1.442695
        %v1384 = vpow.pop %v1383
        %v1385 = vmul.f32 %v1338, 1.442695
        %v1386 = vpow.pop %v1385
        %v1387 = vmul.f32 %v1339, 1.442695
        %v1388 = vpow.pop %v1387
        %v1389 = vmul.f32 %v1340, 1.442695
        %v1390 = vpow.pop %v1389
        %v1391 = vmul.f32 %v1341, 1.442695
        %v1392 = vpow.pop %v1391
        %v1393 = vmul.f32 %v1342, 1.442695
        %v1394 = vpow.pop %v1393
        %v1395 = vmul.f32 %v1343, 1.442695
        %v1396 = vpow.pop %v1395
        %v1397 = vmul.f32 %v1344, 1.442695
        %v1398 = vpow.pop %v1397
        %v1399 = vmul.f32 %v1345, 1.442695
        %v1400 = vpow.pop %v1399
        %v1401 = vmul.f32 %v1346, 1.442695
        %v1402 = vpow.pop %v1401
        %v1403 = vmul.f32 %v1347, 1.442695
        %v1404 = vpow.pop %v1403
        %v1405 = vmul.f32 %v1348, 1.442695
        %v1406 = vpow.pop %v1405
        %v1407 = vmul.f32 %v1349, 1.442695
        %v1408 = vpow.pop %v1407
        %v1409 = vmul.f32 %v1350, 1.442695
        %v1410 = vpow.pop %v1409
        %v1411 = vmul.f32 %v1351, 1.442695
        %v1412 = vpow.pop %v1411
        %v1413 = vmul.f32 %v1352, 1.442695
        %v1414 = vpow.pop %v1413
        %v1415 = vmul.f32 %v1353, 1.442695
        %v1416 = vpow.pop %v1415
        %v1417 = vmul.f32 %v1354, 1.442695
        %v1418 = vpow.pop %v1417
        %v1419 = vadd.f32 %v1356, 1.0
        %v1420 = vadd.f32 %v1358, 1.0
        %v1421 = vadd.f32 %v1360, 1.0
        %v1422 = vadd.f32 %v1362, 1.0
        %v1423 = vadd.f32 %v1364, 1.0
        %v1424 = vadd.f32 %v1366, 1.0
        %v1425 = vadd.f32 %v1368, 1.0
        %v1426 = vadd.f32 %v1370, 1.0
        %v1427 = vadd.f32 %v1372, 1.0
        %v1428 = vadd.f32 %v1374, 1.0
        %v1429 = vadd.f32 %v1376, 1.0
        %v1430 = vadd.f32 %v1378, 1.0
        %v1431 = vadd.f32 %v1380, 1.0
        %v1432 = vadd.f32 %v1382, 1.0
        %v1433 = vadd.f32 %v1384, 1.0
        %v1434 = vadd.f32 %v1386, 1.0
        %v1435 = vadd.f32 %v1388, 1.0
        %v1436 = vadd.f32 %v1390, 1.0
        %v1437 = vadd.f32 %v1392, 1.0
        %v1438 = vadd.f32 %v1394, 1.0
        %v1439 = vadd.f32 %v1396, 1.0
        %v1440 = vadd.f32 %v1398, 1.0
        %v1441 = vadd.f32 %v1400, 1.0
        %v1442 = vadd.f32 %v1402, 1.0
        %v1443 = vadd.f32 %v1404, 1.0
        %v1444 = vadd.f32 %v1406, 1.0
        %v1445 = vadd.f32 %v1408, 1.0
        %v1446 = vadd.f32 %v1410, 1.0
        %v1447 = vadd.f32 %v1412, 1.0
        %v1448 = vadd.f32 %v1414, 1.0
        %v1449 = vadd.f32 %v1416, 1.0
        %v1450 = vadd.f32 %v1418, 1.0
        %v1451 = vlog2.pop %v1419
        %v1452 = vmul.f32 %v1451, 0.6931472
        %v1453 = vlog2.pop %v1420
        %v1454 = vmul.f32 %v1453, 0.6931472
        %v1455 = vlog2.pop %v1421
        %v1456 = vmul.f32 %v1455, 0.6931472
        %v1457 = vlog2.pop %v1422
        %v1458 = vmul.f32 %v1457, 0.6931472
        %v1459 = vlog2.pop %v1423
        %v1460 = vmul.f32 %v1459, 0.6931472
        %v1461 = vlog2.pop %v1424
        %v1462 = vmul.f32 %v1461, 0.6931472
        %v1463 = vlog2.pop %v1425
        %v1464 = vmul.f32 %v1463, 0.6931472
        %v1465 = vlog2.pop %v1426
        %v1466 = vmul.f32 %v1465, 0.6931472
        %v1467 = vlog2.pop %v1427
        %v1468 = vmul.f32 %v1467, 0.6931472
        %v1469 = vlog2.pop %v1428
        %v1470 = vmul.f32 %v1469, 0.6931472
        %v1471 = vlog2.pop %v1429
        %v1472 = vmul.f32 %v1471, 0.6931472
        %v1473 = vlog2.pop %v1430
        %v1474 = vmul.f32 %v1473, 0.6931472
        %v1475 = vlog2.pop %v1431
        %v1476 = vmul.f32 %v1475, 0.6931472
        %v1477 = vlog2.pop %v1432
        %v1478 = vmul.f32 %v1477, 0.6931472
        %v1479 = vlog2.pop %v1433
        %v1480 = vmul.f32 %v1479, 0.6931472
        %v1481 = vlog2.pop %v1434
        %v1482 = vmul.f32 %v1481, 0.6931472
        %v1483 = vlog2.pop %v1435
        %v1484 = vmul.f32 %v1483, 0.6931472
        %v1485 = vlog2.pop %v1436
        %v1486 = vmul.f32 %v1485, 0.6931472
        %v1487 = vlog2.pop %v1437
        %v1488 = vmul.f32 %v1487, 0.6931472
        %v1489 = vlog2.pop %v1438
        %v1490 = vmul.f32 %v1489, 0.6931472
        %v1491 = vlog2.pop %v1439
        %v1492 = vmul.f32 %v1491, 0.6931472
        %v1493 = vlog2.pop %v1440
        %v1494 = vmul.f32 %v1493, 0.6931472
        %v1495 = vlog2.pop %v1441
        %v1496 = vmul.f32 %v1495, 0.6931472
        %v1497 = vlog2.pop %v1442
        %v1498 = vmul.f32 %v1497, 0.6931472
        %v1499 = vlog2.pop %v1443
        %v1500 = vmul.f32 %v1499, 0.6931472
        %v1501 = vlog2.pop %v1444
        %v1502 = vmul.f32 %v1501, 0.6931472
        %v1503 = vlog2.pop %v1445
        %v1504 = vmul.f32 %v1503, 0.6931472
        %v1505 = vlog2.pop %v1446
        %v1506 = vmul.f32 %v1505, 0.6931472
        %v1507 = vlog2.pop %v1447
        %v1508 = vmul.f32 %v1507, 0.6931472
        %v1509 = vlog2.pop %v1448
        %v1510 = vmul.f32 %v1509, 0.6931472
        %v1511 = vlog2.pop %v1449
        %v1512 = vmul.f32 %v1511, 0.6931472
        %v1513 = vlog2.pop %v1450
        %v1514 = vmul.f32 %v1513, 0.6931472
        %v1515 = vadd.f32 %v1259, %v1452
        %v1516 = vadd.f32 %v1260, %v1454
        %v1517 = vadd.f32 %v1261, %v1456
        %v1518 = vadd.f32 %v1262, %v1458
        %v1519 = vadd.f32 %v1263, %v1460
        %v1520 = vadd.f32 %v1264, %v1462
        %v1521 = vadd.f32 %v1265, %v1464
        %v1522 = vadd.f32 %v1266, %v1466
        %v1523 = vadd.f32 %v1267, %v1468
        %v1524 = vadd.f32 %v1268, %v1470
        %v1525 = vadd.f32 %v1269, %v1472
        %v1526 = vadd.f32 %v1270, %v1474
        %v1527 = vadd.f32 %v1271, %v1476
        %v1528 = vadd.f32 %v1272, %v1478
        %v1529 = vadd.f32 %v1273, %v1480
        %v1530 = vadd.f32 %v1274, %v1482
        %v1531 = vadd.f32 %v1275, %v1484
        %v1532 = vadd.f32 %v1276, %v1486
        %v1533 = vadd.f32 %v1277, %v1488
        %v1534 = vadd.f32 %v1278, %v1490
        %v1535 = vadd.f32 %v1279, %v1492
        %v1536 = vadd.f32 %v1280, %v1494
        %v1537 = vadd.f32 %v1281, %v1496
        %v1538 = vadd.f32 %v1282, %v1498
        %v1539 = vadd.f32 %v1283, %v1500
        %v1540 = vadd.f32 %v1284, %v1502
        %v1541 = vadd.f32 %v1285, %v1504
        %v1542 = vadd.f32 %v1286, %v1506
        %v1543 = vadd.f32 %v1287, %v1508
        %v1544 = vadd.f32 %v1288, %v1510
        %v1545 = vadd.f32 %v1289, %v1512
        %v1546 = vadd.f32 %v1290, %v1514
        %v1547 = vpack.c.bf16 %v1517, %v1515
        %v1548 = vpack.c.bf16 %v1518, %v1516
        %v1549 = vpack.c.bf16 %v1521, %v1519
        %v1550 = vpack.c.bf16 %v1522, %v1520
        %v1551 = vpack.c.bf16 %v1525, %v1523
        %v1552 = vpack.c.bf16 %v1526, %v1524
        %v1553 = vpack.c.bf16 %v1529, %v1527
        %v1554 = vpack.c.bf16 %v1530, %v1528
        %v1555 = vpack.c.bf16 %v1533, %v1531
        %v1556 = vpack.c.bf16 %v1534, %v1532
        %v1557 = vpack.c.bf16 %v1537, %v1535
        %v1558 = vpack.c.bf16 %v1538, %v1536
        %v1559 = vpack.c.bf16 %v1541, %v1539
        %v1560 = vpack.c.bf16 %v1542, %v1540
        %v1561 = vpack.c.bf16 %v1545, %v1543
        %v1562 = vpack.c.bf16 %v1546, %v1544
        %v1564 = vlaneseq
        %v1565 = vshrl.u32 %v1564, 7
        %v1566 = vsub.s32 0, %v1565
        %v1567 = vrot.slane %v784, %v1566
        %v1568 = vlaneseq
        %v1569 = vshrl.u32 %v1568, 7
        %v1570 = vsub.s32 1, %v1569
        %v1571 = vrot.slane %v784, %v1570
        %v1606 = vunpack.c.l.b16 %v720
        %v1607 = vunpack.c.h.b16 %v720
        %v1608 = vunpack.c.l.b16 %v721
        %v1609 = vunpack.c.h.b16 %v721
        %v1610 = vunpack.c.l.b16 %v722
        %v1611 = vunpack.c.h.b16 %v722
        %v1612 = vunpack.c.l.b16 %v723
        %v1613 = vunpack.c.h.b16 %v723
        %v1614 = vunpack.c.l.b16 %v724
        %v1615 = vunpack.c.h.b16 %v724
        %v1616 = vunpack.c.l.b16 %v725
        %v1617 = vunpack.c.h.b16 %v725
        %v1618 = vunpack.c.l.b16 %v726
        %v1619 = vunpack.c.h.b16 %v726
        %v1620 = vunpack.c.l.b16 %v727
        %v1621 = vunpack.c.h.b16 %v727
        %v1622 = vunpack.c.l.b16 %v728
        %v1623 = vunpack.c.h.b16 %v728
        %v1624 = vunpack.c.l.b16 %v729
        %v1625 = vunpack.c.h.b16 %v729
        %v1626 = vunpack.c.l.b16 %v730
        %v1627 = vunpack.c.h.b16 %v730
        %v1628 = vunpack.c.l.b16 %v731
        %v1629 = vunpack.c.h.b16 %v731
        %v1630 = vunpack.c.l.b16 %v732
        %v1631 = vunpack.c.h.b16 %v732
        %v1632 = vunpack.c.l.b16 %v733
        %v1633 = vunpack.c.h.b16 %v733
        %v1634 = vunpack.c.l.b16 %v734
        %v1635 = vunpack.c.h.b16 %v734
        %v1636 = vunpack.c.l.b16 %v735
        %v1637 = vunpack.c.h.b16 %v735
        %v1638 = vunpack.c.l.b16 %v736
        %v1639 = vunpack.c.h.b16 %v736
        %v1640 = vunpack.c.l.b16 %v737
        %v1641 = vunpack.c.h.b16 %v737
        %v1642 = vunpack.c.l.b16 %v738
        %v1643 = vunpack.c.h.b16 %v738
        %v1644 = vunpack.c.l.b16 %v739
        %v1645 = vunpack.c.h.b16 %v739
        %v1646 = vunpack.c.l.b16 %v740
        %v1647 = vunpack.c.h.b16 %v740
        %v1648 = vunpack.c.l.b16 %v741
        %v1649 = vunpack.c.h.b16 %v741
        %v1650 = vunpack.c.l.b16 %v742
        %v1651 = vunpack.c.h.b16 %v742
        %v1652 = vunpack.c.l.b16 %v743
        %v1653 = vunpack.c.h.b16 %v743
        %v1654 = vunpack.c.l.b16 %v744
        %v1655 = vunpack.c.h.b16 %v744
        %v1656 = vunpack.c.l.b16 %v745
        %v1657 = vunpack.c.h.b16 %v745
        %v1658 = vunpack.c.l.b16 %v746
        %v1659 = vunpack.c.h.b16 %v746
        %v1660 = vunpack.c.l.b16 %v747
        %v1661 = vunpack.c.h.b16 %v747
        %v1662 = vunpack.c.l.b16 %v748
        %v1663 = vunpack.c.h.b16 %v748
        %v1664 = vunpack.c.l.b16 %v749
        %v1665 = vunpack.c.h.b16 %v749
        %v1666 = vunpack.c.l.b16 %v750
        %v1667 = vunpack.c.h.b16 %v750
        %v1668 = vunpack.c.l.b16 %v751
        %v1669 = vunpack.c.h.b16 %v751
        %v1670 = vpack.c.b16 %v1608, %v1606
        %v1671 = vpack.c.b16 %v1609, %v1607
        %v1672 = vpack.c.b16 %v1612, %v1610
        %v1673 = vpack.c.b16 %v1613, %v1611
        %v1674 = vpack.c.b16 %v1616, %v1614
        %v1675 = vpack.c.b16 %v1617, %v1615
        %v1676 = vpack.c.b16 %v1620, %v1618
        %v1677 = vpack.c.b16 %v1621, %v1619
        %v1678 = vpack.c.b16 %v1624, %v1622
        %v1679 = vpack.c.b16 %v1625, %v1623
        %v1680 = vpack.c.b16 %v1628, %v1626
        %v1681 = vpack.c.b16 %v1629, %v1627
        %v1682 = vpack.c.b16 %v1632, %v1630
        %v1683 = vpack.c.b16 %v1633, %v1631
        %v1684 = vpack.c.b16 %v1636, %v1634
        %v1685 = vpack.c.b16 %v1637, %v1635
        %v1686 = vpack.c.b16 %v1640, %v1638
        %v1687 = vpack.c.b16 %v1641, %v1639
        %v1688 = vpack.c.b16 %v1644, %v1642
        %v1689 = vpack.c.b16 %v1645, %v1643
        %v1690 = vpack.c.b16 %v1648, %v1646
        %v1691 = vpack.c.b16 %v1649, %v1647
        %v1692 = vpack.c.b16 %v1652, %v1650
        %v1693 = vpack.c.b16 %v1653, %v1651
        %v1694 = vpack.c.b16 %v1656, %v1654
        %v1695 = vpack.c.b16 %v1657, %v1655
        %v1696 = vpack.c.b16 %v1660, %v1658
        %v1697 = vpack.c.b16 %v1661, %v1659
        %v1698 = vpack.c.b16 %v1664, %v1662
        %v1699 = vpack.c.b16 %v1665, %v1663
        %v1700 = vpack.c.b16 %v1668, %v1666
        %v1701 = vpack.c.b16 %v1669, %v1667
        %1734 = vmatprep.subr.bf16.mxu0 %v1685
        %1735 = vmatpush1.bf16.msra.mxu0 %v1684
        %1736 = vmatprep.subr.bf16.mxu0 %v1683
        %1737 = vmatpush1.bf16.msra.mxu0 %v1682
        %1738 = vmatprep.subr.bf16.mxu0 %v1681
        %1739 = vmatpush1.bf16.msra.mxu0 %v1680
        %1740 = vmatprep.subr.bf16.mxu0 %v1679
        %1741 = vmatpush1.bf16.msra.mxu0 %v1678
        %1742 = vmatprep.subr.bf16.mxu0 %v1677
        %1743 = vmatpush1.bf16.msra.mxu0 %v1676
        %1744 = vmatprep.subr.bf16.mxu0 %v1675
        %1745 = vmatpush1.bf16.msra.mxu0 %v1674
        %1746 = vmatprep.subr.bf16.mxu0 %v1673
        %1747 = vmatpush1.bf16.msra.mxu0 %v1672
        %1748 = vmatprep.subr.bf16.mxu0 %v1671
        %1749 = vmatpush1.bf16.msra.mxu0 %v1670
        %1750 = vmatprep.subr.bf16.mxu0 %v1701
        %1751 = vmatpush2.bf16.msra.mxu0 %v1700
        %1752 = vmatprep.subr.bf16.mxu0 %v1699
        %1753 = vmatpush2.bf16.msra.mxu0 %v1698
        %1754 = vmatprep.subr.bf16.mxu0 %v1697
        %1755 = vmatpush2.bf16.msra.mxu0 %v1696
        %1756 = vmatprep.subr.bf16.mxu0 %v1695
        %1757 = vmatpush2.bf16.msra.mxu0 %v1694
        %1758 = vmatprep.subr.bf16.mxu0 %v1693
        %1759 = vmatpush2.bf16.msra.mxu0 %v1692
        %1760 = vmatprep.subr.bf16.mxu0 %v1691
        %1761 = vmatpush2.bf16.msra.mxu0 %v1690
        %1762 = vmatprep.subr.bf16.mxu0 %v1689
        %1763 = vmatpush2.bf16.msra.mxu0 %v1688
        %1764 = vmatprep.subr.bf16.mxu0 %v1687
        %1765 = vmatpush2.bf16.msra.mxu0 %v1686
        %1766 = vmatprep.mubr.bf16.mxu0 %v1548
        %1767 = vmatmul.mubr.bf16.gmra.mxu0 %v1547
        %v1768 = vpop.f32.mrf.mxu0
        %v1769 = vadd.f32 %v1567, %v1768
        %v1770 = vpop.f32.mrf.mxu0
        %v1771 = vadd.f32 %v1571, %v1770
        %v1772 = vpop.f32.mrf.mxu0
        %v1773 = vadd.f32 %v1567, %v1772
        %v1774 = vpop.f32.mrf.mxu0
        %v1775 = vadd.f32 %v1571, %v1774
        %1776 = vmatprep.mubr.bf16.mxu0 %v1550
        %1777 = vmatmul.mubr.bf16.gmra.mxu0 %v1549
        %v1778 = vpop.f32.mrf.mxu0
        %v1779 = vadd.f32 %v1567, %v1778
        %v1780 = vpop.f32.mrf.mxu0
        %v1781 = vadd.f32 %v1571, %v1780
        %v1782 = vpop.f32.mrf.mxu0
        %v1783 = vadd.f32 %v1567, %v1782
        %v1784 = vpop.f32.mrf.mxu0
        %v1785 = vadd.f32 %v1571, %v1784
        %1786 = vmatprep.mubr.bf16.mxu0 %v1552
        %1787 = vmatmul.mubr.bf16.gmra.mxu0 %v1551
        %v1788 = vpop.f32.mrf.mxu0
        %v1789 = vadd.f32 %v1567, %v1788
        %v1790 = vpop.f32.mrf.mxu0
        %v1791 = vadd.f32 %v1571, %v1790
        %v1792 = vpop.f32.mrf.mxu0
        %v1793 = vadd.f32 %v1567, %v1792
        %v1794 = vpop.f32.mrf.mxu0
        %v1795 = vadd.f32 %v1571, %v1794
        %1796 = vmatprep.mubr.bf16.mxu0 %v1554
        %1797 = vmatmul.mubr.bf16.gmra.mxu0 %v1553
        %v1798 = vpop.f32.mrf.mxu0
        %v1799 = vadd.f32 %v1567, %v1798
        %v1800 = vpop.f32.mrf.mxu0
        %v1801 = vadd.f32 %v1571, %v1800
        %v1802 = vpop.f32.mrf.mxu0
        %v1803 = vadd.f32 %v1567, %v1802
        %v1804 = vpop.f32.mrf.mxu0
        %v1805 = vadd.f32 %v1571, %v1804
        %1806 = vmatprep.mubr.bf16.mxu0 %v1556
        %1807 = vmatmul.mubr.bf16.gmra.mxu0 %v1555
        %v1808 = vpop.f32.mrf.mxu0
        %v1809 = vadd.f32 %v1567, %v1808
        %v1810 = vpop.f32.mrf.mxu0
        %v1811 = vadd.f32 %v1571, %v1810
        %v1812 = vpop.f32.mrf.mxu0
        %v1813 = vadd.f32 %v1567, %v1812
        %v1814 = vpop.f32.mrf.mxu0
        %v1815 = vadd.f32 %v1571, %v1814
        %1816 = vmatprep.mubr.bf16.mxu0 %v1558
        %1817 = vmatmul.mubr.bf16.gmra.mxu0 %v1557
        %v1818 = vpop.f32.mrf.mxu0
        %v1819 = vadd.f32 %v1567, %v1818
        %v1820 = vpop.f32.mrf.mxu0
        %v1821 = vadd.f32 %v1571, %v1820
        %v1822 = vpop.f32.mrf.mxu0
        %v1823 = vadd.f32 %v1567, %v1822
        %v1824 = vpop.f32.mrf.mxu0
        %v1825 = vadd.f32 %v1571, %v1824
        %1826 = vmatprep.mubr.bf16.mxu0 %v1560
        %1827 = vmatmul.mubr.bf16.gmra.mxu0 %v1559
        %v1828 = vpop.f32.mrf.mxu0
        %v1829 = vadd.f32 %v1567, %v1828
        %v1830 = vpop.f32.mrf.mxu0
        %v1831 = vadd.f32 %v1571, %v1830
        %v1832 = vpop.f32.mrf.mxu0
        %v1833 = vadd.f32 %v1567, %v1832
        %v1834 = vpop.f32.mrf.mxu0
        %v1835 = vadd.f32 %v1571, %v1834
        %1836 = vmatprep.mubr.bf16.mxu0 %v1562
        %1837 = vmatmul.mubr.bf16.gmra.mxu0 %v1561
        %v1838 = vpop.f32.mrf.mxu0
        %v1839 = vadd.f32 %v1567, %v1838
        %v1840 = vpop.f32.mrf.mxu0
        %v1841 = vadd.f32 %v1571, %v1840
        %v1842 = vpop.f32.mrf.mxu0
        %v1843 = vadd.f32 %v1567, %v1842
        %v1844 = vpop.f32.mrf.mxu0
        %v1845 = vadd.f32 %v1571, %v1844
        %1846 = vdwg.mxu0
        %v1847 = vmul.f32 %v1769, 0.5
        %v1848 = vmul.f32 %v1771, 0.5
        %v1849 = vmul.f32 %v1773, 0.5
        %v1850 = vmul.f32 %v1775, 0.5
        %v1851 = vmul.f32 %v1779, 0.5
        %v1852 = vmul.f32 %v1781, 0.5
        %v1853 = vmul.f32 %v1783, 0.5
        %v1854 = vmul.f32 %v1785, 0.5
        %v1855 = vmul.f32 %v1789, 0.5
        %v1856 = vmul.f32 %v1791, 0.5
        %v1857 = vmul.f32 %v1793, 0.5
        %v1858 = vmul.f32 %v1795, 0.5
        %v1859 = vmul.f32 %v1799, 0.5
        %v1860 = vmul.f32 %v1801, 0.5
        %v1861 = vmul.f32 %v1803, 0.5
        %v1862 = vmul.f32 %v1805, 0.5
        %v1863 = vmul.f32 %v1809, 0.5
        %v1864 = vmul.f32 %v1811, 0.5
        %v1865 = vmul.f32 %v1813, 0.5
        %v1866 = vmul.f32 %v1815, 0.5
        %v1867 = vmul.f32 %v1819, 0.5
        %v1868 = vmul.f32 %v1821, 0.5
        %v1869 = vmul.f32 %v1823, 0.5
        %v1870 = vmul.f32 %v1825, 0.5
        %v1871 = vmul.f32 %v1829, 0.5
        %v1872 = vmul.f32 %v1831, 0.5
        %v1873 = vmul.f32 %v1833, 0.5
        %v1874 = vmul.f32 %v1835, 0.5
        %v1875 = vmul.f32 %v1839, 0.5
        %v1876 = vmul.f32 %v1841, 0.5
        %v1877 = vmul.f32 %v1843, 0.5
        %v1878 = vmul.f32 %v1845, 0.5
        %v1879 = vtanh.pop %v1847
        %v1880 = vtanh.pop %v1848
        %v1881 = vtanh.pop %v1849
        %v1882 = vtanh.pop %v1850
        %v1883 = vtanh.pop %v1851
        %v1884 = vtanh.pop %v1852
        %v1885 = vtanh.pop %v1853
        %v1886 = vtanh.pop %v1854
        %v1887 = vtanh.pop %v1855
        %v1888 = vtanh.pop %v1856
        %v1889 = vtanh.pop %v1857
        %v1890 = vtanh.pop %v1858
        %v1891 = vtanh.pop %v1859
        %v1892 = vtanh.pop %v1860
        %v1893 = vtanh.pop %v1861
        %v1894 = vtanh.pop %v1862
        %v1895 = vtanh.pop %v1863
        %v1896 = vtanh.pop %v1864
        %v1897 = vtanh.pop %v1865
        %v1898 = vtanh.pop %v1866
        %v1899 = vtanh.pop %v1867
        %v1900 = vtanh.pop %v1868
        %v1901 = vtanh.pop %v1869
        %v1902 = vtanh.pop %v1870
        %v1903 = vtanh.pop %v1871
        %v1904 = vtanh.pop %v1872
        %v1905 = vtanh.pop %v1873
        %v1906 = vtanh.pop %v1874
        %v1907 = vtanh.pop %v1875
        %v1908 = vtanh.pop %v1876
        %v1909 = vtanh.pop %v1877
        %v1910 = vtanh.pop %v1878
        %v1911 = vadd.f32 %v1879, 1.0
        %v1912 = vadd.f32 %v1880, 1.0
        %v1913 = vadd.f32 %v1881, 1.0
        %v1914 = vadd.f32 %v1882, 1.0
        %v1915 = vadd.f32 %v1883, 1.0
        %v1916 = vadd.f32 %v1884, 1.0
        %v1917 = vadd.f32 %v1885, 1.0
        %v1918 = vadd.f32 %v1886, 1.0
        %v1919 = vadd.f32 %v1887, 1.0
        %v1920 = vadd.f32 %v1888, 1.0
        %v1921 = vadd.f32 %v1889, 1.0
        %v1922 = vadd.f32 %v1890, 1.0
        %v1923 = vadd.f32 %v1891, 1.0
        %v1924 = vadd.f32 %v1892, 1.0
        %v1925 = vadd.f32 %v1893, 1.0
        %v1926 = vadd.f32 %v1894, 1.0
        %v1927 = vadd.f32 %v1895, 1.0
        %v1928 = vadd.f32 %v1896, 1.0
        %v1929 = vadd.f32 %v1897, 1.0
        %v1930 = vadd.f32 %v1898, 1.0
        %v1931 = vadd.f32 %v1899, 1.0
        %v1932 = vadd.f32 %v1900, 1.0
        %v1933 = vadd.f32 %v1901, 1.0
        %v1934 = vadd.f32 %v1902, 1.0
        %v1935 = vadd.f32 %v1903, 1.0
        %v1936 = vadd.f32 %v1904, 1.0
        %v1937 = vadd.f32 %v1905, 1.0
        %v1938 = vadd.f32 %v1906, 1.0
        %v1939 = vadd.f32 %v1907, 1.0
        %v1940 = vadd.f32 %v1908, 1.0
        %v1941 = vadd.f32 %v1909, 1.0
        %v1942 = vadd.f32 %v1910, 1.0
        %v1943 = vmul.f32 %v1911, 0.5
        %v1944 = vmul.f32 %v1912, 0.5
        %v1945 = vmul.f32 %v1913, 0.5
        %v1946 = vmul.f32 %v1914, 0.5
        %v1947 = vmul.f32 %v1915, 0.5
        %v1948 = vmul.f32 %v1916, 0.5
        %v1949 = vmul.f32 %v1917, 0.5
        %v1950 = vmul.f32 %v1918, 0.5
        %v1951 = vmul.f32 %v1919, 0.5
        %v1952 = vmul.f32 %v1920, 0.5
        %v1953 = vmul.f32 %v1921, 0.5
        %v1954 = vmul.f32 %v1922, 0.5
        %v1955 = vmul.f32 %v1923, 0.5
        %v1956 = vmul.f32 %v1924, 0.5
        %v1957 = vmul.f32 %v1925, 0.5
        %v1958 = vmul.f32 %v1926, 0.5
        %v1959 = vmul.f32 %v1927, 0.5
        %v1960 = vmul.f32 %v1928, 0.5
        %v1961 = vmul.f32 %v1929, 0.5
        %v1962 = vmul.f32 %v1930, 0.5
        %v1963 = vmul.f32 %v1931, 0.5
        %v1964 = vmul.f32 %v1932, 0.5
        %v1965 = vmul.f32 %v1933, 0.5
        %v1966 = vmul.f32 %v1934, 0.5
        %v1967 = vmul.f32 %v1935, 0.5
        %v1968 = vmul.f32 %v1936, 0.5
        %v1969 = vmul.f32 %v1937, 0.5
        %v1970 = vmul.f32 %v1938, 0.5
        %v1971 = vmul.f32 %v1939, 0.5
        %v1972 = vmul.f32 %v1940, 0.5
        %v1973 = vmul.f32 %v1941, 0.5
        %v1974 = vmul.f32 %v1942, 0.5
        %v1976 = vlaneseq
        %v1977 = vshrl.u32 %v1976, 7
        %v1978 = vsub.s32 0, %v1977
        %v1979 = vrot.slane %v785, %v1978
        %v1980 = vlaneseq
        %v1981 = vshrl.u32 %v1980, 7
        %v1982 = vsub.s32 1, %v1981
        %v1983 = vrot.slane %v785, %v1982
        %v1986 = vmul.f32 %v1943, %v1979
        %v1987 = vmul.f32 %v1944, %v1983
        %v1988 = vmul.f32 %v1945, %v1979
        %v1989 = vmul.f32 %v1946, %v1983
        %v1990 = vmul.f32 %v1947, %v1979
        %v1991 = vmul.f32 %v1948, %v1983
        %v1992 = vmul.f32 %v1949, %v1979
        %v1993 = vmul.f32 %v1950, %v1983
        %v1994 = vmul.f32 %v1951, %v1979
        %v1995 = vmul.f32 %v1952, %v1983
        %v1996 = vmul.f32 %v1953, %v1979
        %v1997 = vmul.f32 %v1954, %v1983
        %v1998 = vmul.f32 %v1955, %v1979
        %v1999 = vmul.f32 %v1956, %v1983
        %v2000 = vmul.f32 %v1957, %v1979
        %v2001 = vmul.f32 %v1958, %v1983
        %v2002 = vmul.f32 %v1959, %v1979
        %v2003 = vmul.f32 %v1960, %v1983
        %v2004 = vmul.f32 %v1961, %v1979
        %v2005 = vmul.f32 %v1962, %v1983
        %v2006 = vmul.f32 %v1963, %v1979
        %v2007 = vmul.f32 %v1964, %v1983
        %v2008 = vmul.f32 %v1965, %v1979
        %v2009 = vmul.f32 %v1966, %v1983
        %v2010 = vmul.f32 %v1967, %v1979
        %v2011 = vmul.f32 %v1968, %v1983
        %v2012 = vmul.f32 %v1969, %v1979
        %v2013 = vmul.f32 %v1970, %v1983
        %v2014 = vmul.f32 %v1971, %v1979
        %v2015 = vmul.f32 %v1972, %v1983
        %v2016 = vmul.f32 %v1973, %v1979
        %v2017 = vmul.f32 %v1974, %v1983
        %v2018 = vpack.c.bf16 %v1988, %v1986
        %v2019 = vpack.c.bf16 %v1989, %v1987
        %v2020 = vpack.c.bf16 %v1992, %v1990
        %v2021 = vpack.c.bf16 %v1993, %v1991
        %v2022 = vpack.c.bf16 %v1996, %v1994
        %v2023 = vpack.c.bf16 %v1997, %v1995
        %v2024 = vpack.c.bf16 %v2000, %v1998
        %v2025 = vpack.c.bf16 %v2001, %v1999
        %v2026 = vpack.c.bf16 %v2004, %v2002
        %v2027 = vpack.c.bf16 %v2005, %v2003
        %v2028 = vpack.c.bf16 %v2008, %v2006
        %v2029 = vpack.c.bf16 %v2009, %v2007
        %v2030 = vpack.c.bf16 %v2012, %v2010
        %v2031 = vpack.c.bf16 %v2013, %v2011
        %v2032 = vpack.c.bf16 %v2016, %v2014
        %v2033 = vpack.c.bf16 %v2017, %v2015
        %v2066 = vunpack.c.l.b16 %v752
        %v2067 = vunpack.c.h.b16 %v752
        %v2068 = vunpack.c.l.b16 %v753
        %v2069 = vunpack.c.h.b16 %v753
        %v2070 = vunpack.c.l.b16 %v754
        %v2071 = vunpack.c.h.b16 %v754
        %v2072 = vunpack.c.l.b16 %v755
        %v2073 = vunpack.c.h.b16 %v755
        %v2074 = vunpack.c.l.b16 %v756
        %v2075 = vunpack.c.h.b16 %v756
        %v2076 = vunpack.c.l.b16 %v757
        %v2077 = vunpack.c.h.b16 %v757
        %v2078 = vunpack.c.l.b16 %v758
        %v2079 = vunpack.c.h.b16 %v758
        %v2080 = vunpack.c.l.b16 %v759
        %v2081 = vunpack.c.h.b16 %v759
        %v2082 = vunpack.c.l.b16 %v760
        %v2083 = vunpack.c.h.b16 %v760
        %v2084 = vunpack.c.l.b16 %v761
        %v2085 = vunpack.c.h.b16 %v761
        %v2086 = vunpack.c.l.b16 %v762
        %v2087 = vunpack.c.h.b16 %v762
        %v2088 = vunpack.c.l.b16 %v763
        %v2089 = vunpack.c.h.b16 %v763
        %v2090 = vunpack.c.l.b16 %v764
        %v2091 = vunpack.c.h.b16 %v764
        %v2092 = vunpack.c.l.b16 %v765
        %v2093 = vunpack.c.h.b16 %v765
        %v2094 = vunpack.c.l.b16 %v766
        %v2095 = vunpack.c.h.b16 %v766
        %v2096 = vunpack.c.l.b16 %v767
        %v2097 = vunpack.c.h.b16 %v767
        %v2098 = vunpack.c.l.b16 %v768
        %v2099 = vunpack.c.h.b16 %v768
        %v2100 = vunpack.c.l.b16 %v769
        %v2101 = vunpack.c.h.b16 %v769
        %v2102 = vunpack.c.l.b16 %v770
        %v2103 = vunpack.c.h.b16 %v770
        %v2104 = vunpack.c.l.b16 %v771
        %v2105 = vunpack.c.h.b16 %v771
        %v2106 = vunpack.c.l.b16 %v772
        %v2107 = vunpack.c.h.b16 %v772
        %v2108 = vunpack.c.l.b16 %v773
        %v2109 = vunpack.c.h.b16 %v773
        %v2110 = vunpack.c.l.b16 %v774
        %v2111 = vunpack.c.h.b16 %v774
        %v2112 = vunpack.c.l.b16 %v775
        %v2113 = vunpack.c.h.b16 %v775
        %v2114 = vunpack.c.l.b16 %v776
        %v2115 = vunpack.c.h.b16 %v776
        %v2116 = vunpack.c.l.b16 %v777
        %v2117 = vunpack.c.h.b16 %v777
        %v2118 = vunpack.c.l.b16 %v778
        %v2119 = vunpack.c.h.b16 %v778
        %v2120 = vunpack.c.l.b16 %v779
        %v2121 = vunpack.c.h.b16 %v779
        %v2122 = vunpack.c.l.b16 %v780
        %v2123 = vunpack.c.h.b16 %v780
        %v2124 = vunpack.c.l.b16 %v781
        %v2125 = vunpack.c.h.b16 %v781
        %v2126 = vunpack.c.l.b16 %v782
        %v2127 = vunpack.c.h.b16 %v782
        %v2128 = vunpack.c.l.b16 %v783
        %v2129 = vunpack.c.h.b16 %v783
        %v2130 = vpack.c.b16 %v2068, %v2066
        %v2131 = vpack.c.b16 %v2069, %v2067
        %v2132 = vpack.c.b16 %v2072, %v2070
        %v2133 = vpack.c.b16 %v2073, %v2071
        %v2134 = vpack.c.b16 %v2076, %v2074
        %v2135 = vpack.c.b16 %v2077, %v2075
        %v2136 = vpack.c.b16 %v2080, %v2078
        %v2137 = vpack.c.b16 %v2081, %v2079
        %v2138 = vpack.c.b16 %v2084, %v2082
        %v2139 = vpack.c.b16 %v2085, %v2083
        %v2140 = vpack.c.b16 %v2088, %v2086
        %v2141 = vpack.c.b16 %v2089, %v2087
        %v2142 = vpack.c.b16 %v2092, %v2090
        %v2143 = vpack.c.b16 %v2093, %v2091
        %v2144 = vpack.c.b16 %v2096, %v2094
        %v2145 = vpack.c.b16 %v2097, %v2095
        %v2146 = vpack.c.b16 %v2100, %v2098
        %v2147 = vpack.c.b16 %v2101, %v2099
        %v2148 = vpack.c.b16 %v2104, %v2102
        %v2149 = vpack.c.b16 %v2105, %v2103
        %v2150 = vpack.c.b16 %v2108, %v2106
        %v2151 = vpack.c.b16 %v2109, %v2107
        %v2152 = vpack.c.b16 %v2112, %v2110
        %v2153 = vpack.c.b16 %v2113, %v2111
        %v2154 = vpack.c.b16 %v2116, %v2114
        %v2155 = vpack.c.b16 %v2117, %v2115
        %v2156 = vpack.c.b16 %v2120, %v2118
        %v2157 = vpack.c.b16 %v2121, %v2119
        %v2158 = vpack.c.b16 %v2124, %v2122
        %v2159 = vpack.c.b16 %v2125, %v2123
        %v2160 = vpack.c.b16 %v2128, %v2126
        %v2161 = vpack.c.b16 %v2129, %v2127
        %2194 = vmatprep.subr.bf16.mxu0 %v2145
        %2195 = vmatpush1.bf16.msra.mxu0 %v2144
        %2196 = vmatprep.subr.bf16.mxu0 %v2143
        %2197 = vmatpush1.bf16.msra.mxu0 %v2142
        %2198 = vmatprep.subr.bf16.mxu0 %v2141
        %2199 = vmatpush1.bf16.msra.mxu0 %v2140
        %2200 = vmatprep.subr.bf16.mxu0 %v2139
        %2201 = vmatpush1.bf16.msra.mxu0 %v2138
        %2202 = vmatprep.subr.bf16.mxu0 %v2137
        %2203 = vmatpush1.bf16.msra.mxu0 %v2136
        %2204 = vmatprep.subr.bf16.mxu0 %v2135
        %2205 = vmatpush1.bf16.msra.mxu0 %v2134
        %2206 = vmatprep.subr.bf16.mxu0 %v2133
        %2207 = vmatpush1.bf16.msra.mxu0 %v2132
        %2208 = vmatprep.subr.bf16.mxu0 %v2131
        %2209 = vmatpush1.bf16.msra.mxu0 %v2130
        %2210 = vmatprep.subr.bf16.mxu0 %v2161
        %2211 = vmatpush2.bf16.msra.mxu0 %v2160
        %2212 = vmatprep.subr.bf16.mxu0 %v2159
        %2213 = vmatpush2.bf16.msra.mxu0 %v2158
        %2214 = vmatprep.subr.bf16.mxu0 %v2157
        %2215 = vmatpush2.bf16.msra.mxu0 %v2156
        %2216 = vmatprep.subr.bf16.mxu0 %v2155
        %2217 = vmatpush2.bf16.msra.mxu0 %v2154
        %2218 = vmatprep.subr.bf16.mxu0 %v2153
        %2219 = vmatpush2.bf16.msra.mxu0 %v2152
        %2220 = vmatprep.subr.bf16.mxu0 %v2151
        %2221 = vmatpush2.bf16.msra.mxu0 %v2150
        %2222 = vmatprep.subr.bf16.mxu0 %v2149
        %2223 = vmatpush2.bf16.msra.mxu0 %v2148
        %2224 = vmatprep.subr.bf16.mxu0 %v2147
        %2225 = vmatpush2.bf16.msra.mxu0 %v2146
        %2226 = vmatprep.mubr.bf16.mxu0 %v2019
        %2227 = vmatmul.mubr.bf16.gmra.mxu0 %v2018
        %v2228 = vpop.f32.mrf.mxu0
        %v2229 = vadd.f32 0.0, %v2228
        %v2230 = vpop.f32.mrf.mxu0
        %v2231 = vadd.f32 0.0, %v2230
        %v2232 = vpop.f32.mrf.mxu0
        %v2233 = vadd.f32 0.0, %v2232
        %v2234 = vpop.f32.mrf.mxu0
        %v2235 = vadd.f32 0.0, %v2234
        %2236 = vmatprep.mubr.bf16.mxu0 %v2021
        %2237 = vmatmul.mubr.bf16.gmra.mxu0 %v2020
        %v2238 = vpop.f32.mrf.mxu0
        %v2239 = vadd.f32 0.0, %v2238
        %v2240 = vpop.f32.mrf.mxu0
        %v2241 = vadd.f32 0.0, %v2240
        %v2242 = vpop.f32.mrf.mxu0
        %v2243 = vadd.f32 0.0, %v2242
        %v2244 = vpop.f32.mrf.mxu0
        %v2245 = vadd.f32 0.0, %v2244
        %2246 = vmatprep.mubr.bf16.mxu0 %v2023
        %2247 = vmatmul.mubr.bf16.gmra.mxu0 %v2022
        %v2248 = vpop.f32.mrf.mxu0
        %v2249 = vadd.f32 0.0, %v2248
        %v2250 = vpop.f32.mrf.mxu0
        %v2251 = vadd.f32 0.0, %v2250
        %v2252 = vpop.f32.mrf.mxu0
        %v2253 = vadd.f32 0.0, %v2252
        %v2254 = vpop.f32.mrf.mxu0
        %v2255 = vadd.f32 0.0, %v2254
        %2256 = vmatprep.mubr.bf16.mxu0 %v2025
        %2257 = vmatmul.mubr.bf16.gmra.mxu0 %v2024
        %v2258 = vpop.f32.mrf.mxu0
        %v2259 = vadd.f32 0.0, %v2258
        %v2260 = vpop.f32.mrf.mxu0
        %v2261 = vadd.f32 0.0, %v2260
        %v2262 = vpop.f32.mrf.mxu0
        %v2263 = vadd.f32 0.0, %v2262
        %v2264 = vpop.f32.mrf.mxu0
        %v2265 = vadd.f32 0.0, %v2264
        %2266 = vmatprep.mubr.bf16.mxu0 %v2027
        %2267 = vmatmul.mubr.bf16.gmra.mxu0 %v2026
        %v2268 = vpop.f32.mrf.mxu0
        %v2269 = vadd.f32 0.0, %v2268
        %v2270 = vpop.f32.mrf.mxu0
        %v2271 = vadd.f32 0.0, %v2270
        %v2272 = vpop.f32.mrf.mxu0
        %v2273 = vadd.f32 0.0, %v2272
        %v2274 = vpop.f32.mrf.mxu0
        %v2275 = vadd.f32 0.0, %v2274
        %2276 = vmatprep.mubr.bf16.mxu0 %v2029
        %2277 = vmatmul.mubr.bf16.gmra.mxu0 %v2028
        %v2278 = vpop.f32.mrf.mxu0
        %v2279 = vadd.f32 0.0, %v2278
        %v2280 = vpop.f32.mrf.mxu0
        %v2281 = vadd.f32 0.0, %v2280
        %v2282 = vpop.f32.mrf.mxu0
        %v2283 = vadd.f32 0.0, %v2282
        %v2284 = vpop.f32.mrf.mxu0
        %v2285 = vadd.f32 0.0, %v2284
        %2286 = vmatprep.mubr.bf16.mxu0 %v2031
        %2287 = vmatmul.mubr.bf16.gmra.mxu0 %v2030
        %v2288 = vpop.f32.mrf.mxu0
        %v2289 = vadd.f32 0.0, %v2288
        %v2290 = vpop.f32.mrf.mxu0
        %v2291 = vadd.f32 0.0, %v2290
        %v2292 = vpop.f32.mrf.mxu0
        %v2293 = vadd.f32 0.0, %v2292
        %v2294 = vpop.f32.mrf.mxu0
        %v2295 = vadd.f32 0.0, %v2294
        %2296 = vmatprep.mubr.bf16.mxu0 %v2033
        %2297 = vmatmul.mubr.bf16.gmra.mxu0 %v2032
        %v2298 = vpop.f32.mrf.mxu0
        %v2299 = vadd.f32 0.0, %v2298
        %v2300 = vpop.f32.mrf.mxu0
        %v2301 = vadd.f32 0.0, %v2300
        %v2302 = vpop.f32.mrf.mxu0
        %v2303 = vadd.f32 0.0, %v2302
        %v2304 = vpop.f32.mrf.mxu0
        %v2305 = vadd.f32 0.0, %v2304
        %2306 = vdwg.mxu0
        %v2307 = vmul.f32 %v2229, %v1227
        %v2308 = vmul.f32 %v2231, %v1228
        %v2309 = vmul.f32 %v2233, %v1229
        %v2310 = vmul.f32 %v2235, %v1230
        %v2311 = vmul.f32 %v2239, %v1231
        %v2312 = vmul.f32 %v2241, %v1232
        %v2313 = vmul.f32 %v2243, %v1233
        %v2314 = vmul.f32 %v2245, %v1234
        %v2315 = vmul.f32 %v2249, %v1235
        %v2316 = vmul.f32 %v2251, %v1236
        %v2317 = vmul.f32 %v2253, %v1237
        %v2318 = vmul.f32 %v2255, %v1238
        %v2319 = vmul.f32 %v2259, %v1239
        %v2320 = vmul.f32 %v2261, %v1240
        %v2321 = vmul.f32 %v2263, %v1241
        %v2322 = vmul.f32 %v2265, %v1242
        %v2323 = vmul.f32 %v2269, %v1243
        %v2324 = vmul.f32 %v2271, %v1244
        %v2325 = vmul.f32 %v2273, %v1245
        %v2326 = vmul.f32 %v2275, %v1246
        %v2327 = vmul.f32 %v2279, %v1247
        %v2328 = vmul.f32 %v2281, %v1248
        %v2329 = vmul.f32 %v2283, %v1249
        %v2330 = vmul.f32 %v2285, %v1250
        %v2331 = vmul.f32 %v2289, %v1251
        %v2332 = vmul.f32 %v2291, %v1252
        %v2333 = vmul.f32 %v2293, %v1253
        %v2334 = vmul.f32 %v2295, %v1254
        %v2335 = vmul.f32 %v2299, %v1255
        %v2336 = vmul.f32 %v2301, %v1256
        %v2337 = vmul.f32 %v2303, %v1257
        %v2338 = vmul.f32 %v2305, %v1258
        %v2339 = vpack.c.bf16 %v2309, %v2307
        %v2340 = vpack.c.bf16 %v2310, %v2308
        %v2341 = vpack.c.bf16 %v2313, %v2311
        %v2342 = vpack.c.bf16 %v2314, %v2312
        %v2343 = vpack.c.bf16 %v2317, %v2315
        %v2344 = vpack.c.bf16 %v2318, %v2316
        %v2345 = vpack.c.bf16 %v2321, %v2319
        %v2346 = vpack.c.bf16 %v2322, %v2320
        %v2347 = vpack.c.bf16 %v2325, %v2323
        %v2348 = vpack.c.bf16 %v2326, %v2324
        %v2349 = vpack.c.bf16 %v2329, %v2327
        %v2350 = vpack.c.bf16 %v2330, %v2328
        %v2351 = vpack.c.bf16 %v2333, %v2331
        %v2352 = vpack.c.bf16 %v2334, %v2332
        %v2353 = vpack.c.bf16 %v2337, %v2335
        %v2354 = vpack.c.bf16 %v2338, %v2336
        %v2387 = vunpack.c.l.b16 %v687
        %v2388 = vunpack.c.l.b16 %v688
        %v2389 = vunpack.c.l.b16 %v689
        %v2390 = vunpack.c.l.b16 %v690
        %v2391 = vunpack.c.l.b16 %v691
        %v2392 = vunpack.c.l.b16 %v692
        %v2393 = vunpack.c.l.b16 %v693
        %v2394 = vunpack.c.l.b16 %v694
        %v2395 = vunpack.c.l.b16 %v695
        %v2396 = vunpack.c.l.b16 %v696
        %v2397 = vunpack.c.l.b16 %v697
        %v2398 = vunpack.c.l.b16 %v698
        %v2399 = vunpack.c.l.b16 %v699
        %v2400 = vunpack.c.l.b16 %v700
        %v2401 = vunpack.c.l.b16 %v701
        %v2402 = vunpack.c.l.b16 %v702
        %v2403 = vunpack.c.l.b16 %v703
        %v2404 = vunpack.c.l.b16 %v704
        %v2405 = vunpack.c.l.b16 %v705
        %v2406 = vunpack.c.l.b16 %v706
        %v2407 = vunpack.c.l.b16 %v707
        %v2408 = vunpack.c.l.b16 %v708
        %v2409 = vunpack.c.l.b16 %v709
        %v2410 = vunpack.c.l.b16 %v710
        %v2411 = vunpack.c.l.b16 %v711
        %v2412 = vunpack.c.l.b16 %v712
        %v2413 = vunpack.c.l.b16 %v713
        %v2414 = vunpack.c.l.b16 %v714
        %v2415 = vunpack.c.l.b16 %v715
        %v2416 = vunpack.c.l.b16 %v716
        %v2417 = vunpack.c.l.b16 %v717
        %v2418 = vunpack.c.l.b16 %v718
        %v2419 = vpack.c.b16 %v2388, %v2387
        %v2420 = vpack.c.b16 %v2390, %v2389
        %v2421 = vpack.c.b16 %v2392, %v2391
        %v2422 = vpack.c.b16 %v2394, %v2393
        %v2423 = vpack.c.b16 %v2396, %v2395
        %v2424 = vpack.c.b16 %v2398, %v2397
        %v2425 = vpack.c.b16 %v2400, %v2399
        %v2426 = vpack.c.b16 %v2402, %v2401
        %v2427 = vpack.c.b16 %v2404, %v2403
        %v2428 = vpack.c.b16 %v2406, %v2405
        %v2429 = vpack.c.b16 %v2408, %v2407
        %v2430 = vpack.c.b16 %v2410, %v2409
        %v2431 = vpack.c.b16 %v2412, %v2411
        %v2432 = vpack.c.b16 %v2414, %v2413
        %v2433 = vpack.c.b16 %v2416, %v2415
        %v2434 = vpack.c.b16 %v2418, %v2417
        %2451 = vmatprep.subr.bf16.mxu0 0
        %2452 = vmatpush1.bf16.msra.mxu0 %v2426
        %2453 = vmatprep.subr.bf16.mxu0 0
        %2454 = vmatpush1.bf16.msra.mxu0 %v2425
        %2455 = vmatprep.subr.bf16.mxu0 0
        %2456 = vmatpush1.bf16.msra.mxu0 %v2424
        %2457 = vmatprep.subr.bf16.mxu0 0
        %2458 = vmatpush1.bf16.msra.mxu0 %v2423
        %2459 = vmatprep.subr.bf16.mxu0 0
        %2460 = vmatpush1.bf16.msra.mxu0 %v2422
        %2461 = vmatprep.subr.bf16.mxu0 0
        %2462 = vmatpush1.bf16.msra.mxu0 %v2421
        %2463 = vmatprep.subr.bf16.mxu0 0
        %2464 = vmatpush1.bf16.msra.mxu0 %v2420
        %2465 = vmatprep.subr.bf16.mxu0 0
        %2466 = vmatpush1.bf16.msra.mxu0 %v2419
        %2467 = vmatprep.subr.bf16.mxu0 0
        %2468 = vmatpush2.bf16.msra.mxu0 %v2434
        %2469 = vmatprep.subr.bf16.mxu0 0
        %2470 = vmatpush2.bf16.msra.mxu0 %v2433
        %2471 = vmatprep.subr.bf16.mxu0 0
        %2472 = vmatpush2.bf16.msra.mxu0 %v2432
        %2473 = vmatprep.subr.bf16.mxu0 0
        %2474 = vmatpush2.bf16.msra.mxu0 %v2431
        %2475 = vmatprep.subr.bf16.mxu0 0
        %2476 = vmatpush2.bf16.msra.mxu0 %v2430
        %2477 = vmatprep.subr.bf16.mxu0 0
        %2478 = vmatpush2.bf16.msra.mxu0 %v2429
        %2479 = vmatprep.subr.bf16.mxu0 0
        %2480 = vmatpush2.bf16.msra.mxu0 %v2428
        %2481 = vmatprep.subr.bf16.mxu0 0
        %2482 = vmatpush2.bf16.msra.mxu0 %v2427
        %2483 = vmatprep.mubr.bf16.mxu0 %v2340
        %2484 = vmatmul.mubr.bf16.gmra.mxu0 %v2339
        %v2485 = vpop.f32.mrf.mxu0
        %v2486 = vadd.f32 0.0, %v2485
        %v2487 = vpop.f32.mrf.mxu0
        %v2488 = vpop.f32.mrf.mxu0
        %v2489 = vadd.f32 0.0, %v2488
        %v2490 = vpop.f32.mrf.mxu0
        %2491 = vmatprep.mubr.bf16.mxu0 %v2342
        %2492 = vmatmul.mubr.bf16.gmra.mxu0 %v2341
        %v2493 = vpop.f32.mrf.mxu0
        %v2494 = vadd.f32 0.0, %v2493
        %v2495 = vpop.f32.mrf.mxu0
        %v2496 = vpop.f32.mrf.mxu0
        %v2497 = vadd.f32 0.0, %v2496
        %v2498 = vpop.f32.mrf.mxu0
        %2499 = vmatprep.mubr.bf16.mxu0 %v2344
        %2500 = vmatmul.mubr.bf16.gmra.mxu0 %v2343
        %v2501 = vpop.f32.mrf.mxu0
        %v2502 = vadd.f32 0.0, %v2501
        %v2503 = vpop.f32.mrf.mxu0
        %v2504 = vpop.f32.mrf.mxu0
        %v2505 = vadd.f32 0.0, %v2504
        %v2506 = vpop.f32.mrf.mxu0
        %2507 = vmatprep.mubr.bf16.mxu0 %v2346
        %2508 = vmatmul.mubr.bf16.gmra.mxu0 %v2345
        %v2509 = vpop.f32.mrf.mxu0
        %v2510 = vadd.f32 0.0, %v2509
        %v2511 = vpop.f32.mrf.mxu0
        %v2512 = vpop.f32.mrf.mxu0
        %v2513 = vadd.f32 0.0, %v2512
        %v2514 = vpop.f32.mrf.mxu0
        %2515 = vmatprep.mubr.bf16.mxu0 %v2348
        %2516 = vmatmul.mubr.bf16.gmra.mxu0 %v2347
        %v2517 = vpop.f32.mrf.mxu0
        %v2518 = vadd.f32 0.0, %v2517
        %v2519 = vpop.f32.mrf.mxu0
        %v2520 = vpop.f32.mrf.mxu0
        %v2521 = vadd.f32 0.0, %v2520
        %v2522 = vpop.f32.mrf.mxu0
        %2523 = vmatprep.mubr.bf16.mxu0 %v2350
        %2524 = vmatmul.mubr.bf16.gmra.mxu0 %v2349
        %v2525 = vpop.f32.mrf.mxu0
        %v2526 = vadd.f32 0.0, %v2525
        %v2527 = vpop.f32.mrf.mxu0
        %v2528 = vpop.f32.mrf.mxu0
        %v2529 = vadd.f32 0.0, %v2528
        %v2530 = vpop.f32.mrf.mxu0
        %2531 = vmatprep.mubr.bf16.mxu0 %v2352
        %2532 = vmatmul.mubr.bf16.gmra.mxu0 %v2351
        %v2533 = vpop.f32.mrf.mxu0
        %v2534 = vadd.f32 0.0, %v2533
        %v2535 = vpop.f32.mrf.mxu0
        %v2536 = vpop.f32.mrf.mxu0
        %v2537 = vadd.f32 0.0, %v2536
        %v2538 = vpop.f32.mrf.mxu0
        %2539 = vmatprep.mubr.bf16.mxu0 %v2354
        %2540 = vmatmul.mubr.bf16.gmra.mxu0 %v2353
        %v2541 = vpop.f32.mrf.mxu0
        %v2542 = vadd.f32 0.0, %v2541
        %v2543 = vpop.f32.mrf.mxu0
        %v2544 = vpop.f32.mrf.mxu0
        %v2545 = vadd.f32 0.0, %v2544
        %v2546 = vpop.f32.mrf.mxu0
        %2547 = vdwg.mxu0
        %v2549 = vlaneseq
        %v2550 = vshrl.u32 %v2549, 7
        %v2551 = vsub.s32 0, %v2550
        %v2552 = vrot.slane %v834, %v2551
        %v2553 = vlaneseq
        %v2554 = vshrl.u32 %v2553, 7
        %v2555 = vsub.s32 1, %v2554
        %v2556 = vrot.slane %v834, %v2555
        %v2575 = vunpack.c.l.b16 %v786
        %v2576 = vunpack.c.h.b16 %v786
        %v2577 = vunpack.c.l.b16 %v787
        %v2578 = vunpack.c.h.b16 %v787
        %v2579 = vunpack.c.l.b16 %v788
        %v2580 = vunpack.c.h.b16 %v788
        %v2581 = vunpack.c.l.b16 %v789
        %v2582 = vunpack.c.h.b16 %v789
        %v2583 = vunpack.c.l.b16 %v790
        %v2584 = vunpack.c.h.b16 %v790
        %v2585 = vunpack.c.l.b16 %v791
        %v2586 = vunpack.c.h.b16 %v791
        %v2587 = vunpack.c.l.b16 %v792
        %v2588 = vunpack.c.h.b16 %v792
        %v2589 = vunpack.c.l.b16 %v793
        %v2590 = vunpack.c.h.b16 %v793
        %v2591 = vunpack.c.l.b16 %v794
        %v2592 = vunpack.c.h.b16 %v794
        %v2593 = vunpack.c.l.b16 %v795
        %v2594 = vunpack.c.h.b16 %v795
        %v2595 = vunpack.c.l.b16 %v796
        %v2596 = vunpack.c.h.b16 %v796
        %v2597 = vunpack.c.l.b16 %v797
        %v2598 = vunpack.c.h.b16 %v797
        %v2599 = vunpack.c.l.b16 %v798
        %v2600 = vunpack.c.h.b16 %v798
        %v2601 = vunpack.c.l.b16 %v799
        %v2602 = vunpack.c.h.b16 %v799
        %v2603 = vunpack.c.l.b16 %v800
        %v2604 = vunpack.c.h.b16 %v800
        %v2605 = vunpack.c.l.b16 %v801
        %v2606 = vunpack.c.h.b16 %v801
        %v2607 = vpack.c.b16 %v2577, %v2575
        %v2608 = vpack.c.b16 %v2578, %v2576
        %v2609 = vpack.c.b16 %v2581, %v2579
        %v2610 = vpack.c.b16 %v2582, %v2580
        %v2611 = vpack.c.b16 %v2585, %v2583
        %v2612 = vpack.c.b16 %v2586, %v2584
        %v2613 = vpack.c.b16 %v2589, %v2587
        %v2614 = vpack.c.b16 %v2590, %v2588
        %v2615 = vpack.c.b16 %v2593, %v2591
        %v2616 = vpack.c.b16 %v2594, %v2592
        %v2617 = vpack.c.b16 %v2597, %v2595
        %v2618 = vpack.c.b16 %v2598, %v2596
        %v2619 = vpack.c.b16 %v2601, %v2599
        %v2620 = vpack.c.b16 %v2602, %v2600
        %v2621 = vpack.c.b16 %v2605, %v2603
        %v2622 = vpack.c.b16 %v2606, %v2604
        %2639 = vmatprep.subr.bf16.mxu0 %v2622
        %2640 = vmatpush1.bf16.msra.mxu0 %v2621
        %2641 = vmatprep.subr.bf16.mxu0 %v2620
        %2642 = vmatpush1.bf16.msra.mxu0 %v2619
        %2643 = vmatprep.subr.bf16.mxu0 %v2618
        %2644 = vmatpush1.bf16.msra.mxu0 %v2617
        %2645 = vmatprep.subr.bf16.mxu0 %v2616
        %2646 = vmatpush1.bf16.msra.mxu0 %v2615
        %2647 = vmatprep.subr.bf16.mxu0 %v2614
        %2648 = vmatpush1.bf16.msra.mxu0 %v2613
        %2649 = vmatprep.subr.bf16.mxu0 %v2612
        %2650 = vmatpush1.bf16.msra.mxu0 %v2611
        %2651 = vmatprep.subr.bf16.mxu0 %v2610
        %2652 = vmatpush1.bf16.msra.mxu0 %v2609
        %2653 = vmatprep.subr.bf16.mxu0 %v2608
        %2654 = vmatpush1.bf16.msra.mxu0 %v2607
        %2655 = vmatprep.subr.bf16.mxu0 0
        %2656 = vmatpush2.bf16.msra.mxu0 0
        %2657 = vmatprep.subr.bf16.mxu0 0
        %2658 = vmatpush2.bf16.msra.mxu0 0
        %2659 = vmatprep.subr.bf16.mxu0 0
        %2660 = vmatpush2.bf16.msra.mxu0 0
        %2661 = vmatprep.subr.bf16.mxu0 0
        %2662 = vmatpush2.bf16.msra.mxu0 0
        %2663 = vmatprep.subr.bf16.mxu0 0
        %2664 = vmatpush2.bf16.msra.mxu0 0
        %2665 = vmatprep.subr.bf16.mxu0 0
        %2666 = vmatpush2.bf16.msra.mxu0 0
        %2667 = vmatprep.subr.bf16.mxu0 0
        %2668 = vmatpush2.bf16.msra.mxu0 0
        %2669 = vmatprep.subr.bf16.mxu0 0
        %2670 = vmatpush2.bf16.msra.mxu0 0
        %2671 = vmatprep.mubr.bf16.mxu0 0
        %2672 = vmatmul.mubr.bf16.gmra.mxu0 %v919
        %v2673 = vpop.f32.mrf.mxu0
        %v2674 = vadd.f32 %v2552, %v2673
        %v2675 = vpop.f32.mrf.mxu0
        %v2676 = vadd.f32 %v2556, %v2675
        %v2677 = vpop.f32.mrf.mxu0
        %v2678 = vadd.f32 %v2552, %v2677
        %v2679 = vpop.f32.mrf.mxu0
        %v2680 = vadd.f32 %v2556, %v2679
        %2681 = vmatprep.mubr.bf16.mxu0 0
        %2682 = vmatmul.mubr.bf16.gmra.mxu0 %v920
        %v2683 = vpop.f32.mrf.mxu0
        %v2684 = vadd.f32 %v2552, %v2683
        %v2685 = vpop.f32.mrf.mxu0
        %v2686 = vadd.f32 %v2556, %v2685
        %v2687 = vpop.f32.mrf.mxu0
        %v2688 = vadd.f32 %v2552, %v2687
        %v2689 = vpop.f32.mrf.mxu0
        %v2690 = vadd.f32 %v2556, %v2689
        %2691 = vmatprep.mubr.bf16.mxu0 0
        %2692 = vmatmul.mubr.bf16.gmra.mxu0 %v921
        %v2693 = vpop.f32.mrf.mxu0
        %v2694 = vadd.f32 %v2552, %v2693
        %v2695 = vpop.f32.mrf.mxu0
        %v2696 = vadd.f32 %v2556, %v2695
        %v2697 = vpop.f32.mrf.mxu0
        %v2698 = vadd.f32 %v2552, %v2697
        %v2699 = vpop.f32.mrf.mxu0
        %v2700 = vadd.f32 %v2556, %v2699
        %2701 = vmatprep.mubr.bf16.mxu0 0
        %2702 = vmatmul.mubr.bf16.gmra.mxu0 %v922
        %v2703 = vpop.f32.mrf.mxu0
        %v2704 = vadd.f32 %v2552, %v2703
        %v2705 = vpop.f32.mrf.mxu0
        %v2706 = vadd.f32 %v2556, %v2705
        %v2707 = vpop.f32.mrf.mxu0
        %v2708 = vadd.f32 %v2552, %v2707
        %v2709 = vpop.f32.mrf.mxu0
        %v2710 = vadd.f32 %v2556, %v2709
        %2711 = vmatprep.mubr.bf16.mxu0 0
        %2712 = vmatmul.mubr.bf16.gmra.mxu0 %v923
        %v2713 = vpop.f32.mrf.mxu0
        %v2714 = vadd.f32 %v2552, %v2713
        %v2715 = vpop.f32.mrf.mxu0
        %v2716 = vadd.f32 %v2556, %v2715
        %v2717 = vpop.f32.mrf.mxu0
        %v2718 = vadd.f32 %v2552, %v2717
        %v2719 = vpop.f32.mrf.mxu0
        %v2720 = vadd.f32 %v2556, %v2719
        %2721 = vmatprep.mubr.bf16.mxu0 0
        %2722 = vmatmul.mubr.bf16.gmra.mxu0 %v924
        %v2723 = vpop.f32.mrf.mxu0
        %v2724 = vadd.f32 %v2552, %v2723
        %v2725 = vpop.f32.mrf.mxu0
        %v2726 = vadd.f32 %v2556, %v2725
        %v2727 = vpop.f32.mrf.mxu0
        %v2728 = vadd.f32 %v2552, %v2727
        %v2729 = vpop.f32.mrf.mxu0
        %v2730 = vadd.f32 %v2556, %v2729
        %2731 = vmatprep.mubr.bf16.mxu0 0
        %2732 = vmatmul.mubr.bf16.gmra.mxu0 %v925
        %v2733 = vpop.f32.mrf.mxu0
        %v2734 = vadd.f32 %v2552, %v2733
        %v2735 = vpop.f32.mrf.mxu0
        %v2736 = vadd.f32 %v2556, %v2735
        %v2737 = vpop.f32.mrf.mxu0
        %v2738 = vadd.f32 %v2552, %v2737
        %v2739 = vpop.f32.mrf.mxu0
        %v2740 = vadd.f32 %v2556, %v2739
        %2741 = vmatprep.mubr.bf16.mxu0 0
        %2742 = vmatmul.mubr.bf16.gmra.mxu0 %v926
        %v2743 = vpop.f32.mrf.mxu0
        %v2744 = vadd.f32 %v2552, %v2743
        %v2745 = vpop.f32.mrf.mxu0
        %v2746 = vadd.f32 %v2556, %v2745
        %v2747 = vpop.f32.mrf.mxu0
        %v2748 = vadd.f32 %v2552, %v2747
        %v2749 = vpop.f32.mrf.mxu0
        %v2750 = vadd.f32 %v2556, %v2749
        %2751 = vdwg.mxu0
        %v2752 = vmul.f32 %v2674, 0.5
        %v2753 = vmul.f32 %v2676, 0.5
        %v2754 = vmul.f32 %v2678, 0.5
        %v2755 = vmul.f32 %v2680, 0.5
        %v2756 = vmul.f32 %v2684, 0.5
        %v2757 = vmul.f32 %v2686, 0.5
        %v2758 = vmul.f32 %v2688, 0.5
        %v2759 = vmul.f32 %v2690, 0.5
        %v2760 = vmul.f32 %v2694, 0.5
        %v2761 = vmul.f32 %v2696, 0.5
        %v2762 = vmul.f32 %v2698, 0.5
        %v2763 = vmul.f32 %v2700, 0.5
        %v2764 = vmul.f32 %v2704, 0.5
        %v2765 = vmul.f32 %v2706, 0.5
        %v2766 = vmul.f32 %v2708, 0.5
        %v2767 = vmul.f32 %v2710, 0.5
        %v2768 = vmul.f32 %v2714, 0.5
        %v2769 = vmul.f32 %v2716, 0.5
        %v2770 = vmul.f32 %v2718, 0.5
        %v2771 = vmul.f32 %v2720, 0.5
        %v2772 = vmul.f32 %v2724, 0.5
        %v2773 = vmul.f32 %v2726, 0.5
        %v2774 = vmul.f32 %v2728, 0.5
        %v2775 = vmul.f32 %v2730, 0.5
        %v2776 = vmul.f32 %v2734, 0.5
        %v2777 = vmul.f32 %v2736, 0.5
        %v2778 = vmul.f32 %v2738, 0.5
        %v2779 = vmul.f32 %v2740, 0.5
        %v2780 = vmul.f32 %v2744, 0.5
        %v2781 = vmul.f32 %v2746, 0.5
        %v2782 = vmul.f32 %v2748, 0.5
        %v2783 = vmul.f32 %v2750, 0.5
        %v2784 = vtanh.pop %v2752
        %v2785 = vtanh.pop %v2753
        %v2786 = vtanh.pop %v2754
        %v2787 = vtanh.pop %v2755
        %v2788 = vtanh.pop %v2756
        %v2789 = vtanh.pop %v2757
        %v2790 = vtanh.pop %v2758
        %v2791 = vtanh.pop %v2759
        %v2792 = vtanh.pop %v2760
        %v2793 = vtanh.pop %v2761
        %v2794 = vtanh.pop %v2762
        %v2795 = vtanh.pop %v2763
        %v2796 = vtanh.pop %v2764
        %v2797 = vtanh.pop %v2765
        %v2798 = vtanh.pop %v2766
        %v2799 = vtanh.pop %v2767
        %v2800 = vtanh.pop %v2768
        %v2801 = vtanh.pop %v2769
        %v2802 = vtanh.pop %v2770
        %v2803 = vtanh.pop %v2771
        %v2804 = vtanh.pop %v2772
        %v2805 = vtanh.pop %v2773
        %v2806 = vtanh.pop %v2774
        %v2807 = vtanh.pop %v2775
        %v2808 = vtanh.pop %v2776
        %v2809 = vtanh.pop %v2777
        %v2810 = vtanh.pop %v2778
        %v2811 = vtanh.pop %v2779
        %v2812 = vtanh.pop %v2780
        %v2813 = vtanh.pop %v2781
        %v2814 = vtanh.pop %v2782
        %v2815 = vtanh.pop %v2783
        %v2816 = vadd.f32 %v2784, 1.0
        %v2817 = vadd.f32 %v2785, 1.0
        %v2818 = vadd.f32 %v2786, 1.0
        %v2819 = vadd.f32 %v2787, 1.0
        %v2820 = vadd.f32 %v2788, 1.0
        %v2821 = vadd.f32 %v2789, 1.0
        %v2822 = vadd.f32 %v2790, 1.0
        %v2823 = vadd.f32 %v2791, 1.0
        %v2824 = vadd.f32 %v2792, 1.0
        %v2825 = vadd.f32 %v2793, 1.0
        %v2826 = vadd.f32 %v2794, 1.0
        %v2827 = vadd.f32 %v2795, 1.0
        %v2828 = vadd.f32 %v2796, 1.0
        %v2829 = vadd.f32 %v2797, 1.0
        %v2830 = vadd.f32 %v2798, 1.0
        %v2831 = vadd.f32 %v2799, 1.0
        %v2832 = vadd.f32 %v2800, 1.0
        %v2833 = vadd.f32 %v2801, 1.0
        %v2834 = vadd.f32 %v2802, 1.0
        %v2835 = vadd.f32 %v2803, 1.0
        %v2836 = vadd.f32 %v2804, 1.0
        %v2837 = vadd.f32 %v2805, 1.0
        %v2838 = vadd.f32 %v2806, 1.0
        %v2839 = vadd.f32 %v2807, 1.0
        %v2840 = vadd.f32 %v2808, 1.0
        %v2841 = vadd.f32 %v2809, 1.0
        %v2842 = vadd.f32 %v2810, 1.0
        %v2843 = vadd.f32 %v2811, 1.0
        %v2844 = vadd.f32 %v2812, 1.0
        %v2845 = vadd.f32 %v2813, 1.0
        %v2846 = vadd.f32 %v2814, 1.0
        %v2847 = vadd.f32 %v2815, 1.0
        %v2848 = vmul.f32 %v2816, 0.5
        %v2849 = vmul.f32 %v2817, 0.5
        %v2850 = vmul.f32 %v2818, 0.5
        %v2851 = vmul.f32 %v2819, 0.5
        %v2852 = vmul.f32 %v2820, 0.5
        %v2853 = vmul.f32 %v2821, 0.5
        %v2854 = vmul.f32 %v2822, 0.5
        %v2855 = vmul.f32 %v2823, 0.5
        %v2856 = vmul.f32 %v2824, 0.5
        %v2857 = vmul.f32 %v2825, 0.5
        %v2858 = vmul.f32 %v2826, 0.5
        %v2859 = vmul.f32 %v2827, 0.5
        %v2860 = vmul.f32 %v2828, 0.5
        %v2861 = vmul.f32 %v2829, 0.5
        %v2862 = vmul.f32 %v2830, 0.5
        %v2863 = vmul.f32 %v2831, 0.5
        %v2864 = vmul.f32 %v2832, 0.5
        %v2865 = vmul.f32 %v2833, 0.5
        %v2866 = vmul.f32 %v2834, 0.5
        %v2867 = vmul.f32 %v2835, 0.5
        %v2868 = vmul.f32 %v2836, 0.5
        %v2869 = vmul.f32 %v2837, 0.5
        %v2870 = vmul.f32 %v2838, 0.5
        %v2871 = vmul.f32 %v2839, 0.5
        %v2872 = vmul.f32 %v2840, 0.5
        %v2873 = vmul.f32 %v2841, 0.5
        %v2874 = vmul.f32 %v2842, 0.5
        %v2875 = vmul.f32 %v2843, 0.5
        %v2876 = vmul.f32 %v2844, 0.5
        %v2877 = vmul.f32 %v2845, 0.5
        %v2878 = vmul.f32 %v2846, 0.5
        %v2879 = vmul.f32 %v2847, 0.5
        %v2880 = vmax.f32 %v2674, 0.0
        %v2881 = vmax.f32 %v2676, 0.0
        %v2882 = vmax.f32 %v2678, 0.0
        %v2883 = vmax.f32 %v2680, 0.0
        %v2884 = vmax.f32 %v2684, 0.0
        %v2885 = vmax.f32 %v2686, 0.0
        %v2886 = vmax.f32 %v2688, 0.0
        %v2887 = vmax.f32 %v2690, 0.0
        %v2888 = vmax.f32 %v2694, 0.0
        %v2889 = vmax.f32 %v2696, 0.0
        %v2890 = vmax.f32 %v2698, 0.0
        %v2891 = vmax.f32 %v2700, 0.0
        %v2892 = vmax.f32 %v2704, 0.0
        %v2893 = vmax.f32 %v2706, 0.0
        %v2894 = vmax.f32 %v2708, 0.0
        %v2895 = vmax.f32 %v2710, 0.0
        %v2896 = vmax.f32 %v2714, 0.0
        %v2897 = vmax.f32 %v2716, 0.0
        %v2898 = vmax.f32 %v2718, 0.0
        %v2899 = vmax.f32 %v2720, 0.0
        %v2900 = vmax.f32 %v2724, 0.0
        %v2901 = vmax.f32 %v2726, 0.0
        %v2902 = vmax.f32 %v2728, 0.0
        %v2903 = vmax.f32 %v2730, 0.0
        %v2904 = vmax.f32 %v2734, 0.0
        %v2905 = vmax.f32 %v2736, 0.0
        %v2906 = vmax.f32 %v2738, 0.0
        %v2907 = vmax.f32 %v2740, 0.0
        %v2908 = vmax.f32 %v2744, 0.0
        %v2909 = vmax.f32 %v2746, 0.0
        %v2910 = vmax.f32 %v2748, 0.0
        %v2911 = vmax.f32 %v2750, 0.0
        %v2912 = vand.u32 2147483647, %v2674
        %v2913 = vand.u32 2147483647, %v2676
        %v2914 = vand.u32 2147483647, %v2678
        %v2915 = vand.u32 2147483647, %v2680
        %v2916 = vand.u32 2147483647, %v2684
        %v2917 = vand.u32 2147483647, %v2686
        %v2918 = vand.u32 2147483647, %v2688
        %v2919 = vand.u32 2147483647, %v2690
        %v2920 = vand.u32 2147483647, %v2694
        %v2921 = vand.u32 2147483647, %v2696
        %v2922 = vand.u32 2147483647, %v2698
        %v2923 = vand.u32 2147483647, %v2700
        %v2924 = vand.u32 2147483647, %v2704
        %v2925 = vand.u32 2147483647, %v2706
        %v2926 = vand.u32 2147483647, %v2708
        %v2927 = vand.u32 2147483647, %v2710
        %v2928 = vand.u32 2147483647, %v2714
        %v2929 = vand.u32 2147483647, %v2716
        %v2930 = vand.u32 2147483647, %v2718
        %v2931 = vand.u32 2147483647, %v2720
        %v2932 = vand.u32 2147483647, %v2724
        %v2933 = vand.u32 2147483647, %v2726
        %v2934 = vand.u32 2147483647, %v2728
        %v2935 = vand.u32 2147483647, %v2730
        %v2936 = vand.u32 2147483647, %v2734
        %v2937 = vand.u32 2147483647, %v2736
        %v2938 = vand.u32 2147483647, %v2738
        %v2939 = vand.u32 2147483647, %v2740
        %v2940 = vand.u32 2147483647, %v2744
        %v2941 = vand.u32 2147483647, %v2746
        %v2942 = vand.u32 2147483647, %v2748
        %v2943 = vand.u32 2147483647, %v2750
        %v2944 = vsub.f32 0.0, %v2912
        %v2945 = vsub.f32 0.0, %v2913
        %v2946 = vsub.f32 0.0, %v2914
        %v2947 = vsub.f32 0.0, %v2915
        %v2948 = vsub.f32 0.0, %v2916
        %v2949 = vsub.f32 0.0, %v2917
        %v2950 = vsub.f32 0.0, %v2918
        %v2951 = vsub.f32 0.0, %v2919
        %v2952 = vsub.f32 0.0, %v2920
        %v2953 = vsub.f32 0.0, %v2921
        %v2954 = vsub.f32 0.0, %v2922
        %v2955 = vsub.f32 0.0, %v2923
        %v2956 = vsub.f32 0.0, %v2924
        %v2957 = vsub.f32 0.0, %v2925
        %v2958 = vsub.f32 0.0, %v2926
        %v2959 = vsub.f32 0.0, %v2927
        %v2960 = vsub.f32 0.0, %v2928
        %v2961 = vsub.f32 0.0, %v2929
        %v2962 = vsub.f32 0.0, %v2930
        %v2963 = vsub.f32 0.0, %v2931
        %v2964 = vsub.f32 0.0, %v2932
        %v2965 = vsub.f32 0.0, %v2933
        %v2966 = vsub.f32 0.0, %v2934
        %v2967 = vsub.f32 0.0, %v2935
        %v2968 = vsub.f32 0.0, %v2936
        %v2969 = vsub.f32 0.0, %v2937
        %v2970 = vsub.f32 0.0, %v2938
        %v2971 = vsub.f32 0.0, %v2939
        %v2972 = vsub.f32 0.0, %v2940
        %v2973 = vsub.f32 0.0, %v2941
        %v2974 = vsub.f32 0.0, %v2942
        %v2975 = vsub.f32 0.0, %v2943
        %v2976 = vmul.f32 %v2944, 1.442695
        %v2977 = vpow.pop %v2976
        %v2978 = vmul.f32 %v2945, 1.442695
        %v2979 = vpow.pop %v2978
        %v2980 = vmul.f32 %v2946, 1.442695
        %v2981 = vpow.pop %v2980
        %v2982 = vmul.f32 %v2947, 1.442695
        %v2983 = vpow.pop %v2982
        %v2984 = vmul.f32 %v2948, 1.442695
        %v2985 = vpow.pop %v2984
        %v2986 = vmul.f32 %v2949, 1.442695
        %v2987 = vpow.pop %v2986
        %v2988 = vmul.f32 %v2950, 1.442695
        %v2989 = vpow.pop %v2988
        %v2990 = vmul.f32 %v2951, 1.442695
        %v2991 = vpow.pop %v2990
        %v2992 = vmul.f32 %v2952, 1.442695
        %v2993 = vpow.pop %v2992
        %v2994 = vmul.f32 %v2953, 1.442695
        %v2995 = vpow.pop %v2994
        %v2996 = vmul.f32 %v2954, 1.442695
        %v2997 = vpow.pop %v2996
        %v2998 = vmul.f32 %v2955, 1.442695
        %v2999 = vpow.pop %v2998
        %v3000 = vmul.f32 %v2956, 1.442695
        %v3001 = vpow.pop %v3000
        %v3002 = vmul.f32 %v2957, 1.442695
        %v3003 = vpow.pop %v3002
        %v3004 = vmul.f32 %v2958, 1.442695
        %v3005 = vpow.pop %v3004
        %v3006 = vmul.f32 %v2959, 1.442695
        %v3007 = vpow.pop %v3006
        %v3008 = vmul.f32 %v2960, 1.442695
        %v3009 = vpow.pop %v3008
        %v3010 = vmul.f32 %v2961, 1.442695
        %v3011 = vpow.pop %v3010
        %v3012 = vmul.f32 %v2962, 1.442695
        %v3013 = vpow.pop %v3012
        %v3014 = vmul.f32 %v2963, 1.442695
        %v3015 = vpow.pop %v3014
        %v3016 = vmul.f32 %v2964, 1.442695
        %v3017 = vpow.pop %v3016
        %v3018 = vmul.f32 %v2965, 1.442695
        %v3019 = vpow.pop %v3018
        %v3020 = vmul.f32 %v2966, 1.442695
        %v3021 = vpow.pop %v3020
        %v3022 = vmul.f32 %v2967, 1.442695
        %v3023 = vpow.pop %v3022
        %v3024 = vmul.f32 %v2968, 1.442695
        %v3025 = vpow.pop %v3024
        %v3026 = vmul.f32 %v2969, 1.442695
        %v3027 = vpow.pop %v3026
        %v3028 = vmul.f32 %v2970, 1.442695
        %v3029 = vpow.pop %v3028
        %v3030 = vmul.f32 %v2971, 1.442695
        %v3031 = vpow.pop %v3030
        %v3032 = vmul.f32 %v2972, 1.442695
        %v3033 = vpow.pop %v3032
        %v3034 = vmul.f32 %v2973, 1.442695
        %v3035 = vpow.pop %v3034
        %v3036 = vmul.f32 %v2974, 1.442695
        %v3037 = vpow.pop %v3036
        %v3038 = vmul.f32 %v2975, 1.442695
        %v3039 = vpow.pop %v3038
        %v3040 = vadd.f32 %v2977, 1.0
        %v3041 = vadd.f32 %v2979, 1.0
        %v3042 = vadd.f32 %v2981, 1.0
        %v3043 = vadd.f32 %v2983, 1.0
        %v3044 = vadd.f32 %v2985, 1.0
        %v3045 = vadd.f32 %v2987, 1.0
        %v3046 = vadd.f32 %v2989, 1.0
        %v3047 = vadd.f32 %v2991, 1.0
        %v3048 = vadd.f32 %v2993, 1.0
        %v3049 = vadd.f32 %v2995, 1.0
        %v3050 = vadd.f32 %v2997, 1.0
        %v3051 = vadd.f32 %v2999, 1.0
        %v3052 = vadd.f32 %v3001, 1.0
        %v3053 = vadd.f32 %v3003, 1.0
        %v3054 = vadd.f32 %v3005, 1.0
        %v3055 = vadd.f32 %v3007, 1.0
        %v3056 = vadd.f32 %v3009, 1.0
        %v3057 = vadd.f32 %v3011, 1.0
        %v3058 = vadd.f32 %v3013, 1.0
        %v3059 = vadd.f32 %v3015, 1.0
        %v3060 = vadd.f32 %v3017, 1.0
        %v3061 = vadd.f32 %v3019, 1.0
        %v3062 = vadd.f32 %v3021, 1.0
        %v3063 = vadd.f32 %v3023, 1.0
        %v3064 = vadd.f32 %v3025, 1.0
        %v3065 = vadd.f32 %v3027, 1.0
        %v3066 = vadd.f32 %v3029, 1.0
        %v3067 = vadd.f32 %v3031, 1.0
        %v3068 = vadd.f32 %v3033, 1.0
        %v3069 = vadd.f32 %v3035, 1.0
        %v3070 = vadd.f32 %v3037, 1.0
        %v3071 = vadd.f32 %v3039, 1.0
        %v3072 = vlog2.pop %v3040
        %v3073 = vmul.f32 %v3072, 0.6931472
        %v3074 = vlog2.pop %v3041
        %v3075 = vmul.f32 %v3074, 0.6931472
        %v3076 = vlog2.pop %v3042
        %v3077 = vmul.f32 %v3076, 0.6931472
        %v3078 = vlog2.pop %v3043
        %v3079 = vmul.f32 %v3078, 0.6931472
        %v3080 = vlog2.pop %v3044
        %v3081 = vmul.f32 %v3080, 0.6931472
        %v3082 = vlog2.pop %v3045
        %v3083 = vmul.f32 %v3082, 0.6931472
        %v3084 = vlog2.pop %v3046
        %v3085 = vmul.f32 %v3084, 0.6931472
        %v3086 = vlog2.pop %v3047
        %v3087 = vmul.f32 %v3086, 0.6931472
        %v3088 = vlog2.pop %v3048
        %v3089 = vmul.f32 %v3088, 0.6931472
        %v3090 = vlog2.pop %v3049
        %v3091 = vmul.f32 %v3090, 0.6931472
        %v3092 = vlog2.pop %v3050
        %v3093 = vmul.f32 %v3092, 0.6931472
        %v3094 = vlog2.pop %v3051
        %v3095 = vmul.f32 %v3094, 0.6931472
        %v3096 = vlog2.pop %v3052
        %v3097 = vmul.f32 %v3096, 0.6931472
        %v3098 = vlog2.pop %v3053
        %v3099 = vmul.f32 %v3098, 0.6931472
        %v3100 = vlog2.pop %v3054
        %v3101 = vmul.f32 %v3100, 0.6931472
        %v3102 = vlog2.pop %v3055
        %v3103 = vmul.f32 %v3102, 0.6931472
        %v3104 = vlog2.pop %v3056
        %v3105 = vmul.f32 %v3104, 0.6931472
        %v3106 = vlog2.pop %v3057
        %v3107 = vmul.f32 %v3106, 0.6931472
        %v3108 = vlog2.pop %v3058
        %v3109 = vmul.f32 %v3108, 0.6931472
        %v3110 = vlog2.pop %v3059
        %v3111 = vmul.f32 %v3110, 0.6931472
        %v3112 = vlog2.pop %v3060
        %v3113 = vmul.f32 %v3112, 0.6931472
        %v3114 = vlog2.pop %v3061
        %v3115 = vmul.f32 %v3114, 0.6931472
        %v3116 = vlog2.pop %v3062
        %v3117 = vmul.f32 %v3116, 0.6931472
        %v3118 = vlog2.pop %v3063
        %v3119 = vmul.f32 %v3118, 0.6931472
        %v3120 = vlog2.pop %v3064
        %v3121 = vmul.f32 %v3120, 0.6931472
        %v3122 = vlog2.pop %v3065
        %v3123 = vmul.f32 %v3122, 0.6931472
        %v3124 = vlog2.pop %v3066
        %v3125 = vmul.f32 %v3124, 0.6931472
        %v3126 = vlog2.pop %v3067
        %v3127 = vmul.f32 %v3126, 0.6931472
        %v3128 = vlog2.pop %v3068
        %v3129 = vmul.f32 %v3128, 0.6931472
        %v3130 = vlog2.pop %v3069
        %v3131 = vmul.f32 %v3130, 0.6931472
        %v3132 = vlog2.pop %v3070
        %v3133 = vmul.f32 %v3132, 0.6931472
        %v3134 = vlog2.pop %v3071
        %v3135 = vmul.f32 %v3134, 0.6931472
        %v3136 = vadd.f32 %v2880, %v3073
        %v3137 = vadd.f32 %v2881, %v3075
        %v3138 = vadd.f32 %v2882, %v3077
        %v3139 = vadd.f32 %v2883, %v3079
        %v3140 = vadd.f32 %v2884, %v3081
        %v3141 = vadd.f32 %v2885, %v3083
        %v3142 = vadd.f32 %v2886, %v3085
        %v3143 = vadd.f32 %v2887, %v3087
        %v3144 = vadd.f32 %v2888, %v3089
        %v3145 = vadd.f32 %v2889, %v3091
        %v3146 = vadd.f32 %v2890, %v3093
        %v3147 = vadd.f32 %v2891, %v3095
        %v3148 = vadd.f32 %v2892, %v3097
        %v3149 = vadd.f32 %v2893, %v3099
        %v3150 = vadd.f32 %v2894, %v3101
        %v3151 = vadd.f32 %v2895, %v3103
        %v3152 = vadd.f32 %v2896, %v3105
        %v3153 = vadd.f32 %v2897, %v3107
        %v3154 = vadd.f32 %v2898, %v3109
        %v3155 = vadd.f32 %v2899, %v3111
        %v3156 = vadd.f32 %v2900, %v3113
        %v3157 = vadd.f32 %v2901, %v3115
        %v3158 = vadd.f32 %v2902, %v3117
        %v3159 = vadd.f32 %v2903, %v3119
        %v3160 = vadd.f32 %v2904, %v3121
        %v3161 = vadd.f32 %v2905, %v3123
        %v3162 = vadd.f32 %v2906, %v3125
        %v3163 = vadd.f32 %v2907, %v3127
        %v3164 = vadd.f32 %v2908, %v3129
        %v3165 = vadd.f32 %v2909, %v3131
        %v3166 = vadd.f32 %v2910, %v3133
        %v3167 = vadd.f32 %v2911, %v3135
        %v3168 = vpack.c.bf16 %v3138, %v3136
        %v3169 = vpack.c.bf16 %v3139, %v3137
        %v3170 = vpack.c.bf16 %v3142, %v3140
        %v3171 = vpack.c.bf16 %v3143, %v3141
        %v3172 = vpack.c.bf16 %v3146, %v3144
        %v3173 = vpack.c.bf16 %v3147, %v3145
        %v3174 = vpack.c.bf16 %v3150, %v3148
        %v3175 = vpack.c.bf16 %v3151, %v3149
        %v3176 = vpack.c.bf16 %v3154, %v3152
        %v3177 = vpack.c.bf16 %v3155, %v3153
        %v3178 = vpack.c.bf16 %v3158, %v3156
        %v3179 = vpack.c.bf16 %v3159, %v3157
        %v3180 = vpack.c.bf16 %v3162, %v3160
        %v3181 = vpack.c.bf16 %v3163, %v3161
        %v3182 = vpack.c.bf16 %v3166, %v3164
        %v3183 = vpack.c.bf16 %v3167, %v3165
        %v3185 = vlaneseq
        %v3186 = vshrl.u32 %v3185, 7
        %v3187 = vsub.s32 0, %v3186
        %v3188 = vrot.slane %v899, %v3187
        %v3189 = vlaneseq
        %v3190 = vshrl.u32 %v3189, 7
        %v3191 = vsub.s32 1, %v3190
        %v3192 = vrot.slane %v899, %v3191
        %v3227 = vunpack.c.l.b16 %v835
        %v3228 = vunpack.c.h.b16 %v835
        %v3229 = vunpack.c.l.b16 %v836
        %v3230 = vunpack.c.h.b16 %v836
        %v3231 = vunpack.c.l.b16 %v837
        %v3232 = vunpack.c.h.b16 %v837
        %v3233 = vunpack.c.l.b16 %v838
        %v3234 = vunpack.c.h.b16 %v838
        %v3235 = vunpack.c.l.b16 %v839
        %v3236 = vunpack.c.h.b16 %v839
        %v3237 = vunpack.c.l.b16 %v840
        %v3238 = vunpack.c.h.b16 %v840
        %v3239 = vunpack.c.l.b16 %v841
        %v3240 = vunpack.c.h.b16 %v841
        %v3241 = vunpack.c.l.b16 %v842
        %v3242 = vunpack.c.h.b16 %v842
        %v3243 = vunpack.c.l.b16 %v843
        %v3244 = vunpack.c.h.b16 %v843
        %v3245 = vunpack.c.l.b16 %v844
        %v3246 = vunpack.c.h.b16 %v844
        %v3247 = vunpack.c.l.b16 %v845
        %v3248 = vunpack.c.h.b16 %v845
        %v3249 = vunpack.c.l.b16 %v846
        %v3250 = vunpack.c.h.b16 %v846
        %v3251 = vunpack.c.l.b16 %v847
        %v3252 = vunpack.c.h.b16 %v847
        %v3253 = vunpack.c.l.b16 %v848
        %v3254 = vunpack.c.h.b16 %v848
        %v3255 = vunpack.c.l.b16 %v849
        %v3256 = vunpack.c.h.b16 %v849
        %v3257 = vunpack.c.l.b16 %v850
        %v3258 = vunpack.c.h.b16 %v850
        %v3259 = vunpack.c.l.b16 %v851
        %v3260 = vunpack.c.h.b16 %v851
        %v3261 = vunpack.c.l.b16 %v852
        %v3262 = vunpack.c.h.b16 %v852
        %v3263 = vunpack.c.l.b16 %v853
        %v3264 = vunpack.c.h.b16 %v853
        %v3265 = vunpack.c.l.b16 %v854
        %v3266 = vunpack.c.h.b16 %v854
        %v3267 = vunpack.c.l.b16 %v855
        %v3268 = vunpack.c.h.b16 %v855
        %v3269 = vunpack.c.l.b16 %v856
        %v3270 = vunpack.c.h.b16 %v856
        %v3271 = vunpack.c.l.b16 %v857
        %v3272 = vunpack.c.h.b16 %v857
        %v3273 = vunpack.c.l.b16 %v858
        %v3274 = vunpack.c.h.b16 %v858
        %v3275 = vunpack.c.l.b16 %v859
        %v3276 = vunpack.c.h.b16 %v859
        %v3277 = vunpack.c.l.b16 %v860
        %v3278 = vunpack.c.h.b16 %v860
        %v3279 = vunpack.c.l.b16 %v861
        %v3280 = vunpack.c.h.b16 %v861
        %v3281 = vunpack.c.l.b16 %v862
        %v3282 = vunpack.c.h.b16 %v862
        %v3283 = vunpack.c.l.b16 %v863
        %v3284 = vunpack.c.h.b16 %v863
        %v3285 = vunpack.c.l.b16 %v864
        %v3286 = vunpack.c.h.b16 %v864
        %v3287 = vunpack.c.l.b16 %v865
        %v3288 = vunpack.c.h.b16 %v865
        %v3289 = vunpack.c.l.b16 %v866
        %v3290 = vunpack.c.h.b16 %v866
        %v3291 = vpack.c.b16 %v3229, %v3227
        %v3292 = vpack.c.b16 %v3230, %v3228
        %v3293 = vpack.c.b16 %v3233, %v3231
        %v3294 = vpack.c.b16 %v3234, %v3232
        %v3295 = vpack.c.b16 %v3237, %v3235
        %v3296 = vpack.c.b16 %v3238, %v3236
        %v3297 = vpack.c.b16 %v3241, %v3239
        %v3298 = vpack.c.b16 %v3242, %v3240
        %v3299 = vpack.c.b16 %v3245, %v3243
        %v3300 = vpack.c.b16 %v3246, %v3244
        %v3301 = vpack.c.b16 %v3249, %v3247
        %v3302 = vpack.c.b16 %v3250, %v3248
        %v3303 = vpack.c.b16 %v3253, %v3251
        %v3304 = vpack.c.b16 %v3254, %v3252
        %v3305 = vpack.c.b16 %v3257, %v3255
        %v3306 = vpack.c.b16 %v3258, %v3256
        %v3307 = vpack.c.b16 %v3261, %v3259
        %v3308 = vpack.c.b16 %v3262, %v3260
        %v3309 = vpack.c.b16 %v3265, %v3263
        %v3310 = vpack.c.b16 %v3266, %v3264
        %v3311 = vpack.c.b16 %v3269, %v3267
        %v3312 = vpack.c.b16 %v3270, %v3268
        %v3313 = vpack.c.b16 %v3273, %v3271
        %v3314 = vpack.c.b16 %v3274, %v3272
        %v3315 = vpack.c.b16 %v3277, %v3275
        %v3316 = vpack.c.b16 %v3278, %v3276
        %v3317 = vpack.c.b16 %v3281, %v3279
        %v3318 = vpack.c.b16 %v3282, %v3280
        %v3319 = vpack.c.b16 %v3285, %v3283
        %v3320 = vpack.c.b16 %v3286, %v3284
        %v3321 = vpack.c.b16 %v3289, %v3287
        %v3322 = vpack.c.b16 %v3290, %v3288
        %3355 = vmatprep.subr.bf16.mxu0 %v3306
        %3356 = vmatpush1.bf16.msra.mxu0 %v3305
        %3357 = vmatprep.subr.bf16.mxu0 %v3304
        %3358 = vmatpush1.bf16.msra.mxu0 %v3303
        %3359 = vmatprep.subr.bf16.mxu0 %v3302
        %3360 = vmatpush1.bf16.msra.mxu0 %v3301
        %3361 = vmatprep.subr.bf16.mxu0 %v3300
        %3362 = vmatpush1.bf16.msra.mxu0 %v3299
        %3363 = vmatprep.subr.bf16.mxu0 %v3298
        %3364 = vmatpush1.bf16.msra.mxu0 %v3297
        %3365 = vmatprep.subr.bf16.mxu0 %v3296
        %3366 = vmatpush1.bf16.msra.mxu0 %v3295
        %3367 = vmatprep.subr.bf16.mxu0 %v3294
        %3368 = vmatpush1.bf16.msra.mxu0 %v3293
        %3369 = vmatprep.subr.bf16.mxu0 %v3292
        %3370 = vmatpush1.bf16.msra.mxu0 %v3291
        %3371 = vmatprep.subr.bf16.mxu0 %v3322
        %3372 = vmatpush2.bf16.msra.mxu0 %v3321
        %3373 = vmatprep.subr.bf16.mxu0 %v3320
        %3374 = vmatpush2.bf16.msra.mxu0 %v3319
        %3375 = vmatprep.subr.bf16.mxu0 %v3318
        %3376 = vmatpush2.bf16.msra.mxu0 %v3317
        %3377 = vmatprep.subr.bf16.mxu0 %v3316
        %3378 = vmatpush2.bf16.msra.mxu0 %v3315
        %3379 = vmatprep.subr.bf16.mxu0 %v3314
        %3380 = vmatpush2.bf16.msra.mxu0 %v3313
        %3381 = vmatprep.subr.bf16.mxu0 %v3312
        %3382 = vmatpush2.bf16.msra.mxu0 %v3311
        %3383 = vmatprep.subr.bf16.mxu0 %v3310
        %3384 = vmatpush2.bf16.msra.mxu0 %v3309
        %3385 = vmatprep.subr.bf16.mxu0 %v3308
        %3386 = vmatpush2.bf16.msra.mxu0 %v3307
        %3387 = vmatprep.mubr.bf16.mxu0 %v3169
        %3388 = vmatmul.mubr.bf16.gmra.mxu0 %v3168
        %v3389 = vpop.f32.mrf.mxu0
        %v3390 = vadd.f32 %v3188, %v3389
        %v3391 = vpop.f32.mrf.mxu0
        %v3392 = vadd.f32 %v3192, %v3391
        %v3393 = vpop.f32.mrf.mxu0
        %v3394 = vadd.f32 %v3188, %v3393
        %v3395 = vpop.f32.mrf.mxu0
        %v3396 = vadd.f32 %v3192, %v3395
        %3397 = vmatprep.mubr.bf16.mxu0 %v3171
        %3398 = vmatmul.mubr.bf16.gmra.mxu0 %v3170
        %v3399 = vpop.f32.mrf.mxu0
        %v3400 = vadd.f32 %v3188, %v3399
        %v3401 = vpop.f32.mrf.mxu0
        %v3402 = vadd.f32 %v3192, %v3401
        %v3403 = vpop.f32.mrf.mxu0
        %v3404 = vadd.f32 %v3188, %v3403
        %v3405 = vpop.f32.mrf.mxu0
        %v3406 = vadd.f32 %v3192, %v3405
        %3407 = vmatprep.mubr.bf16.mxu0 %v3173
        %3408 = vmatmul.mubr.bf16.gmra.mxu0 %v3172
        %v3409 = vpop.f32.mrf.mxu0
        %v3410 = vadd.f32 %v3188, %v3409
        %v3411 = vpop.f32.mrf.mxu0
        %v3412 = vadd.f32 %v3192, %v3411
        %v3413 = vpop.f32.mrf.mxu0
        %v3414 = vadd.f32 %v3188, %v3413
        %v3415 = vpop.f32.mrf.mxu0
        %v3416 = vadd.f32 %v3192, %v3415
        %3417 = vmatprep.mubr.bf16.mxu0 %v3175
        %3418 = vmatmul.mubr.bf16.gmra.mxu0 %v3174
        %v3419 = vpop.f32.mrf.mxu0
        %v3420 = vadd.f32 %v3188, %v3419
        %v3421 = vpop.f32.mrf.mxu0
        %v3422 = vadd.f32 %v3192, %v3421
        %v3423 = vpop.f32.mrf.mxu0
        %v3424 = vadd.f32 %v3188, %v3423
        %v3425 = vpop.f32.mrf.mxu0
        %v3426 = vadd.f32 %v3192, %v3425
        %3427 = vmatprep.mubr.bf16.mxu0 %v3177
        %3428 = vmatmul.mubr.bf16.gmra.mxu0 %v3176
        %v3429 = vpop.f32.mrf.mxu0
        %v3430 = vadd.f32 %v3188, %v3429
        %v3431 = vpop.f32.mrf.mxu0
        %v3432 = vadd.f32 %v3192, %v3431
        %v3433 = vpop.f32.mrf.mxu0
        %v3434 = vadd.f32 %v3188, %v3433
        %v3435 = vpop.f32.mrf.mxu0
        %v3436 = vadd.f32 %v3192, %v3435
        %3437 = vmatprep.mubr.bf16.mxu0 %v3179
        %3438 = vmatmul.mubr.bf16.gmra.mxu0 %v3178
        %v3439 = vpop.f32.mrf.mxu0
        %v3440 = vadd.f32 %v3188, %v3439
        %v3441 = vpop.f32.mrf.mxu0
        %v3442 = vadd.f32 %v3192, %v3441
        %v3443 = vpop.f32.mrf.mxu0
        %v3444 = vadd.f32 %v3188, %v3443
        %v3445 = vpop.f32.mrf.mxu0
        %v3446 = vadd.f32 %v3192, %v3445
        %3447 = vmatprep.mubr.bf16.mxu0 %v3181
        %3448 = vmatmul.mubr.bf16.gmra.mxu0 %v3180
        %v3449 = vpop.f32.mrf.mxu0
        %v3450 = vadd.f32 %v3188, %v3449
        %v3451 = vpop.f32.mrf.mxu0
        %v3452 = vadd.f32 %v3192, %v3451
        %v3453 = vpop.f32.mrf.mxu0
        %v3454 = vadd.f32 %v3188, %v3453
        %v3455 = vpop.f32.mrf.mxu0
        %v3456 = vadd.f32 %v3192, %v3455
        %3457 = vmatprep.mubr.bf16.mxu0 %v3183
        %3458 = vmatmul.mubr.bf16.gmra.mxu0 %v3182
        %v3459 = vpop.f32.mrf.mxu0
        %v3460 = vadd.f32 %v3188, %v3459
        %v3461 = vpop.f32.mrf.mxu0
        %v3462 = vadd.f32 %v3192, %v3461
        %v3463 = vpop.f32.mrf.mxu0
        %v3464 = vadd.f32 %v3188, %v3463
        %v3465 = vpop.f32.mrf.mxu0
        %v3466 = vadd.f32 %v3192, %v3465
        %3467 = vdwg.mxu0
        %v3468 = vmul.f32 %v3390, 0.5
        %v3469 = vmul.f32 %v3392, 0.5
        %v3470 = vmul.f32 %v3394, 0.5
        %v3471 = vmul.f32 %v3396, 0.5
        %v3472 = vmul.f32 %v3400, 0.5
        %v3473 = vmul.f32 %v3402, 0.5
        %v3474 = vmul.f32 %v3404, 0.5
        %v3475 = vmul.f32 %v3406, 0.5
        %v3476 = vmul.f32 %v3410, 0.5
        %v3477 = vmul.f32 %v3412, 0.5
        %v3478 = vmul.f32 %v3414, 0.5
        %v3479 = vmul.f32 %v3416, 0.5
        %v3480 = vmul.f32 %v3420, 0.5
        %v3481 = vmul.f32 %v3422, 0.5
        %v3482 = vmul.f32 %v3424, 0.5
        %v3483 = vmul.f32 %v3426, 0.5
        %v3484 = vmul.f32 %v3430, 0.5
        %v3485 = vmul.f32 %v3432, 0.5
        %v3486 = vmul.f32 %v3434, 0.5
        %v3487 = vmul.f32 %v3436, 0.5
        %v3488 = vmul.f32 %v3440, 0.5
        %v3489 = vmul.f32 %v3442, 0.5
        %v3490 = vmul.f32 %v3444, 0.5
        %v3491 = vmul.f32 %v3446, 0.5
        %v3492 = vmul.f32 %v3450, 0.5
        %v3493 = vmul.f32 %v3452, 0.5
        %v3494 = vmul.f32 %v3454, 0.5
        %v3495 = vmul.f32 %v3456, 0.5
        %v3496 = vmul.f32 %v3460, 0.5
        %v3497 = vmul.f32 %v3462, 0.5
        %v3498 = vmul.f32 %v3464, 0.5
        %v3499 = vmul.f32 %v3466, 0.5
        %v3500 = vtanh.pop %v3468
        %v3501 = vtanh.pop %v3469
        %v3502 = vtanh.pop %v3470
        %v3503 = vtanh.pop %v3471
        %v3504 = vtanh.pop %v3472
        %v3505 = vtanh.pop %v3473
        %v3506 = vtanh.pop %v3474
        %v3507 = vtanh.pop %v3475
        %v3508 = vtanh.pop %v3476
        %v3509 = vtanh.pop %v3477
        %v3510 = vtanh.pop %v3478
        %v3511 = vtanh.pop %v3479
        %v3512 = vtanh.pop %v3480
        %v3513 = vtanh.pop %v3481
        %v3514 = vtanh.pop %v3482
        %v3515 = vtanh.pop %v3483
        %v3516 = vtanh.pop %v3484
        %v3517 = vtanh.pop %v3485
        %v3518 = vtanh.pop %v3486
        %v3519 = vtanh.pop %v3487
        %v3520 = vtanh.pop %v3488
        %v3521 = vtanh.pop %v3489
        %v3522 = vtanh.pop %v3490
        %v3523 = vtanh.pop %v3491
        %v3524 = vtanh.pop %v3492
        %v3525 = vtanh.pop %v3493
        %v3526 = vtanh.pop %v3494
        %v3527 = vtanh.pop %v3495
        %v3528 = vtanh.pop %v3496
        %v3529 = vtanh.pop %v3497
        %v3530 = vtanh.pop %v3498
        %v3531 = vtanh.pop %v3499
        %v3532 = vadd.f32 %v3500, 1.0
        %v3533 = vadd.f32 %v3501, 1.0
        %v3534 = vadd.f32 %v3502, 1.0
        %v3535 = vadd.f32 %v3503, 1.0
        %v3536 = vadd.f32 %v3504, 1.0
        %v3537 = vadd.f32 %v3505, 1.0
        %v3538 = vadd.f32 %v3506, 1.0
        %v3539 = vadd.f32 %v3507, 1.0
        %v3540 = vadd.f32 %v3508, 1.0
        %v3541 = vadd.f32 %v3509, 1.0
        %v3542 = vadd.f32 %v3510, 1.0
        %v3543 = vadd.f32 %v3511, 1.0
        %v3544 = vadd.f32 %v3512, 1.0
        %v3545 = vadd.f32 %v3513, 1.0
        %v3546 = vadd.f32 %v3514, 1.0
        %v3547 = vadd.f32 %v3515, 1.0
        %v3548 = vadd.f32 %v3516, 1.0
        %v3549 = vadd.f32 %v3517, 1.0
        %v3550 = vadd.f32 %v3518, 1.0
        %v3551 = vadd.f32 %v3519, 1.0
        %v3552 = vadd.f32 %v3520, 1.0
        %v3553 = vadd.f32 %v3521, 1.0
        %v3554 = vadd.f32 %v3522, 1.0
        %v3555 = vadd.f32 %v3523, 1.0
        %v3556 = vadd.f32 %v3524, 1.0
        %v3557 = vadd.f32 %v3525, 1.0
        %v3558 = vadd.f32 %v3526, 1.0
        %v3559 = vadd.f32 %v3527, 1.0
        %v3560 = vadd.f32 %v3528, 1.0
        %v3561 = vadd.f32 %v3529, 1.0
        %v3562 = vadd.f32 %v3530, 1.0
        %v3563 = vadd.f32 %v3531, 1.0
        %v3564 = vmul.f32 %v3532, 0.5
        %v3565 = vmul.f32 %v3533, 0.5
        %v3566 = vmul.f32 %v3534, 0.5
        %v3567 = vmul.f32 %v3535, 0.5
        %v3568 = vmul.f32 %v3536, 0.5
        %v3569 = vmul.f32 %v3537, 0.5
        %v3570 = vmul.f32 %v3538, 0.5
        %v3571 = vmul.f32 %v3539, 0.5
        %v3572 = vmul.f32 %v3540, 0.5
        %v3573 = vmul.f32 %v3541, 0.5
        %v3574 = vmul.f32 %v3542, 0.5
        %v3575 = vmul.f32 %v3543, 0.5
        %v3576 = vmul.f32 %v3544, 0.5
        %v3577 = vmul.f32 %v3545, 0.5
        %v3578 = vmul.f32 %v3546, 0.5
        %v3579 = vmul.f32 %v3547, 0.5
        %v3580 = vmul.f32 %v3548, 0.5
        %v3581 = vmul.f32 %v3549, 0.5
        %v3582 = vmul.f32 %v3550, 0.5
        %v3583 = vmul.f32 %v3551, 0.5
        %v3584 = vmul.f32 %v3552, 0.5
        %v3585 = vmul.f32 %v3553, 0.5
        %v3586 = vmul.f32 %v3554, 0.5
        %v3587 = vmul.f32 %v3555, 0.5
        %v3588 = vmul.f32 %v3556, 0.5
        %v3589 = vmul.f32 %v3557, 0.5
        %v3590 = vmul.f32 %v3558, 0.5
        %v3591 = vmul.f32 %v3559, 0.5
        %v3592 = vmul.f32 %v3560, 0.5
        %v3593 = vmul.f32 %v3561, 0.5
        %v3594 = vmul.f32 %v3562, 0.5
        %v3595 = vmul.f32 %v3563, 0.5
        %v3597 = vlaneseq
        %v3598 = vshrl.u32 %v3597, 7
        %v3599 = vsub.s32 0, %v3598
        %v3600 = vrot.slane %v900, %v3599
        %v3601 = vlaneseq
        %v3602 = vshrl.u32 %v3601, 7
        %v3603 = vsub.s32 1, %v3602
        %v3604 = vrot.slane %v900, %v3603
        %v3607 = vmul.f32 %v3564, %v3600
        %v3608 = vmul.f32 %v3565, %v3604
        %v3609 = vmul.f32 %v3566, %v3600
        %v3610 = vmul.f32 %v3567, %v3604
        %v3611 = vmul.f32 %v3568, %v3600
        %v3612 = vmul.f32 %v3569, %v3604
        %v3613 = vmul.f32 %v3570, %v3600
        %v3614 = vmul.f32 %v3571, %v3604
        %v3615 = vmul.f32 %v3572, %v3600
        %v3616 = vmul.f32 %v3573, %v3604
        %v3617 = vmul.f32 %v3574, %v3600
        %v3618 = vmul.f32 %v3575, %v3604
        %v3619 = vmul.f32 %v3576, %v3600
        %v3620 = vmul.f32 %v3577, %v3604
        %v3621 = vmul.f32 %v3578, %v3600
        %v3622 = vmul.f32 %v3579, %v3604
        %v3623 = vmul.f32 %v3580, %v3600
        %v3624 = vmul.f32 %v3581, %v3604
        %v3625 = vmul.f32 %v3582, %v3600
        %v3626 = vmul.f32 %v3583, %v3604
        %v3627 = vmul.f32 %v3584, %v3600
        %v3628 = vmul.f32 %v3585, %v3604
        %v3629 = vmul.f32 %v3586, %v3600
        %v3630 = vmul.f32 %v3587, %v3604
        %v3631 = vmul.f32 %v3588, %v3600
        %v3632 = vmul.f32 %v3589, %v3604
        %v3633 = vmul.f32 %v3590, %v3600
        %v3634 = vmul.f32 %v3591, %v3604
        %v3635 = vmul.f32 %v3592, %v3600
        %v3636 = vmul.f32 %v3593, %v3604
        %v3637 = vmul.f32 %v3594, %v3600
        %v3638 = vmul.f32 %v3595, %v3604
        %v3639 = vpack.c.bf16 %v3609, %v3607
        %v3640 = vpack.c.bf16 %v3610, %v3608
        %v3641 = vpack.c.bf16 %v3613, %v3611
        %v3642 = vpack.c.bf16 %v3614, %v3612
        %v3643 = vpack.c.bf16 %v3617, %v3615
        %v3644 = vpack.c.bf16 %v3618, %v3616
        %v3645 = vpack.c.bf16 %v3621, %v3619
        %v3646 = vpack.c.bf16 %v3622, %v3620
        %v3647 = vpack.c.bf16 %v3625, %v3623
        %v3648 = vpack.c.bf16 %v3626, %v3624
        %v3649 = vpack.c.bf16 %v3629, %v3627
        %v3650 = vpack.c.bf16 %v3630, %v3628
        %v3651 = vpack.c.bf16 %v3633, %v3631
        %v3652 = vpack.c.bf16 %v3634, %v3632
        %v3653 = vpack.c.bf16 %v3637, %v3635
        %v3654 = vpack.c.bf16 %v3638, %v3636
        %v3687 = vunpack.c.l.b16 %v867
        %v3688 = vunpack.c.h.b16 %v867
        %v3689 = vunpack.c.l.b16 %v868
        %v3690 = vunpack.c.h.b16 %v868
        %v3691 = vunpack.c.l.b16 %v869
        %v3692 = vunpack.c.h.b16 %v869
        %v3693 = vunpack.c.l.b16 %v870
        %v3694 = vunpack.c.h.b16 %v870
        %v3695 = vunpack.c.l.b16 %v871
        %v3696 = vunpack.c.h.b16 %v871
        %v3697 = vunpack.c.l.b16 %v872
        %v3698 = vunpack.c.h.b16 %v872
        %v3699 = vunpack.c.l.b16 %v873
        %v3700 = vunpack.c.h.b16 %v873
        %v3701 = vunpack.c.l.b16 %v874
        %v3702 = vunpack.c.h.b16 %v874
        %v3703 = vunpack.c.l.b16 %v875
        %v3704 = vunpack.c.h.b16 %v875
        %v3705 = vunpack.c.l.b16 %v876
        %v3706 = vunpack.c.h.b16 %v876
        %v3707 = vunpack.c.l.b16 %v877
        %v3708 = vunpack.c.h.b16 %v877
        %v3709 = vunpack.c.l.b16 %v878
        %v3710 = vunpack.c.h.b16 %v878
        %v3711 = vunpack.c.l.b16 %v879
        %v3712 = vunpack.c.h.b16 %v879
        %v3713 = vunpack.c.l.b16 %v880
        %v3714 = vunpack.c.h.b16 %v880
        %v3715 = vunpack.c.l.b16 %v881
        %v3716 = vunpack.c.h.b16 %v881
        %v3717 = vunpack.c.l.b16 %v882
        %v3718 = vunpack.c.h.b16 %v882
        %v3719 = vunpack.c.l.b16 %v883
        %v3720 = vunpack.c.h.b16 %v883
        %v3721 = vunpack.c.l.b16 %v884
        %v3722 = vunpack.c.h.b16 %v884
        %v3723 = vunpack.c.l.b16 %v885
        %v3724 = vunpack.c.h.b16 %v885
        %v3725 = vunpack.c.l.b16 %v886
        %v3726 = vunpack.c.h.b16 %v886
        %v3727 = vunpack.c.l.b16 %v887
        %v3728 = vunpack.c.h.b16 %v887
        %v3729 = vunpack.c.l.b16 %v888
        %v3730 = vunpack.c.h.b16 %v888
        %v3731 = vunpack.c.l.b16 %v889
        %v3732 = vunpack.c.h.b16 %v889
        %v3733 = vunpack.c.l.b16 %v890
        %v3734 = vunpack.c.h.b16 %v890
        %v3735 = vunpack.c.l.b16 %v891
        %v3736 = vunpack.c.h.b16 %v891
        %v3737 = vunpack.c.l.b16 %v892
        %v3738 = vunpack.c.h.b16 %v892
        %v3739 = vunpack.c.l.b16 %v893
        %v3740 = vunpack.c.h.b16 %v893
        %v3741 = vunpack.c.l.b16 %v894
        %v3742 = vunpack.c.h.b16 %v894
        %v3743 = vunpack.c.l.b16 %v895
        %v3744 = vunpack.c.h.b16 %v895
        %v3745 = vunpack.c.l.b16 %v896
        %v3746 = vunpack.c.h.b16 %v896
        %v3747 = vunpack.c.l.b16 %v897
        %v3748 = vunpack.c.h.b16 %v897
        %v3749 = vunpack.c.l.b16 %v898
        %v3750 = vunpack.c.h.b16 %v898
        %v3751 = vpack.c.b16 %v3689, %v3687
        %v3752 = vpack.c.b16 %v3690, %v3688
        %v3753 = vpack.c.b16 %v3693, %v3691
        %v3754 = vpack.c.b16 %v3694, %v3692
        %v3755 = vpack.c.b16 %v3697, %v3695
        %v3756 = vpack.c.b16 %v3698, %v3696
        %v3757 = vpack.c.b16 %v3701, %v3699
        %v3758 = vpack.c.b16 %v3702, %v3700
        %v3759 = vpack.c.b16 %v3705, %v3703
        %v3760 = vpack.c.b16 %v3706, %v3704
        %v3761 = vpack.c.b16 %v3709, %v3707
        %v3762 = vpack.c.b16 %v3710, %v3708
        %v3763 = vpack.c.b16 %v3713, %v3711
        %v3764 = vpack.c.b16 %v3714, %v3712
        %v3765 = vpack.c.b16 %v3717, %v3715
        %v3766 = vpack.c.b16 %v3718, %v3716
        %v3767 = vpack.c.b16 %v3721, %v3719
        %v3768 = vpack.c.b16 %v3722, %v3720
        %v3769 = vpack.c.b16 %v3725, %v3723
        %v3770 = vpack.c.b16 %v3726, %v3724
        %v3771 = vpack.c.b16 %v3729, %v3727
        %v3772 = vpack.c.b16 %v3730, %v3728
        %v3773 = vpack.c.b16 %v3733, %v3731
        %v3774 = vpack.c.b16 %v3734, %v3732
        %v3775 = vpack.c.b16 %v3737, %v3735
        %v3776 = vpack.c.b16 %v3738, %v3736
        %v3777 = vpack.c.b16 %v3741, %v3739
        %v3778 = vpack.c.b16 %v3742, %v3740
        %v3779 = vpack.c.b16 %v3745, %v3743
        %v3780 = vpack.c.b16 %v3746, %v3744
        %v3781 = vpack.c.b16 %v3749, %v3747
        %v3782 = vpack.c.b16 %v3750, %v3748
        %3815 = vmatprep.subr.bf16.mxu0 %v3766
        %3816 = vmatpush1.bf16.msra.mxu0 %v3765
        %3817 = vmatprep.subr.bf16.mxu0 %v3764
        %3818 = vmatpush1.bf16.msra.mxu0 %v3763
        %3819 = vmatprep.subr.bf16.mxu0 %v3762
        %3820 = vmatpush1.bf16.msra.mxu0 %v3761
        %3821 = vmatprep.subr.bf16.mxu0 %v3760
        %3822 = vmatpush1.bf16.msra.mxu0 %v3759
        %3823 = vmatprep.subr.bf16.mxu0 %v3758
        %3824 = vmatpush1.bf16.msra.mxu0 %v3757
        %3825 = vmatprep.subr.bf16.mxu0 %v3756
        %3826 = vmatpush1.bf16.msra.mxu0 %v3755
        %3827 = vmatprep.subr.bf16.mxu0 %v3754
        %3828 = vmatpush1.bf16.msra.mxu0 %v3753
        %3829 = vmatprep.subr.bf16.mxu0 %v3752
        %3830 = vmatpush1.bf16.msra.mxu0 %v3751
        %3831 = vmatprep.subr.bf16.mxu0 %v3782
        %3832 = vmatpush2.bf16.msra.mxu0 %v3781
        %3833 = vmatprep.subr.bf16.mxu0 %v3780
        %3834 = vmatpush2.bf16.msra.mxu0 %v3779
        %3835 = vmatprep.subr.bf16.mxu0 %v3778
        %3836 = vmatpush2.bf16.msra.mxu0 %v3777
        %3837 = vmatprep.subr.bf16.mxu0 %v3776
        %3838 = vmatpush2.bf16.msra.mxu0 %v3775
        %3839 = vmatprep.subr.bf16.mxu0 %v3774
        %3840 = vmatpush2.bf16.msra.mxu0 %v3773
        %3841 = vmatprep.subr.bf16.mxu0 %v3772
        %3842 = vmatpush2.bf16.msra.mxu0 %v3771
        %3843 = vmatprep.subr.bf16.mxu0 %v3770
        %3844 = vmatpush2.bf16.msra.mxu0 %v3769
        %3845 = vmatprep.subr.bf16.mxu0 %v3768
        %3846 = vmatpush2.bf16.msra.mxu0 %v3767
        %3847 = vmatprep.mubr.bf16.mxu0 %v3640
        %3848 = vmatmul.mubr.bf16.gmra.mxu0 %v3639
        %v3849 = vpop.f32.mrf.mxu0
        %v3850 = vadd.f32 0.0, %v3849
        %v3851 = vpop.f32.mrf.mxu0
        %v3852 = vadd.f32 0.0, %v3851
        %v3853 = vpop.f32.mrf.mxu0
        %v3854 = vadd.f32 0.0, %v3853
        %v3855 = vpop.f32.mrf.mxu0
        %v3856 = vadd.f32 0.0, %v3855
        %3857 = vmatprep.mubr.bf16.mxu0 %v3642
        %3858 = vmatmul.mubr.bf16.gmra.mxu0 %v3641
        %v3859 = vpop.f32.mrf.mxu0
        %v3860 = vadd.f32 0.0, %v3859
        %v3861 = vpop.f32.mrf.mxu0
        %v3862 = vadd.f32 0.0, %v3861
        %v3863 = vpop.f32.mrf.mxu0
        %v3864 = vadd.f32 0.0, %v3863
        %v3865 = vpop.f32.mrf.mxu0
        %v3866 = vadd.f32 0.0, %v3865
        %3867 = vmatprep.mubr.bf16.mxu0 %v3644
        %3868 = vmatmul.mubr.bf16.gmra.mxu0 %v3643
        %v3869 = vpop.f32.mrf.mxu0
        %v3870 = vadd.f32 0.0, %v3869
        %v3871 = vpop.f32.mrf.mxu0
        %v3872 = vadd.f32 0.0, %v3871
        %v3873 = vpop.f32.mrf.mxu0
        %v3874 = vadd.f32 0.0, %v3873
        %v3875 = vpop.f32.mrf.mxu0
        %v3876 = vadd.f32 0.0, %v3875
        %3877 = vmatprep.mubr.bf16.mxu0 %v3646
        %3878 = vmatmul.mubr.bf16.gmra.mxu0 %v3645
        %v3879 = vpop.f32.mrf.mxu0
        %v3880 = vadd.f32 0.0, %v3879
        %v3881 = vpop.f32.mrf.mxu0
        %v3882 = vadd.f32 0.0, %v3881
        %v3883 = vpop.f32.mrf.mxu0
        %v3884 = vadd.f32 0.0, %v3883
        %v3885 = vpop.f32.mrf.mxu0
        %v3886 = vadd.f32 0.0, %v3885
        %3887 = vmatprep.mubr.bf16.mxu0 %v3648
        %3888 = vmatmul.mubr.bf16.gmra.mxu0 %v3647
        %v3889 = vpop.f32.mrf.mxu0
        %v3890 = vadd.f32 0.0, %v3889
        %v3891 = vpop.f32.mrf.mxu0
        %v3892 = vadd.f32 0.0, %v3891
        %v3893 = vpop.f32.mrf.mxu0
        %v3894 = vadd.f32 0.0, %v3893
        %v3895 = vpop.f32.mrf.mxu0
        %v3896 = vadd.f32 0.0, %v3895
        %3897 = vmatprep.mubr.bf16.mxu0 %v3650
        %3898 = vmatmul.mubr.bf16.gmra.mxu0 %v3649
        %v3899 = vpop.f32.mrf.mxu0
        %v3900 = vadd.f32 0.0, %v3899
        %v3901 = vpop.f32.mrf.mxu0
        %v3902 = vadd.f32 0.0, %v3901
        %v3903 = vpop.f32.mrf.mxu0
        %v3904 = vadd.f32 0.0, %v3903
        %v3905 = vpop.f32.mrf.mxu0
        %v3906 = vadd.f32 0.0, %v3905
        %3907 = vmatprep.mubr.bf16.mxu0 %v3652
        %3908 = vmatmul.mubr.bf16.gmra.mxu0 %v3651
        %v3909 = vpop.f32.mrf.mxu0
        %v3910 = vadd.f32 0.0, %v3909
        %v3911 = vpop.f32.mrf.mxu0
        %v3912 = vadd.f32 0.0, %v3911
        %v3913 = vpop.f32.mrf.mxu0
        %v3914 = vadd.f32 0.0, %v3913
        %v3915 = vpop.f32.mrf.mxu0
        %v3916 = vadd.f32 0.0, %v3915
        %3917 = vmatprep.mubr.bf16.mxu0 %v3654
        %3918 = vmatmul.mubr.bf16.gmra.mxu0 %v3653
        %v3919 = vpop.f32.mrf.mxu0
        %v3920 = vadd.f32 0.0, %v3919
        %v3921 = vpop.f32.mrf.mxu0
        %v3922 = vadd.f32 0.0, %v3921
        %v3923 = vpop.f32.mrf.mxu0
        %v3924 = vadd.f32 0.0, %v3923
        %v3925 = vpop.f32.mrf.mxu0
        %v3926 = vadd.f32 0.0, %v3925
        %3927 = vdwg.mxu0
        %v3928 = vmul.f32 %v3850, %v2848
        %v3929 = vmul.f32 %v3852, %v2849
        %v3930 = vmul.f32 %v3854, %v2850
        %v3931 = vmul.f32 %v3856, %v2851
        %v3932 = vmul.f32 %v3860, %v2852
        %v3933 = vmul.f32 %v3862, %v2853
        %v3934 = vmul.f32 %v3864, %v2854
        %v3935 = vmul.f32 %v3866, %v2855
        %v3936 = vmul.f32 %v3870, %v2856
        %v3937 = vmul.f32 %v3872, %v2857
        %v3938 = vmul.f32 %v3874, %v2858
        %v3939 = vmul.f32 %v3876, %v2859
        %v3940 = vmul.f32 %v3880, %v2860
        %v3941 = vmul.f32 %v3882, %v2861
        %v3942 = vmul.f32 %v3884, %v2862
        %v3943 = vmul.f32 %v3886, %v2863
        %v3944 = vmul.f32 %v3890, %v2864
        %v3945 = vmul.f32 %v3892, %v2865
        %v3946 = vmul.f32 %v3894, %v2866
        %v3947 = vmul.f32 %v3896, %v2867
        %v3948 = vmul.f32 %v3900, %v2868
        %v3949 = vmul.f32 %v3902, %v2869
        %v3950 = vmul.f32 %v3904, %v2870
        %v3951 = vmul.f32 %v3906, %v2871
        %v3952 = vmul.f32 %v3910, %v2872
        %v3953 = vmul.f32 %v3912, %v2873
        %v3954 = vmul.f32 %v3914, %v2874
        %v3955 = vmul.f32 %v3916, %v2875
        %v3956 = vmul.f32 %v3920, %v2876
        %v3957 = vmul.f32 %v3922, %v2877
        %v3958 = vmul.f32 %v3924, %v2878
        %v3959 = vmul.f32 %v3926, %v2879
        %v3960 = vpack.c.bf16 %v3930, %v3928
        %v3961 = vpack.c.bf16 %v3931, %v3929
        %v3962 = vpack.c.bf16 %v3934, %v3932
        %v3963 = vpack.c.bf16 %v3935, %v3933
        %v3964 = vpack.c.bf16 %v3938, %v3936
        %v3965 = vpack.c.bf16 %v3939, %v3937
        %v3966 = vpack.c.bf16 %v3942, %v3940
        %v3967 = vpack.c.bf16 %v3943, %v3941
        %v3968 = vpack.c.bf16 %v3946, %v3944
        %v3969 = vpack.c.bf16 %v3947, %v3945
        %v3970 = vpack.c.bf16 %v3950, %v3948
        %v3971 = vpack.c.bf16 %v3951, %v3949
        %v3972 = vpack.c.bf16 %v3954, %v3952
        %v3973 = vpack.c.bf16 %v3955, %v3953
        %v3974 = vpack.c.bf16 %v3958, %v3956
        %v3975 = vpack.c.bf16 %v3959, %v3957
        %v4008 = vunpack.c.l.b16 %v802
        %v4009 = vunpack.c.l.b16 %v803
        %v4010 = vunpack.c.l.b16 %v804
        %v4011 = vunpack.c.l.b16 %v805
        %v4012 = vunpack.c.l.b16 %v806
        %v4013 = vunpack.c.l.b16 %v807
        %v4014 = vunpack.c.l.b16 %v808
        %v4015 = vunpack.c.l.b16 %v809
        %v4016 = vunpack.c.l.b16 %v810
        %v4017 = vunpack.c.l.b16 %v811
        %v4018 = vunpack.c.l.b16 %v812
        %v4019 = vunpack.c.l.b16 %v813
        %v4020 = vunpack.c.l.b16 %v814
        %v4021 = vunpack.c.l.b16 %v815
        %v4022 = vunpack.c.l.b16 %v816
        %v4023 = vunpack.c.l.b16 %v817
        %v4024 = vunpack.c.l.b16 %v818
        %v4025 = vunpack.c.l.b16 %v819
        %v4026 = vunpack.c.l.b16 %v820
        %v4027 = vunpack.c.l.b16 %v821
        %v4028 = vunpack.c.l.b16 %v822
        %v4029 = vunpack.c.l.b16 %v823
        %v4030 = vunpack.c.l.b16 %v824
        %v4031 = vunpack.c.l.b16 %v825
        %v4032 = vunpack.c.l.b16 %v826
        %v4033 = vunpack.c.l.b16 %v827
        %v4034 = vunpack.c.l.b16 %v828
        %v4035 = vunpack.c.l.b16 %v829
        %v4036 = vunpack.c.l.b16 %v830
        %v4037 = vunpack.c.l.b16 %v831
        %v4038 = vunpack.c.l.b16 %v832
        %v4039 = vunpack.c.l.b16 %v833
        %v4040 = vpack.c.b16 %v4009, %v4008
        %v4041 = vpack.c.b16 %v4011, %v4010
        %v4042 = vpack.c.b16 %v4013, %v4012
        %v4043 = vpack.c.b16 %v4015, %v4014
        %v4044 = vpack.c.b16 %v4017, %v4016
        %v4045 = vpack.c.b16 %v4019, %v4018
        %v4046 = vpack.c.b16 %v4021, %v4020
        %v4047 = vpack.c.b16 %v4023, %v4022
        %v4048 = vpack.c.b16 %v4025, %v4024
        %v4049 = vpack.c.b16 %v4027, %v4026
        %v4050 = vpack.c.b16 %v4029, %v4028
        %v4051 = vpack.c.b16 %v4031, %v4030
        %v4052 = vpack.c.b16 %v4033, %v4032
        %v4053 = vpack.c.b16 %v4035, %v4034
        %v4054 = vpack.c.b16 %v4037, %v4036
        %v4055 = vpack.c.b16 %v4039, %v4038
        %4072 = vmatprep.subr.bf16.mxu0 0
        %4073 = vmatpush1.bf16.msra.mxu0 %v4047
        %4074 = vmatprep.subr.bf16.mxu0 0
        %4075 = vmatpush1.bf16.msra.mxu0 %v4046
        %4076 = vmatprep.subr.bf16.mxu0 0
        %4077 = vmatpush1.bf16.msra.mxu0 %v4045
        %4078 = vmatprep.subr.bf16.mxu0 0
        %4079 = vmatpush1.bf16.msra.mxu0 %v4044
        %4080 = vmatprep.subr.bf16.mxu0 0
        %4081 = vmatpush1.bf16.msra.mxu0 %v4043
        %4082 = vmatprep.subr.bf16.mxu0 0
        %4083 = vmatpush1.bf16.msra.mxu0 %v4042
        %4084 = vmatprep.subr.bf16.mxu0 0
        %4085 = vmatpush1.bf16.msra.mxu0 %v4041
        %4086 = vmatprep.subr.bf16.mxu0 0
        %4087 = vmatpush1.bf16.msra.mxu0 %v4040
        %4088 = vmatprep.subr.bf16.mxu0 0
        %4089 = vmatpush2.bf16.msra.mxu0 %v4055
        %4090 = vmatprep.subr.bf16.mxu0 0
        %4091 = vmatpush2.bf16.msra.mxu0 %v4054
        %4092 = vmatprep.subr.bf16.mxu0 0
        %4093 = vmatpush2.bf16.msra.mxu0 %v4053
        %4094 = vmatprep.subr.bf16.mxu0 0
        %4095 = vmatpush2.bf16.msra.mxu0 %v4052
        %4096 = vmatprep.subr.bf16.mxu0 0
        %4097 = vmatpush2.bf16.msra.mxu0 %v4051
        %4098 = vmatprep.subr.bf16.mxu0 0
        %4099 = vmatpush2.bf16.msra.mxu0 %v4050
        %4100 = vmatprep.subr.bf16.mxu0 0
        %4101 = vmatpush2.bf16.msra.mxu0 %v4049
        %4102 = vmatprep.subr.bf16.mxu0 0
        %4103 = vmatpush2.bf16.msra.mxu0 %v4048
        %4104 = vmatprep.mubr.bf16.mxu0 %v3961
        %4105 = vmatmul.mubr.bf16.gmra.mxu0 %v3960
        %v4106 = vpop.f32.mrf.mxu0
        %v4107 = vadd.f32 0.0, %v4106
        %v4108 = vpop.f32.mrf.mxu0
        %v4109 = vpop.f32.mrf.mxu0
        %v4110 = vadd.f32 0.0, %v4109
        %v4111 = vpop.f32.mrf.mxu0
        %4112 = vmatprep.mubr.bf16.mxu0 %v3963
        %4113 = vmatmul.mubr.bf16.gmra.mxu0 %v3962
        %v4114 = vpop.f32.mrf.mxu0
        %v4115 = vadd.f32 0.0, %v4114
        %v4116 = vpop.f32.mrf.mxu0
        %v4117 = vpop.f32.mrf.mxu0
        %v4118 = vadd.f32 0.0, %v4117
        %v4119 = vpop.f32.mrf.mxu0
        %4120 = vmatprep.mubr.bf16.mxu0 %v3965
        %4121 = vmatmul.mubr.bf16.gmra.mxu0 %v3964
        %v4122 = vpop.f32.mrf.mxu0
        %v4123 = vadd.f32 0.0, %v4122
        %v4124 = vpop.f32.mrf.mxu0
        %v4125 = vpop.f32.mrf.mxu0
        %v4126 = vadd.f32 0.0, %v4125
        %v4127 = vpop.f32.mrf.mxu0
        %4128 = vmatprep.mubr.bf16.mxu0 %v3967
        %4129 = vmatmul.mubr.bf16.gmra.mxu0 %v3966
        %v4130 = vpop.f32.mrf.mxu0
        %v4131 = vadd.f32 0.0, %v4130
        %v4132 = vpop.f32.mrf.mxu0
        %v4133 = vpop.f32.mrf.mxu0
        %v4134 = vadd.f32 0.0, %v4133
        %v4135 = vpop.f32.mrf.mxu0
        %4136 = vmatprep.mubr.bf16.mxu0 %v3969
        %4137 = vmatmul.mubr.bf16.gmra.mxu0 %v3968
        %v4138 = vpop.f32.mrf.mxu0
        %v4139 = vadd.f32 0.0, %v4138
        %v4140 = vpop.f32.mrf.mxu0
        %v4141 = vpop.f32.mrf.mxu0
        %v4142 = vadd.f32 0.0, %v4141
        %v4143 = vpop.f32.mrf.mxu0
        %4144 = vmatprep.mubr.bf16.mxu0 %v3971
        %4145 = vmatmul.mubr.bf16.gmra.mxu0 %v3970
        %v4146 = vpop.f32.mrf.mxu0
        %v4147 = vadd.f32 0.0, %v4146
        %v4148 = vpop.f32.mrf.mxu0
        %v4149 = vpop.f32.mrf.mxu0
        %v4150 = vadd.f32 0.0, %v4149
        %v4151 = vpop.f32.mrf.mxu0
        %4152 = vmatprep.mubr.bf16.mxu0 %v3973
        %4153 = vmatmul.mubr.bf16.gmra.mxu0 %v3972
        %v4154 = vpop.f32.mrf.mxu0
        %v4155 = vadd.f32 0.0, %v4154
        %v4156 = vpop.f32.mrf.mxu0
        %v4157 = vpop.f32.mrf.mxu0
        %v4158 = vadd.f32 0.0, %v4157
        %v4159 = vpop.f32.mrf.mxu0
        %4160 = vmatprep.mubr.bf16.mxu0 %v3975
        %4161 = vmatmul.mubr.bf16.gmra.mxu0 %v3974
        %v4162 = vpop.f32.mrf.mxu0
        %v4163 = vadd.f32 0.0, %v4162
        %v4164 = vpop.f32.mrf.mxu0
        %v4165 = vpop.f32.mrf.mxu0
        %v4166 = vadd.f32 0.0, %v4165
        %v4167 = vpop.f32.mrf.mxu0
        %4168 = vdwg.mxu0
        %v4170 = vlaneseq
        %v4171 = vshrl.u32 %v4170, 7
        %v4172 = vsub.s32 0, %v4171
        %v4173 = vrot.slane %v902, %v4172
        %v4174 = vlaneseq
        %v4175 = vshrl.u32 %v4174, 7
        %v4176 = vsub.s32 1, %v4175
        %v4177 = vrot.slane %v902, %v4176
        %v4180 = vmul.f32 %v3564, %v4173
        %v4181 = vmul.f32 %v3565, %v4177
        %v4182 = vmul.f32 %v3566, %v4173
        %v4183 = vmul.f32 %v3567, %v4177
        %v4184 = vmul.f32 %v3568, %v4173
        %v4185 = vmul.f32 %v3569, %v4177
        %v4186 = vmul.f32 %v3570, %v4173
        %v4187 = vmul.f32 %v3571, %v4177
        %v4188 = vmul.f32 %v3572, %v4173
        %v4189 = vmul.f32 %v3573, %v4177
        %v4190 = vmul.f32 %v3574, %v4173
        %v4191 = vmul.f32 %v3575, %v4177
        %v4192 = vmul.f32 %v3576, %v4173
        %v4193 = vmul.f32 %v3577, %v4177
        %v4194 = vmul.f32 %v3578, %v4173
        %v4195 = vmul.f32 %v3579, %v4177
        %v4196 = vmul.f32 %v3580, %v4173
        %v4197 = vmul.f32 %v3581, %v4177
        %v4198 = vmul.f32 %v3582, %v4173
        %v4199 = vmul.f32 %v3583, %v4177
        %v4200 = vmul.f32 %v3584, %v4173
        %v4201 = vmul.f32 %v3585, %v4177
        %v4202 = vmul.f32 %v3586, %v4173
        %v4203 = vmul.f32 %v3587, %v4177
        %v4204 = vmul.f32 %v3588, %v4173
        %v4205 = vmul.f32 %v3589, %v4177
        %v4206 = vmul.f32 %v3590, %v4173
        %v4207 = vmul.f32 %v3591, %v4177
        %v4208 = vmul.f32 %v3592, %v4173
        %v4209 = vmul.f32 %v3593, %v4177
        %v4210 = vmul.f32 %v3594, %v4173
        %v4211 = vmul.f32 %v3595, %v4177
        %v4212 = vpack.c.bf16 %v4182, %v4180
        %v4213 = vpack.c.bf16 %v4183, %v4181
        %v4214 = vpack.c.bf16 %v4186, %v4184
        %v4215 = vpack.c.bf16 %v4187, %v4185
        %v4216 = vpack.c.bf16 %v4190, %v4188
        %v4217 = vpack.c.bf16 %v4191, %v4189
        %v4218 = vpack.c.bf16 %v4194, %v4192
        %v4219 = vpack.c.bf16 %v4195, %v4193
        %v4220 = vpack.c.bf16 %v4198, %v4196
        %v4221 = vpack.c.bf16 %v4199, %v4197
        %v4222 = vpack.c.bf16 %v4202, %v4200
        %v4223 = vpack.c.bf16 %v4203, %v4201
        %v4224 = vpack.c.bf16 %v4206, %v4204
        %v4225 = vpack.c.bf16 %v4207, %v4205
        %v4226 = vpack.c.bf16 %v4210, %v4208
        %v4227 = vpack.c.bf16 %v4211, %v4209
        %4228 = vmatprep.subr.bf16.mxu0 %v3766
        %4229 = vmatpush1.bf16.msra.mxu0 %v3765
        %4230 = vmatprep.subr.bf16.mxu0 %v3764
        %4231 = vmatpush1.bf16.msra.mxu0 %v3763
        %4232 = vmatprep.subr.bf16.mxu0 %v3762
        %4233 = vmatpush1.bf16.msra.mxu0 %v3761
        %4234 = vmatprep.subr.bf16.mxu0 %v3760
        %4235 = vmatpush1.bf16.msra.mxu0 %v3759
        %4236 = vmatprep.subr.bf16.mxu0 %v3758
        %4237 = vmatpush1.bf16.msra.mxu0 %v3757
        %4238 = vmatprep.subr.bf16.mxu0 %v3756
        %4239 = vmatpush1.bf16.msra.mxu0 %v3755
        %4240 = vmatprep.subr.bf16.mxu0 %v3754
        %4241 = vmatpush1.bf16.msra.mxu0 %v3753
        %4242 = vmatprep.subr.bf16.mxu0 %v3752
        %4243 = vmatpush1.bf16.msra.mxu0 %v3751
        %4244 = vmatprep.subr.bf16.mxu0 %v3782
        %4245 = vmatpush2.bf16.msra.mxu0 %v3781
        %4246 = vmatprep.subr.bf16.mxu0 %v3780
        %4247 = vmatpush2.bf16.msra.mxu0 %v3779
        %4248 = vmatprep.subr.bf16.mxu0 %v3778
        %4249 = vmatpush2.bf16.msra.mxu0 %v3777
        %4250 = vmatprep.subr.bf16.mxu0 %v3776
        %4251 = vmatpush2.bf16.msra.mxu0 %v3775
        %4252 = vmatprep.subr.bf16.mxu0 %v3774
        %4253 = vmatpush2.bf16.msra.mxu0 %v3773
        %4254 = vmatprep.subr.bf16.mxu0 %v3772
        %4255 = vmatpush2.bf16.msra.mxu0 %v3771
        %4256 = vmatprep.subr.bf16.mxu0 %v3770
        %4257 = vmatpush2.bf16.msra.mxu0 %v3769
        %4258 = vmatprep.subr.bf16.mxu0 %v3768
        %4259 = vmatpush2.bf16.msra.mxu0 %v3767
        %4260 = vmatprep.mubr.bf16.mxu0 %v4213
        %4261 = vmatmul.mubr.bf16.gmra.mxu0 %v4212
        %v4262 = vpop.f32.mrf.mxu0
        %v4263 = vadd.f32 0.0, %v4262
        %v4264 = vpop.f32.mrf.mxu0
        %v4265 = vadd.f32 0.0, %v4264
        %v4266 = vpop.f32.mrf.mxu0
        %v4267 = vadd.f32 0.0, %v4266
        %v4268 = vpop.f32.mrf.mxu0
        %v4269 = vadd.f32 0.0, %v4268
        %4270 = vmatprep.mubr.bf16.mxu0 %v4215
        %4271 = vmatmul.mubr.bf16.gmra.mxu0 %v4214
        %v4272 = vpop.f32.mrf.mxu0
        %v4273 = vadd.f32 0.0, %v4272
        %v4274 = vpop.f32.mrf.mxu0
        %v4275 = vadd.f32 0.0, %v4274
        %v4276 = vpop.f32.mrf.mxu0
        %v4277 = vadd.f32 0.0, %v4276
        %v4278 = vpop.f32.mrf.mxu0
        %v4279 = vadd.f32 0.0, %v4278
        %4280 = vmatprep.mubr.bf16.mxu0 %v4217
        %4281 = vmatmul.mubr.bf16.gmra.mxu0 %v4216
        %v4282 = vpop.f32.mrf.mxu0
        %v4283 = vadd.f32 0.0, %v4282
        %v4284 = vpop.f32.mrf.mxu0
        %v4285 = vadd.f32 0.0, %v4284
        %v4286 = vpop.f32.mrf.mxu0
        %v4287 = vadd.f32 0.0, %v4286
        %v4288 = vpop.f32.mrf.mxu0
        %v4289 = vadd.f32 0.0, %v4288
        %4290 = vmatprep.mubr.bf16.mxu0 %v4219
        %4291 = vmatmul.mubr.bf16.gmra.mxu0 %v4218
        %v4292 = vpop.f32.mrf.mxu0
        %v4293 = vadd.f32 0.0, %v4292
        %v4294 = vpop.f32.mrf.mxu0
        %v4295 = vadd.f32 0.0, %v4294
        %v4296 = vpop.f32.mrf.mxu0
        %v4297 = vadd.f32 0.0, %v4296
        %v4298 = vpop.f32.mrf.mxu0
        %v4299 = vadd.f32 0.0, %v4298
        %4300 = vmatprep.mubr.bf16.mxu0 %v4221
        %4301 = vmatmul.mubr.bf16.gmra.mxu0 %v4220
        %v4302 = vpop.f32.mrf.mxu0
        %v4303 = vadd.f32 0.0, %v4302
        %v4304 = vpop.f32.mrf.mxu0
        %v4305 = vadd.f32 0.0, %v4304
        %v4306 = vpop.f32.mrf.mxu0
        %v4307 = vadd.f32 0.0, %v4306
        %v4308 = vpop.f32.mrf.mxu0
        %v4309 = vadd.f32 0.0, %v4308
        %4310 = vmatprep.mubr.bf16.mxu0 %v4223
        %4311 = vmatmul.mubr.bf16.gmra.mxu0 %v4222
        %v4312 = vpop.f32.mrf.mxu0
        %v4313 = vadd.f32 0.0, %v4312
        %v4314 = vpop.f32.mrf.mxu0
        %v4315 = vadd.f32 0.0, %v4314
        %v4316 = vpop.f32.mrf.mxu0
        %v4317 = vadd.f32 0.0, %v4316
        %v4318 = vpop.f32.mrf.mxu0
        %v4319 = vadd.f32 0.0, %v4318
        %4320 = vmatprep.mubr.bf16.mxu0 %v4225
        %4321 = vmatmul.mubr.bf16.gmra.mxu0 %v4224
        %v4322 = vpop.f32.mrf.mxu0
        %v4323 = vadd.f32 0.0, %v4322
        %v4324 = vpop.f32.mrf.mxu0
        %v4325 = vadd.f32 0.0, %v4324
        %v4326 = vpop.f32.mrf.mxu0
        %v4327 = vadd.f32 0.0, %v4326
        %v4328 = vpop.f32.mrf.mxu0
        %v4329 = vadd.f32 0.0, %v4328
        %4330 = vmatprep.mubr.bf16.mxu0 %v4227
        %4331 = vmatmul.mubr.bf16.gmra.mxu0 %v4226
        %v4332 = vpop.f32.mrf.mxu0
        %v4333 = vadd.f32 0.0, %v4332
        %v4334 = vpop.f32.mrf.mxu0
        %v4335 = vadd.f32 0.0, %v4334
        %v4336 = vpop.f32.mrf.mxu0
        %v4337 = vadd.f32 0.0, %v4336
        %v4338 = vpop.f32.mrf.mxu0
        %v4339 = vadd.f32 0.0, %v4338
        %4340 = vdwg.mxu0
        %v4341 = vmul.f32 %v4263, %v2848
        %v4342 = vmul.f32 %v4265, %v2849
        %v4343 = vmul.f32 %v4267, %v2850
        %v4344 = vmul.f32 %v4269, %v2851
        %v4345 = vmul.f32 %v4273, %v2852
        %v4346 = vmul.f32 %v4275, %v2853
        %v4347 = vmul.f32 %v4277, %v2854
        %v4348 = vmul.f32 %v4279, %v2855
        %v4349 = vmul.f32 %v4283, %v2856
        %v4350 = vmul.f32 %v4285, %v2857
        %v4351 = vmul.f32 %v4287, %v2858
        %v4352 = vmul.f32 %v4289, %v2859
        %v4353 = vmul.f32 %v4293, %v2860
        %v4354 = vmul.f32 %v4295, %v2861
        %v4355 = vmul.f32 %v4297, %v2862
        %v4356 = vmul.f32 %v4299, %v2863
        %v4357 = vmul.f32 %v4303, %v2864
        %v4358 = vmul.f32 %v4305, %v2865
        %v4359 = vmul.f32 %v4307, %v2866
        %v4360 = vmul.f32 %v4309, %v2867
        %v4361 = vmul.f32 %v4313, %v2868
        %v4362 = vmul.f32 %v4315, %v2869
        %v4363 = vmul.f32 %v4317, %v2870
        %v4364 = vmul.f32 %v4319, %v2871
        %v4365 = vmul.f32 %v4323, %v2872
        %v4366 = vmul.f32 %v4325, %v2873
        %v4367 = vmul.f32 %v4327, %v2874
        %v4368 = vmul.f32 %v4329, %v2875
        %v4369 = vmul.f32 %v4333, %v2876
        %v4370 = vmul.f32 %v4335, %v2877
        %v4371 = vmul.f32 %v4337, %v2878
        %v4372 = vmul.f32 %v4339, %v2879
        %v4373 = vpack.c.bf16 %v4343, %v4341
        %v4374 = vpack.c.bf16 %v4344, %v4342
        %v4375 = vpack.c.bf16 %v4347, %v4345
        %v4376 = vpack.c.bf16 %v4348, %v4346
        %v4377 = vpack.c.bf16 %v4351, %v4349
        %v4378 = vpack.c.bf16 %v4352, %v4350
        %v4379 = vpack.c.bf16 %v4355, %v4353
        %v4380 = vpack.c.bf16 %v4356, %v4354
        %v4381 = vpack.c.bf16 %v4359, %v4357
        %v4382 = vpack.c.bf16 %v4360, %v4358
        %v4383 = vpack.c.bf16 %v4363, %v4361
        %v4384 = vpack.c.bf16 %v4364, %v4362
        %v4385 = vpack.c.bf16 %v4367, %v4365
        %v4386 = vpack.c.bf16 %v4368, %v4366
        %v4387 = vpack.c.bf16 %v4371, %v4369
        %v4388 = vpack.c.bf16 %v4372, %v4370
        %4389 = vmatprep.subr.bf16.mxu0 0
        %4390 = vmatpush1.bf16.msra.mxu0 %v4047
        %4391 = vmatprep.subr.bf16.mxu0 0
        %4392 = vmatpush1.bf16.msra.mxu0 %v4046
        %4393 = vmatprep.subr.bf16.mxu0 0
        %4394 = vmatpush1.bf16.msra.mxu0 %v4045
        %4395 = vmatprep.subr.bf16.mxu0 0
        %4396 = vmatpush1.bf16.msra.mxu0 %v4044
        %4397 = vmatprep.subr.bf16.mxu0 0
        %4398 = vmatpush1.bf16.msra.mxu0 %v4043
        %4399 = vmatprep.subr.bf16.mxu0 0
        %4400 = vmatpush1.bf16.msra.mxu0 %v4042
        %4401 = vmatprep.subr.bf16.mxu0 0
        %4402 = vmatpush1.bf16.msra.mxu0 %v4041
        %4403 = vmatprep.subr.bf16.mxu0 0
        %4404 = vmatpush1.bf16.msra.mxu0 %v4040
        %4405 = vmatprep.subr.bf16.mxu0 0
        %4406 = vmatpush2.bf16.msra.mxu0 %v4055
        %4407 = vmatprep.subr.bf16.mxu0 0
        %4408 = vmatpush2.bf16.msra.mxu0 %v4054
        %4409 = vmatprep.subr.bf16.mxu0 0
        %4410 = vmatpush2.bf16.msra.mxu0 %v4053
        %4411 = vmatprep.subr.bf16.mxu0 0
        %4412 = vmatpush2.bf16.msra.mxu0 %v4052
        %4413 = vmatprep.subr.bf16.mxu0 0
        %4414 = vmatpush2.bf16.msra.mxu0 %v4051
        %4415 = vmatprep.subr.bf16.mxu0 0
        %4416 = vmatpush2.bf16.msra.mxu0 %v4050
        %4417 = vmatprep.subr.bf16.mxu0 0
        %4418 = vmatpush2.bf16.msra.mxu0 %v4049
        %4419 = vmatprep.subr.bf16.mxu0 0
        %4420 = vmatpush2.bf16.msra.mxu0 %v4048
        %4421 = vmatprep.mubr.bf16.mxu0 %v4374
        %4422 = vmatmul.mubr.bf16.gmra.mxu0 %v4373
        %v4423 = vpop.f32.mrf.mxu0
        %v4424 = vadd.f32 0.0, %v4423
        %v4425 = vpop.f32.mrf.mxu0
        %v4426 = vpop.f32.mrf.mxu0
        %v4427 = vadd.f32 0.0, %v4426
        %v4428 = vpop.f32.mrf.mxu0
        %4429 = vmatprep.mubr.bf16.mxu0 %v4376
        %4430 = vmatmul.mubr.bf16.gmra.mxu0 %v4375
        %v4431 = vpop.f32.mrf.mxu0
        %v4432 = vadd.f32 0.0, %v4431
        %v4433 = vpop.f32.mrf.mxu0
        %v4434 = vpop.f32.mrf.mxu0
        %v4435 = vadd.f32 0.0, %v4434
        %v4436 = vpop.f32.mrf.mxu0
        %4437 = vmatprep.mubr.bf16.mxu0 %v4378
        %4438 = vmatmul.mubr.bf16.gmra.mxu0 %v4377
        %v4439 = vpop.f32.mrf.mxu0
        %v4440 = vadd.f32 0.0, %v4439
        %v4441 = vpop.f32.mrf.mxu0
        %v4442 = vpop.f32.mrf.mxu0
        %v4443 = vadd.f32 0.0, %v4442
        %v4444 = vpop.f32.mrf.mxu0
        %4445 = vmatprep.mubr.bf16.mxu0 %v4380
        %4446 = vmatmul.mubr.bf16.gmra.mxu0 %v4379
        %v4447 = vpop.f32.mrf.mxu0
        %v4448 = vadd.f32 0.0, %v4447
        %v4449 = vpop.f32.mrf.mxu0
        %v4450 = vpop.f32.mrf.mxu0
        %v4451 = vadd.f32 0.0, %v4450
        %v4452 = vpop.f32.mrf.mxu0
        %4453 = vmatprep.mubr.bf16.mxu0 %v4382
        %4454 = vmatmul.mubr.bf16.gmra.mxu0 %v4381
        %v4455 = vpop.f32.mrf.mxu0
        %v4456 = vadd.f32 0.0, %v4455
        %v4457 = vpop.f32.mrf.mxu0
        %v4458 = vpop.f32.mrf.mxu0
        %v4459 = vadd.f32 0.0, %v4458
        %v4460 = vpop.f32.mrf.mxu0
        %4461 = vmatprep.mubr.bf16.mxu0 %v4384
        %4462 = vmatmul.mubr.bf16.gmra.mxu0 %v4383
        %v4463 = vpop.f32.mrf.mxu0
        %v4464 = vadd.f32 0.0, %v4463
        %v4465 = vpop.f32.mrf.mxu0
        %v4466 = vpop.f32.mrf.mxu0
        %v4467 = vadd.f32 0.0, %v4466
        %v4468 = vpop.f32.mrf.mxu0
        %4469 = vmatprep.mubr.bf16.mxu0 %v4386
        %4470 = vmatmul.mubr.bf16.gmra.mxu0 %v4385
        %v4471 = vpop.f32.mrf.mxu0
        %v4472 = vadd.f32 0.0, %v4471
        %v4473 = vpop.f32.mrf.mxu0
        %v4474 = vpop.f32.mrf.mxu0
        %v4475 = vadd.f32 0.0, %v4474
        %v4476 = vpop.f32.mrf.mxu0
        %4477 = vmatprep.mubr.bf16.mxu0 %v4388
        %4478 = vmatmul.mubr.bf16.gmra.mxu0 %v4387
        %v4479 = vpop.f32.mrf.mxu0
        %v4480 = vadd.f32 0.0, %v4479
        %v4481 = vpop.f32.mrf.mxu0
        %v4482 = vpop.f32.mrf.mxu0
        %v4483 = vadd.f32 0.0, %v4482
        %v4484 = vpop.f32.mrf.mxu0
        %4485 = vdwg.mxu0
        %4486 = vst [vmem:[%s659] sm:$0xff] %v2486
        %4487 = vst [vmem:[%s659 + $0x8] sm:$0xff] %v2489
        %4488 = vst [vmem:[%s659 + $0x10] sm:$0xff] %v2494
        %4489 = vst [vmem:[%s659 + $0x18] sm:$0xff] %v2497
        %4490 = vst [vmem:[%s659 + $0x20] sm:$0xff] %v2502
        %4491 = vst [vmem:[%s659 + $0x28] sm:$0xff] %v2505
        %4492 = vst [vmem:[%s659 + $0x30] sm:$0xff] %v2510
        %4493 = vst [vmem:[%s659 + $0x38] sm:$0xff] %v2513
        %4494 = vst [vmem:[%s659 + $0x40] sm:$0xff] %v2518
        %4495 = vst [vmem:[%s659 + $0x48] sm:$0xff] %v2521
        %4496 = vst [vmem:[%s659 + $0x50] sm:$0xff] %v2526
        %4497 = vst [vmem:[%s659 + $0x58] sm:$0xff] %v2529
        %4498 = vst [vmem:[%s659 + $0x60] sm:$0xff] %v2534
        %4499 = vst [vmem:[%s659 + $0x68] sm:$0xff] %v2537
        %4500 = vst [vmem:[%s659 + $0x70] sm:$0xff] %v2542
        %4501 = vst [vmem:[%s659 + $0x78] sm:$0xff] %v2545
        %4502 = vst [vmem:[%s666] sm:$0xff] %v4107
        %4503 = vst [vmem:[%s666 + $0x10] sm:$0xff] %v4110
        %4504 = vst [vmem:[%s666 + $0x20] sm:$0xff] %v4115
        %4505 = vst [vmem:[%s666 + $0x30] sm:$0xff] %v4118
        %4506 = vst [vmem:[%s666 + $0x40] sm:$0xff] %v4123
        %4507 = vst [vmem:[%s666 + $0x50] sm:$0xff] %v4126
        %4508 = vst [vmem:[%s666 + $0x60] sm:$0xff] %v4131
        %4509 = vst [vmem:[%s666 + $0x70] sm:$0xff] %v4134
        %4510 = vst [vmem:[%s666 + $0x80] sm:$0xff] %v4139
        %4511 = vst [vmem:[%s666 + $0x90] sm:$0xff] %v4142
        %4512 = vst [vmem:[%s666 + $0xa0] sm:$0xff] %v4147
        %4513 = vst [vmem:[%s666 + $0xb0] sm:$0xff] %v4150
        %4514 = vst [vmem:[%s666 + $0xc0] sm:$0xff] %v4155
        %4515 = vst [vmem:[%s666 + $0xd0] sm:$0xff] %v4158
        %4516 = vst [vmem:[%s666 + $0xe0] sm:$0xff] %v4163
        %4517 = vst [vmem:[%s666 + $0xf0] sm:$0xff] %v4166
        %4518 = vst [vmem:[%s666 + $0x8] sm:$0xff] %v4424
        %4519 = vst [vmem:[%s666 + $0x18] sm:$0xff] %v4427
        %4520 = vst [vmem:[%s666 + $0x28] sm:$0xff] %v4432
        %4521 = vst [vmem:[%s666 + $0x38] sm:$0xff] %v4435
        %4522 = vst [vmem:[%s666 + $0x48] sm:$0xff] %v4440
        %4523 = vst [vmem:[%s666 + $0x58] sm:$0xff] %v4443
        %4524 = vst [vmem:[%s666 + $0x68] sm:$0xff] %v4448
        %4525 = vst [vmem:[%s666 + $0x78] sm:$0xff] %v4451
        %4526 = vst [vmem:[%s666 + $0x88] sm:$0xff] %v4456
        %4527 = vst [vmem:[%s666 + $0x98] sm:$0xff] %v4459
        %4528 = vst [vmem:[%s666 + $0xa8] sm:$0xff] %v4464
        %4529 = vst [vmem:[%s666 + $0xb8] sm:$0xff] %v4467
        %4530 = vst [vmem:[%s666 + $0xc8] sm:$0xff] %v4472
        %4531 = vst [vmem:[%s666 + $0xd8] sm:$0xff] %v4475
        %4532 = vst [vmem:[%s666 + $0xe8] sm:$0xff] %v4480
        %4533 = vst [vmem:[%s666 + $0xf8] sm:$0xff] %v4483
        %s4534 = sand.u32 %s369, 1
        %s4535 = scalar_lea.sflag [#allocation4], %s4534
        %s4536 = sand.u32 %s369, 1
        %s4537 = smul.addr %s4536, 128
        %s4538 = scalar_lea.vmem [#allocation17], %s4537
        %s4539 = sand.u32 %s395, 1
        %s4540 = scalar_lea.sflag [#allocation19], %s4539
        %s4541 = sand.u32 %s395, 1
        %s4542 = smul.addr %s4541, 256
        %s4543 = scalar_lea.vmem [#allocation18], %s4542
        // Predicated region
        $region117: #{tpu_custom_call.1} parent=79 // pred_check
          %p4544 = pneg %p379
        $region118: #{tpu_custom_call.1} parent=79 // pred_check_branch
          %4546 = sbr.rel (%p4544) target = $region120
        $region119: #{tpu_custom_call.1} parent=79 // pred_region
          %s4547 = smul.u32 16, %s41
          %s4549 = ssub.s32 2048, 2048
          %4550 = vsyncadd %s4535, %s4549
          %s4551 = smul.addr %s4547, 128
          %s4552 = scalar_lea.hbm %s15, %s4551
          %s4553 = sshll.u32 %s4538, 4
          %s4554 = int_to_ptr.vmem [resolvable:$true] %s4553
          %4559 = dma.vmem_to_hbm [thread:$0]  %s4554, 2048, %s4552, %s4535, 128, 128, 8
        $region120: #{tpu_custom_call.1} parent=79 // pred_fallthru
          _
        // Predicated region
        $region121: #{tpu_custom_call.1} parent=79 // pred_check
          %p4560 = pneg %p405
        $region122: #{tpu_custom_call.1} parent=79 // pred_check_branch
          %4562 = sbr.rel (%p4560) target = $region124
        $region123: #{tpu_custom_call.1} parent=79 // pred_region
          %s4563 = smul.u32 16, %s41
          %s4565 = ssub.s32 4096, 4096
          %4566 = vsyncadd %s4540, %s4565
          %s4567 = smul.addr %s4563, 2
          %s4568 = smul.addr %s4567, 128
          %s4569 = scalar_lea.hbm %s16, %s4568
          %s4570 = sshll.u32 %s4543, 4
          %s4571 = int_to_ptr.vmem [resolvable:$true] %s4570
          %4576 = dma.vmem_to_hbm [thread:$0]  %s4571, 4096, %s4569, %s4540, 256, 256, 16
        $region124: #{tpu_custom_call.1} parent=79 // pred_fallthru
          _
      $region80: #{tpu_custom_call.1} parent=5 // pred_fallthru
        _
      %p4577 = scmp.le.s32.totalorder 2, %s36
      // Predicated region
      $region125: #{tpu_custom_call.1} parent=5 // pred_check
        %p4578 = pneg %p4577
      $region126: #{tpu_custom_call.1} parent=5 // pred_check_branch
        %4580 = sbr.rel (%p4578) target = $region128
      $region127: #{tpu_custom_call.1} parent=5 // pred_region
        %s4581 = ssub.s32 %s36, 2
        // Predicated region
        $region129: #{tpu_custom_call.1} parent=127 // pred_check
          %p4582 = pneg %p385
        $region130: #{tpu_custom_call.1} parent=127 // pred_check_branch
          %4584 = sbr.rel (%p4582) target = $region132
        $region131: #{tpu_custom_call.1} parent=127 // pred_region
          %s4585 = sand.u32 %s370, 1
          %s4586 = scalar_lea.sflag [#allocation4], %s4585
          %s4587 = sand.u32 %s370, 1
          %s4588 = smul.addr %s4587, 128
          %s4589 = scalar_lea.vmem [#allocation17], %s4588
          %4590 = dma.done %s4586, 2048
        $region132: #{tpu_custom_call.1} parent=127 // pred_fallthru
          _
        // Predicated region
        $region133: #{tpu_custom_call.1} parent=127 // pred_check
          %p4591 = pneg %p411
        $region134: #{tpu_custom_call.1} parent=127 // pred_check_branch
          %4593 = sbr.rel (%p4591) target = $region136
        $region135: #{tpu_custom_call.1} parent=127 // pred_region
          %s4594 = sand.u32 %s396, 1
          %s4595 = scalar_lea.sflag [#allocation19], %s4594
          %s4596 = sand.u32 %s396, 1
          %s4597 = smul.addr %s4596, 256
          %s4598 = scalar_lea.vmem [#allocation18], %s4597
          %4599 = dma.done %s4595, 4096
        $region136: #{tpu_custom_call.1} parent=127 // pred_fallthru
          _
      $region128: #{tpu_custom_call.1} parent=5 // pred_fallthru
        _
    $region6: #{tpu_custom_call.1} parent=1 // loop_footer
      %s40 = sadd.s32 1, %s36
    $region7: #{tpu_custom_call.1} parent=1 // loop_footer_branch
      %35 = sbr.rel target = $region3
    $region8: #{tpu_custom_call.1} parent=1 // loop_exit
      _
    %4600 = vsyncpa [#allocation3], 1
    %s4601 = scalar_lea.sflag [#allocation3], 1
    %4602 = vsyncpa %s4601, 1
    %4603 = vsyncpa [#allocation6], 1
    %4604 = vsyncpa [#allocation9], 1
    %4605 = vsyncpa [#allocation12], 1
    %4606 = vsyncpa [#allocation15], 1
    %4607 = vsyncpa [#allocation4], 1
    %s4608 = scalar_lea.sflag [#allocation4], 1
    %4609 = vsyncpa %s4608, 1
    %4610 = vsyncpa [#allocation19], 1
    %s4611 = scalar_lea.sflag [#allocation19], 1
    %4612 = vsyncpa %s4611, 1

</llo_original>
